<compile_context>
chip_gen: v7x
topology: tpu7x:2x2x1
jax: 0.10.0
libtpu: 0.0.40
codegen_flags: <defaults>
</compile_context>

<pallas_src>
import functools

import numpy as np
import jax
import jax.numpy as jnp
from jax.experimental import pallas as pl
from jax.experimental.pallas import tpu as pltpu


# ---------------------------------------------------------------------------
# Canonical (PyTorch-shaped) parameters
# ---------------------------------------------------------------------------
def init_params(key):
    ks = jax.random.split(key, 10)

    def w(k, shape, scale):
        return scale * jax.random.normal(k, shape, dtype=jnp.float32)

    return {
        "conv1_w": w(ks[0], (6, 3, 5, 5), 0.1),    # Conv2d(3, 6, 5)   (O,I,KH,KW)
        "conv1_b": w(ks[1], (6,), 0.1),
        "conv2_w": w(ks[2], (16, 6, 5, 5), 0.1),   # Conv2d(6, 16, 5)
        "conv2_b": w(ks[3], (16,), 0.1),
        "fc1_w": w(ks[4], (120, 400), 0.05),       # Linear(16*5*5, 120) (out, in)
        "fc1_b": w(ks[5], (120,), 0.05),
        "fc2_w": w(ks[6], (84, 120), 0.05),        # Linear(120, 84)
        "fc2_b": w(ks[7], (84,), 0.05),
        "fc3_w": w(ks[8], (10, 84), 0.05),         # Linear(84, 10)
        "fc3_b": w(ks[9], (10,), 0.05),
    }


# ---------------------------------------------------------------------------
# Init-time layout prep (numpy, runs once; no per-forward cost)
# ---------------------------------------------------------------------------
def _toeplitz(w_oikk, w_in):
    """Banded conv weight: T[kh, w*Cin + c, wo*Cout + o] = w[o, c, kh, w - wo]."""
    w = np.asarray(w_oikk, np.float32)
    cout, cin, khs, kws = w.shape
    wo_n = w_in - kws + 1
    t = np.zeros((khs, w_in * cin, wo_n * cout), np.float32)
    for kh in range(khs):
        for wo in range(wo_n):
            for kw in range(kws):
                col = wo + kw
                t[kh, col * cin:(col + 1) * cin, wo * cout:(wo + 1) * cout] = \
                    w[:, :, kh, kw].T
    return t


def _col_pool_select(w_out, c):
    """(Y @ Ge, Y @ Go) pick even/odd w-blocks of the [.., w*C + c] layout."""
    wp = w_out // 2
    ge = np.zeros((w_out * c, wp * c), np.float32)
    go = np.zeros((w_out * c, wp * c), np.float32)
    for i in range(wp):
        for ch in range(c):
            ge[(2 * i) * c + ch, i * c + ch] = 1.0
            go[(2 * i + 1) * c + ch, i * c + ch] = 1.0
    return np.stack([ge, go])


def _pad2(a, rows, cols):
    out = np.zeros((rows, cols), np.float32)
    out[:a.shape[0], :a.shape[1]] = a
    return out


def prep_kernel_params(params):
    c1w = np.asarray(params["conv1_w"]); c1b = np.asarray(params["conv1_b"])
    c2w = np.asarray(params["conv2_w"]); c2b = np.asarray(params["conv2_b"])
    f1w = np.asarray(params["fc1_w"]);   f1b = np.asarray(params["fc1_b"])
    f2w = np.asarray(params["fc2_w"]);   f2b = np.asarray(params["fc2_b"])
    f3w = np.asarray(params["fc3_w"]);   f3b = np.asarray(params["fc3_b"])

    kp = {}
    # conv1: input lanes = w*3 + c (96 real, padded to 128 per kh band).
    t1 = _toeplitz(c1w, 32)                                   # (5, 96, 168)
    kp["t1"] = np.concatenate([_pad2(t1[k], 128, 168) for k in range(5)], 0)
    kp["b1"] = np.tile(c1b, 28)[None, :]                      # (1, 168)
    pc1 = _col_pool_select(28, 6)                             # (2, 168, 84)
    kp["g1e"] = _pad2(pc1[0], 168, 128)                       # pooled lanes 0..83
    kp["g1o"] = _pad2(pc1[1], 168, 128)
    # conv2: input lanes = w*6 + c (84 real, padded to 128 per kh band).
    t2 = _toeplitz(c2w, 14)                                   # (5, 84, 160)
    kp["t2"] = np.concatenate([_pad2(t2[k], 128, 160) for k in range(5)], 0)
    kp["b2"] = np.tile(c2b, 10)[None, :]                      # (1, 160)
    pc2 = _col_pool_select(10, 16)                            # (2, 160, 80)
    kp["g2e"] = _pad2(pc2[0], 160, 128)                       # pooled lanes 0..79
    kp["g2o"] = _pad2(pc2[1], 160, 128)
    # fc1 consumes per-image rows h=0..4 with lanes w*16+c; torch flatten order
    # c*25 + h*5 + w is baked into the weight; each h-band padded to 128 lanes.
    w1 = f1w.reshape(120, 16, 5, 5).transpose(2, 3, 1, 0).reshape(5, 80, 120)
    kp["w1"] = np.concatenate([_pad2(w1[h], 128, 128) for h in range(5)], 0)
    kp["bf1"] = _pad2(f1b[None, :], 1, 128)
    kp["w2"] = _pad2(f2w.T, 128, 128)
    kp["bf2"] = _pad2(f2b[None, :], 1, 128)
    kp["w3"] = _pad2(f3w.T, 128, 128)
    kp["bf3"] = _pad2(f3b[None, :], 1, 128)

    mat = {"t1", "g1e", "g1o", "t2", "g2e", "g2o", "w1", "w2", "w3"}
    return {k: jnp.asarray(v, jnp.bfloat16 if k in mat else jnp.float32)
            for k, v in kp.items()}


_KP_ORDER = ("t1", "b1", "g1e", "g1o", "t2", "b2", "g2e", "g2o",
             "w1", "bf1", "w2", "bf2", "w3", "bf3")


# ---------------------------------------------------------------------------
# The fused kernel: one grid step processes TB row-stacked images
# ---------------------------------------------------------------------------
def _net_kernel(x_ref, t1_ref, b1_ref, g1e_ref, g1o_ref,
                t2_ref, b2_ref, g2e_ref, g2o_ref,
                w1_ref, bf1_ref, w2_ref, bf2_ref, w3_ref, bf3_ref,
                o_ref, s0, s1, s2, s3, s4):
    n1 = x_ref.shape[0]          # TB*32 rows (32 per image, stride 32)
    n2 = n1 // 2                 # TB*16
    n3 = n2 // 2                 # TB*8
    tb = n1 // 32

    def mm(a, w_ref):            # bf16 MXU matmul, f32 accumulation
        return jnp.dot(a.astype(jnp.bfloat16), w_ref[...],
                       preferred_element_type=jnp.float32)

    zeros8 = jnp.zeros((8, 128), jnp.float32)

    # ---- conv1: one K=640 band-fused matmul, bias, ReLU --------------------
    s0[pl.ds(0, n1), :] = x_ref[...]        # image rows, lanes = w*3+c (96)+pad
    s0[pl.ds(n1, 8), :] = zeros8            # pad rows so +kh slices stay in bounds
    xc1 = jnp.concatenate([s0[pl.ds(kh, n1), :] for kh in range(5)], axis=1)
    y1 = jnp.maximum(mm(xc1, t1_ref) + b1_ref[...], 0.0)        # (n1, 168)
    # 2x2 max pool: columns via 0/1 selection dots, rows via stride-2 loads.
    s1[...] = jnp.maximum(mm(y1, g1e_ref), mm(y1, g1o_ref))     # (n1, 128)
    p1 = jnp.maximum(s1[pl.ds(0, n2, stride=2), :],
                     s1[pl.ds(1, n2, stride=2), :])             # (n2, 128)

    # ---- conv2 --------------------------------------------------------------
    s2[pl.ds(0, n2), :] = p1                # rows b*16+i, i<14 valid
    s2[pl.ds(n2, 8), :] = zeros8
    xc2 = jnp.concatenate([s2[pl.ds(kh, n2), :] for kh in range(5)], axis=1)
    y2 = jnp.maximum(mm(xc2, t2_ref) + b2_ref[...], 0.0)        # (n2, 160)
    s3[...] = jnp.maximum(mm(y2, g2e_ref), mm(y2, g2o_ref))     # (n2, 128)
    p2 = jnp.maximum(s3[pl.ds(0, n3, stride=2), :],
                     s3[pl.ds(1, n3, stride=2), :])             # (n3, 128)

    # ---- fc1/fc2/fc3 (flatten permutation + lane padding baked into weights)
    s4[...] = p2                             # rows b*8+h, h<5 valid
    xf = jnp.concatenate([s4[pl.ds(h, tb, stride=8), :] for h in range(5)],
                         axis=1)                                 # (tb, 640)
    h1 = jnp.maximum(mm(xf, w1_ref) + bf1_ref[...], 0.0)         # (tb, 128)
    h2 = jnp.maximum(mm(h1, w2_ref) + bf2_ref[...], 0.0)
    o_ref[...] = mm(h2, w3_ref) + bf3_ref[...]                   # lane-dense store


@functools.partial(jax.jit, static_argnames=("tb",))
def net_forward(kernel_params, x_nchw, tb=8):
    B = x_nchw.shape[0]
    group = 2 * tb                       # even grid -> both v7x TCs get work
    bp = ((B + group - 1) // group) * group

    # Stage input as row-stacked images: row = b*32 + h, lane = w*3 + c (pad 128).
    x = jnp.transpose(x_nchw, (0, 2, 3, 1)).reshape(B, 32, 96)
    x = jnp.pad(x, ((0, bp - B), (0, 0), (0, 32)))
    xf = x.reshape(bp * 32, 128)

    weights = [kernel_params[k] for k in _KP_ORDER]
    w_specs = [pl.BlockSpec(w.shape, lambda i: (0, 0)) for w in weights]

    out = pl.pallas_call(
        _net_kernel,
        out_shape=jax.ShapeDtypeStruct((bp, 128), jnp.float32),
        grid=(bp // tb,),
        in_specs=[pl.BlockSpec((tb * 32, 128), lambda i: (i, 0))] + w_specs,
        out_specs=pl.BlockSpec((tb, 128), lambda i: (i, 0)),
        scratch_shapes=[
            pltpu.VMEM((tb * 32 + 8, 128), jnp.float32),   # s0: input + pad rows
            pltpu.VMEM((tb * 32, 128), jnp.float32),       # s1: conv1 col-pooled
            pltpu.VMEM((tb * 16 + 8, 128), jnp.float32),   # s2: pool1 + pad rows
            pltpu.VMEM((tb * 16, 128), jnp.float32),       # s3: conv2 col-pooled
            pltpu.VMEM((tb * 8, 128), jnp.float32),        # s4: pool2
        ],
        compiler_params=pltpu.CompilerParams(
            dimension_semantics=("parallel",),
            vmem_limit_bytes=32 * 1024 * 1024),
    )(xf, *weights)
    return out[:B, :10]


# ---------------------------------------------------------------------------
# Pure-JAX reference (mirrors the PyTorch forward) for a self-check
# ---------------------------------------------------------------------------
@jax.jit
def _reference_forward(params, x):
    hp = jax.lax.Precision.HIGHEST
    y = jax.lax.conv_general_dilated(
        x, params["conv1_w"], (1, 1), "VALID",
        dimension_numbers=("NCHW", "OIHW", "NCHW"), precision=hp)
    y = jax.nn.relu(y + params["conv1_b"][None, :, None, None])
    y = jax.lax.reduce_window(y, -jnp.inf, jax.lax.max, (1, 1, 2, 2),
                              (1, 1, 2, 2), "VALID")
    y = jax.lax.conv_general_dilated(
        y, params["conv2_w"], (1, 1), "VALID",
        dimension_numbers=("NCHW", "OIHW", "NCHW"), precision=hp)
    y = jax.nn.relu(y + params["conv2_b"][None, :, None, None])
    y = jax.lax.reduce_window(y, -jnp.inf, jax.lax.max, (1, 1, 2, 2),
                              (1, 1, 2, 2), "VALID")
    y = y.reshape(y.shape[0], -1)                              # torch.flatten(x, 1)
    y = jax.nn.relu(jnp.dot(y, params["fc1_w"].T, precision=hp) + params["fc1_b"])
    y = jax.nn.relu(jnp.dot(y, params["fc2_w"].T, precision=hp) + params["fc2_b"])
    return jnp.dot(y, params["fc3_w"].T, precision=hp) + params["fc3_b"]


if __name__ == "__main__":
    key = jax.random.PRNGKey(0)
    pkey, xkey = jax.random.split(key)
    params = init_params(pkey)
    kparams = prep_kernel_params(params)

    # 32x32x3 input is required so the flatten matches Linear(16*5*5, 120).
    x = jax.random.normal(xkey, (2, 3, 32, 32), dtype=jnp.float32)

    out = jax.block_until_ready(net_forward(kparams, x))
    assert out.shape == (2, 10) and out.dtype == jnp.float32

    ref = jax.block_until_ready(_reference_forward(params, x))
    # bf16 MXU operands (f32 accumulate) -> slightly looser tolerance than f32.
    np.testing.assert_allclose(np.asarray(out), np.asarray(ref),
                               rtol=3e-2, atol=3e-2)
    print("KERNEL_OK")
</pallas_src>

<mosaic_0001>
module attributes {stable_mosaic.version = 11 : i64} {
  func.func @_net_kernel(%arg0: i32, %arg1: memref<256x128xf32, #tpu.memory_space<vmem>>, %arg2: memref<640x168xbf16, #tpu.memory_space<vmem>>, %arg3: memref<1x168xf32, #tpu.memory_space<vmem>>, %arg4: memref<168x128xbf16, #tpu.memory_space<vmem>>, %arg5: memref<168x128xbf16, #tpu.memory_space<vmem>>, %arg6: memref<640x160xbf16, #tpu.memory_space<vmem>>, %arg7: memref<1x160xf32, #tpu.memory_space<vmem>>, %arg8: memref<160x128xbf16, #tpu.memory_space<vmem>>, %arg9: memref<160x128xbf16, #tpu.memory_space<vmem>>, %arg10: memref<640x128xbf16, #tpu.memory_space<vmem>>, %arg11: memref<1x128xf32, #tpu.memory_space<vmem>>, %arg12: memref<128x128xbf16, #tpu.memory_space<vmem>>, %arg13: memref<1x128xf32, #tpu.memory_space<vmem>>, %arg14: memref<128x128xbf16, #tpu.memory_space<vmem>>, %arg15: memref<1x128xf32, #tpu.memory_space<vmem>>, %arg16: memref<8x128xf32, #tpu.memory_space<vmem>>, %arg17: memref<264x128xf32, #tpu.memory_space<vmem>>, %arg18: memref<256x128xf32, #tpu.memory_space<vmem>>, %arg19: memref<136x128xf32, #tpu.memory_space<vmem>>, %arg20: memref<128x128xf32, #tpu.memory_space<vmem>>, %arg21: memref<64x128xf32, #tpu.memory_space<vmem>>) attributes {dimension_semantics = [#tpu.dimension_semantics<parallel>], iteration_bounds = array<i64: 2>, scalar_prefetch = 0 : i64, scratch_operands = 5 : i64, tpu.core_type = #tpu.core_type<tc>, window_params = [{transform_indices = @transform_0, window_bounds = array<i64: 256, 128>}, {pipeline_mode = #tpu.pipeline_mode<synchronous>, transform_indices = @transform_1, window_bounds = array<i64: 640, 168>}, {pipeline_mode = #tpu.pipeline_mode<synchronous>, transform_indices = @transform_2, window_bounds = array<i64: 1, 168>}, {pipeline_mode = #tpu.pipeline_mode<synchronous>, transform_indices = @transform_3, window_bounds = array<i64: 168, 128>}, {pipeline_mode = #tpu.pipeline_mode<synchronous>, transform_indices = @transform_4, window_bounds = array<i64: 168, 128>}, {pipeline_mode = #tpu.pipeline_mode<synchronous>, transform_indices = @transform_5, window_bounds = array<i64: 640, 160>}, {pipeline_mode = #tpu.pipeline_mode<synchronous>, transform_indices = @transform_6, window_bounds = array<i64: 1, 160>}, {pipeline_mode = #tpu.pipeline_mode<synchronous>, transform_indices = @transform_7, window_bounds = array<i64: 160, 128>}, {pipeline_mode = #tpu.pipeline_mode<synchronous>, transform_indices = @transform_8, window_bounds = array<i64: 160, 128>}, {pipeline_mode = #tpu.pipeline_mode<synchronous>, transform_indices = @transform_9, window_bounds = array<i64: 640, 128>}, {pipeline_mode = #tpu.pipeline_mode<synchronous>, transform_indices = @transform_10, window_bounds = array<i64: 1, 128>}, {pipeline_mode = #tpu.pipeline_mode<synchronous>, transform_indices = @transform_11, window_bounds = array<i64: 128, 128>}, {pipeline_mode = #tpu.pipeline_mode<synchronous>, transform_indices = @transform_12, window_bounds = array<i64: 1, 128>}, {pipeline_mode = #tpu.pipeline_mode<synchronous>, transform_indices = @transform_13, window_bounds = array<i64: 128, 128>}, {pipeline_mode = #tpu.pipeline_mode<synchronous>, transform_indices = @transform_14, window_bounds = array<i64: 1, 128>}, {transform_indices = @transform_15, window_bounds = array<i64: 8, 128>}]} {
    %cst = arith.constant 0.000000e+00 : f32
    %0 = vector.broadcast %cst : f32 to vector<8x128xf32>
    %c0 = arith.constant 0 : index
    %c0_0 = arith.constant 0 : index
    %1 = vector.load %arg1[%c0, %c0_0] : memref<256x128xf32, #tpu.memory_space<vmem>>, vector<256x128xf32>
    %c0_1 = arith.constant 0 : index
    %c0_2 = arith.constant 0 : index
    %2 = vector.load %arg17[%c0_1, %c0_2] : memref<264x128xf32, #tpu.memory_space<vmem>>, vector<256x128xf32>
    tpu.vector_store %arg17[%c0_1, %c0_2], %1 {strides = array<i32>} : memref<264x128xf32, #tpu.memory_space<vmem>>, vector<256x128xf32>,
    %c256 = arith.constant 256 : index
    %c0_3 = arith.constant 0 : index
    %3 = vector.load %arg17[%c256, %c0_3] : memref<264x128xf32, #tpu.memory_space<vmem>>, vector<8x128xf32>
    tpu.vector_store %arg17[%c256, %c0_3], %0 {strides = array<i32>} : memref<264x128xf32, #tpu.memory_space<vmem>>, vector<8x128xf32>,
    %c0_4 = arith.constant 0 : index
    %c0_5 = arith.constant 0 : index
    %4 = vector.load %arg17[%c0_4, %c0_5] : memref<264x128xf32, #tpu.memory_space<vmem>>, vector<256x128xf32>
    %c1 = arith.constant 1 : index
    %c0_6 = arith.constant 0 : index
    %5 = vector.load %arg17[%c1, %c0_6] : memref<264x128xf32, #tpu.memory_space<vmem>>, vector<256x128xf32>
    %c2 = arith.constant 2 : index
    %c0_7 = arith.constant 0 : index
    %6 = vector.load %arg17[%c2, %c0_7] : memref<264x128xf32, #tpu.memory_space<vmem>>, vector<256x128xf32>
    %c3 = arith.constant 3 : index
    %c0_8 = arith.constant 0 : index
    %7 = vector.load %arg17[%c3, %c0_8] : memref<264x128xf32, #tpu.memory_space<vmem>>, vector<256x128xf32>
    %c4 = arith.constant 4 : index
    %c0_9 = arith.constant 0 : index
    %8 = vector.load %arg17[%c4, %c0_9] : memref<264x128xf32, #tpu.memory_space<vmem>>, vector<256x128xf32>
    %9 = tpu.concatenate %4, %5, %6, %7, %8 in 1 : vector<256x128xf32>, vector<256x128xf32>, vector<256x128xf32>, vector<256x128xf32>, vector<256x128xf32> -> vector<256x640xf32>
    %10 = arith.truncf %9 : vector<256x640xf32> to vector<256x640xbf16>
    %c0_10 = arith.constant 0 : index
    %c0_11 = arith.constant 0 : index
    %11 = vector.load %arg2[%c0_10, %c0_11] : memref<640x168xbf16, #tpu.memory_space<vmem>>, vector<640x168xbf16>
    %cst_12 = arith.constant dense<0.000000e+00> : vector<256x168xf32>
    %12 = tpu.matmul %10, %11, %cst_12 {dimension_numbers = #tpu.dot_dimension_numbers<[1], [0], [0], [1], [0, 0, 1, 1], [], []>} : vector<256x640xbf16>, vector<640x168xbf16>, vector<256x168xf32> -> vector<256x168xf32>
    %c0_13 = arith.constant 0 : index
    %c0_14 = arith.constant 0 : index
    %13 = vector.load %arg3[%c0_13, %c0_14] : memref<1x168xf32, #tpu.memory_space<vmem>>, vector<1x168xf32>
    %14 = vector.broadcast %13 : vector<1x168xf32> to vector<256x168xf32>
    %15 = arith.addf %12, %14 : vector<256x168xf32>
    %cst_15 = arith.constant 0.000000e+00 : f32
    %16 = vector.broadcast %cst_15 : f32 to vector<256x168xf32>
    %17 = arith.maximumf %15, %16 : vector<256x168xf32>
    %18 = arith.truncf %17 : vector<256x168xf32> to vector<256x168xbf16>
    %c0_16 = arith.constant 0 : index
    %c0_17 = arith.constant 0 : index
    %19 = vector.load %arg4[%c0_16, %c0_17] : memref<168x128xbf16, #tpu.memory_space<vmem>>, vector<168x128xbf16>
    %cst_18 = arith.constant dense<0.000000e+00> : vector<256x128xf32>
    %20 = tpu.matmul %18, %19, %cst_18 {dimension_numbers = #tpu.dot_dimension_numbers<[1], [0], [0], [1], [0, 0, 1, 1], [], []>} : vector<256x168xbf16>, vector<168x128xbf16>, vector<256x128xf32> -> vector<256x128xf32>
    %21 = arith.truncf %17 : vector<256x168xf32> to vector<256x168xbf16>
    %c0_19 = arith.constant 0 : index
    %c0_20 = arith.constant 0 : index
    %22 = vector.load %arg5[%c0_19, %c0_20] : memref<168x128xbf16, #tpu.memory_space<vmem>>, vector<168x128xbf16>
    %cst_21 = arith.constant dense<0.000000e+00> : vector<256x128xf32>
    %23 = tpu.matmul %21, %22, %cst_21 {dimension_numbers = #tpu.dot_dimension_numbers<[1], [0], [0], [1], [0, 0, 1, 1], [], []>} : vector<256x168xbf16>, vector<168x128xbf16>, vector<256x128xf32> -> vector<256x128xf32>
    %24 = arith.maximumf %20, %23 : vector<256x128xf32>
    %c0_22 = arith.constant 0 : index
    %c0_23 = arith.constant 0 : index
    %25 = vector.load %arg18[%c0_22, %c0_23] : memref<256x128xf32, #tpu.memory_space<vmem>>, vector<256x128xf32>
    tpu.vector_store %arg18[%c0_22, %c0_23], %24 {strides = array<i32>} : memref<256x128xf32, #tpu.memory_space<vmem>>, vector<256x128xf32>,
    %c0_24 = arith.constant 0 : index
    %c0_25 = arith.constant 0 : index
    %26 = tpu.strided_load %arg18[%c0_24, %c0_25] {strides = array<i32: 2, 1>} : memref<256x128xf32, #tpu.memory_space<vmem>>, vector<128x128xf32>
    %c1_26 = arith.constant 1 : index
    %c0_27 = arith.constant 0 : index
    %27 = tpu.strided_load %arg18[%c1_26, %c0_27] {strides = array<i32: 2, 1>} : memref<256x128xf32, #tpu.memory_space<vmem>>, vector<128x128xf32>
    %28 = arith.maximumf %26, %27 : vector<128x128xf32>
    %c0_28 = arith.constant 0 : index
    %c0_29 = arith.constant 0 : index
    %29 = vector.load %arg19[%c0_28, %c0_29] : memref<136x128xf32, #tpu.memory_space<vmem>>, vector<128x128xf32>
    tpu.vector_store %arg19[%c0_28, %c0_29], %28 {strides = array<i32>} : memref<136x128xf32, #tpu.memory_space<vmem>>, vector<128x128xf32>,
    %c128 = arith.constant 128 : index
    %c0_30 = arith.constant 0 : index
    %30 = vector.load %arg19[%c128, %c0_30] : memref<136x128xf32, #tpu.memory_space<vmem>>, vector<8x128xf32>
    tpu.vector_store %arg19[%c128, %c0_30], %0 {strides = array<i32>} : memref<136x128xf32, #tpu.memory_space<vmem>>, vector<8x128xf32>,
    %c0_31 = arith.constant 0 : index
    %c0_32 = arith.constant 0 : index
    %31 = vector.load %arg19[%c0_31, %c0_32] : memref<136x128xf32, #tpu.memory_space<vmem>>, vector<128x128xf32>
    %c1_33 = arith.constant 1 : index
    %c0_34 = arith.constant 0 : index
    %32 = vector.load %arg19[%c1_33, %c0_34] : memref<136x128xf32, #tpu.memory_space<vmem>>, vector<128x128xf32>
    %c2_35 = arith.constant 2 : index
    %c0_36 = arith.constant 0 : index
    %33 = vector.load %arg19[%c2_35, %c0_36] : memref<136x128xf32, #tpu.memory_space<vmem>>, vector<128x128xf32>
    %c3_37 = arith.constant 3 : index
    %c0_38 = arith.constant 0 : index
    %34 = vector.load %arg19[%c3_37, %c0_38] : memref<136x128xf32, #tpu.memory_space<vmem>>, vector<128x128xf32>
    %c4_39 = arith.constant 4 : index
    %c0_40 = arith.constant 0 : index
    %35 = vector.load %arg19[%c4_39, %c0_40] : memref<136x128xf32, #tpu.memory_space<vmem>>, vector<128x128xf32>
    %36 = tpu.concatenate %31, %32, %33, %34, %35 in 1 : vector<128x128xf32>, vector<128x128xf32>, vector<128x128xf32>, vector<128x128xf32>, vector<128x128xf32> -> vector<128x640xf32>
    %37 = arith.truncf %36 : vector<128x640xf32> to vector<128x640xbf16>
    %c0_41 = arith.constant 0 : index
    %c0_42 = arith.constant 0 : index
    %38 = vector.load %arg6[%c0_41, %c0_42] : memref<640x160xbf16, #tpu.memory_space<vmem>>, vector<640x160xbf16>
    %cst_43 = arith.constant dense<0.000000e+00> : vector<128x160xf32>
    %39 = tpu.matmul %37, %38, %cst_43 {dimension_numbers = #tpu.dot_dimension_numbers<[1], [0], [0], [1], [0, 0, 1, 1], [], []>} : vector<128x640xbf16>, vector<640x160xbf16>, vector<128x160xf32> -> vector<128x160xf32>
    %c0_44 = arith.constant 0 : index
    %c0_45 = arith.constant 0 : index
    %40 = vector.load %arg7[%c0_44, %c0_45] : memref<1x160xf32, #tpu.memory_space<vmem>>, vector<1x160xf32>
    %41 = vector.broadcast %40 : vector<1x160xf32> to vector<128x160xf32>
    %42 = arith.addf %39, %41 : vector<128x160xf32>
    %cst_46 = arith.constant 0.000000e+00 : f32
    %43 = vector.broadcast %cst_46 : f32 to vector<128x160xf32>
    %44 = arith.maximumf %42, %43 : vector<128x160xf32>
    %45 = arith.truncf %44 : vector<128x160xf32> to vector<128x160xbf16>
    %c0_47 = arith.constant 0 : index
    %c0_48 = arith.constant 0 : index
    %46 = vector.load %arg8[%c0_47, %c0_48] : memref<160x128xbf16, #tpu.memory_space<vmem>>, vector<160x128xbf16>
    %cst_49 = arith.constant dense<0.000000e+00> : vector<128x128xf32>
    %47 = tpu.matmul %45, %46, %cst_49 {dimension_numbers = #tpu.dot_dimension_numbers<[1], [0], [0], [1], [0, 0, 1, 1], [], []>} : vector<128x160xbf16>, vector<160x128xbf16>, vector<128x128xf32> -> vector<128x128xf32>
    %48 = arith.truncf %44 : vector<128x160xf32> to vector<128x160xbf16>
    %c0_50 = arith.constant 0 : index
    %c0_51 = arith.constant 0 : index
    %49 = vector.load %arg9[%c0_50, %c0_51] : memref<160x128xbf16, #tpu.memory_space<vmem>>, vector<160x128xbf16>
    %cst_52 = arith.constant dense<0.000000e+00> : vector<128x128xf32>
    %50 = tpu.matmul %48, %49, %cst_52 {dimension_numbers = #tpu.dot_dimension_numbers<[1], [0], [0], [1], [0, 0, 1, 1], [], []>} : vector<128x160xbf16>, vector<160x128xbf16>, vector<128x128xf32> -> vector<128x128xf32>
    %51 = arith.maximumf %47, %50 : vector<128x128xf32>
    %c0_53 = arith.constant 0 : index
    %c0_54 = arith.constant 0 : index
    %52 = vector.load %arg20[%c0_53, %c0_54] : memref<128x128xf32, #tpu.memory_space<vmem>>, vector<128x128xf32>
    tpu.vector_store %arg20[%c0_53, %c0_54], %51 {strides = array<i32>} : memref<128x128xf32, #tpu.memory_space<vmem>>, vector<128x128xf32>,
    %c0_55 = arith.constant 0 : index
    %c0_56 = arith.constant 0 : index
    %53 = tpu.strided_load %arg20[%c0_55, %c0_56] {strides = array<i32: 2, 1>} : memref<128x128xf32, #tpu.memory_space<vmem>>, vector<64x128xf32>
    %c1_57 = arith.constant 1 : index
    %c0_58 = arith.constant 0 : index
    %54 = tpu.strided_load %arg20[%c1_57, %c0_58] {strides = array<i32: 2, 1>} : memref<128x128xf32, #tpu.memory_space<vmem>>, vector<64x128xf32>
    %55 = arith.maximumf %53, %54 : vector<64x128xf32>
    %c0_59 = arith.constant 0 : index
    %c0_60 = arith.constant 0 : index
    %56 = vector.load %arg21[%c0_59, %c0_60] : memref<64x128xf32, #tpu.memory_space<vmem>>, vector<64x128xf32>
    tpu.vector_store %arg21[%c0_59, %c0_60], %55 {strides = array<i32>} : memref<64x128xf32, #tpu.memory_space<vmem>>, vector<64x128xf32>,
    %c0_61 = arith.constant 0 : index
    %c0_62 = arith.constant 0 : index
    %57 = tpu.strided_load %arg21[%c0_61, %c0_62] {strides = array<i32: 8, 1>} : memref<64x128xf32, #tpu.memory_space<vmem>>, vector<8x128xf32>
    %c1_63 = arith.constant 1 : index
    %c0_64 = arith.constant 0 : index
    %58 = tpu.strided_load %arg21[%c1_63, %c0_64] {strides = array<i32: 8, 1>} : memref<64x128xf32, #tpu.memory_space<vmem>>, vector<8x128xf32>
    %c2_65 = arith.constant 2 : index
    %c0_66 = arith.constant 0 : index
    %59 = tpu.strided_load %arg21[%c2_65, %c0_66] {strides = array<i32: 8, 1>} : memref<64x128xf32, #tpu.memory_space<vmem>>, vector<8x128xf32>
    %c3_67 = arith.constant 3 : index
    %c0_68 = arith.constant 0 : index
    %60 = tpu.strided_load %arg21[%c3_67, %c0_68] {strides = array<i32: 8, 1>} : memref<64x128xf32, #tpu.memory_space<vmem>>, vector<8x128xf32>
    %c4_69 = arith.constant 4 : index
    %c0_70 = arith.constant 0 : index
    %61 = tpu.strided_load %arg21[%c4_69, %c0_70] {strides = array<i32: 8, 1>} : memref<64x128xf32, #tpu.memory_space<vmem>>, vector<8x128xf32>
    %62 = tpu.concatenate %57, %58, %59, %60, %61 in 1 : vector<8x128xf32>, vector<8x128xf32>, vector<8x128xf32>, vector<8x128xf32>, vector<8x128xf32> -> vector<8x640xf32>
    %63 = arith.truncf %62 : vector<8x640xf32> to vector<8x640xbf16>
    %c0_71 = arith.constant 0 : index
    %c0_72 = arith.constant 0 : index
    %64 = vector.load %arg10[%c0_71, %c0_72] : memref<640x128xbf16, #tpu.memory_space<vmem>>, vector<640x128xbf16>
    %cst_73 = arith.constant dense<0.000000e+00> : vector<8x128xf32>
    %65 = tpu.matmul %63, %64, %cst_73 {dimension_numbers = #tpu.dot_dimension_numbers<[1], [0], [0], [1], [0, 0, 1, 1], [], []>} : vector<8x640xbf16>, vector<640x128xbf16>, vector<8x128xf32> -> vector<8x128xf32>
    %c0_74 = arith.constant 0 : index
    %c0_75 = arith.constant 0 : index
    %66 = vector.load %arg11[%c0_74, %c0_75] : memref<1x128xf32, #tpu.memory_space<vmem>>, vector<1x128xf32>
    %67 = vector.broadcast %66 : vector<1x128xf32> to vector<8x128xf32>
    %68 = arith.addf %65, %67 : vector<8x128xf32>
    %cst_76 = arith.constant 0.000000e+00 : f32
    %69 = vector.broadcast %cst_76 : f32 to vector<8x128xf32>
    %70 = arith.maximumf %68, %69 : vector<8x128xf32>
    %71 = arith.truncf %70 : vector<8x128xf32> to vector<8x128xbf16>
    %c0_77 = arith.constant 0 : index
    %c0_78 = arith.constant 0 : index
    %72 = vector.load %arg12[%c0_77, %c0_78] : memref<128x128xbf16, #tpu.memory_space<vmem>>, vector<128x128xbf16>
    %cst_79 = arith.constant dense<0.000000e+00> : vector<8x128xf32>
    %73 = tpu.matmul %71, %72, %cst_79 {dimension_numbers = #tpu.dot_dimension_numbers<[1], [0], [0], [1], [0, 0, 1, 1], [], []>} : vector<8x128xbf16>, vector<128x128xbf16>, vector<8x128xf32> -> vector<8x128xf32>
    %c0_80 = arith.constant 0 : index
    %c0_81 = arith.constant 0 : index
    %74 = vector.load %arg13[%c0_80, %c0_81] : memref<1x128xf32, #tpu.memory_space<vmem>>, vector<1x128xf32>
    %75 = vector.broadcast %74 : vector<1x128xf32> to vector<8x128xf32>
    %76 = arith.addf %73, %75 : vector<8x128xf32>
    %cst_82 = arith.constant 0.000000e+00 : f32
    %77 = vector.broadcast %cst_82 : f32 to vector<8x128xf32>
    %78 = arith.maximumf %76, %77 : vector<8x128xf32>
    %79 = arith.truncf %78 : vector<8x128xf32> to vector<8x128xbf16>
    %c0_83 = arith.constant 0 : index
    %c0_84 = arith.constant 0 : index
    %80 = vector.load %arg14[%c0_83, %c0_84] : memref<128x128xbf16, #tpu.memory_space<vmem>>, vector<128x128xbf16>
    %cst_85 = arith.constant dense<0.000000e+00> : vector<8x128xf32>
    %81 = tpu.matmul %79, %80, %cst_85 {dimension_numbers = #tpu.dot_dimension_numbers<[1], [0], [0], [1], [0, 0, 1, 1], [], []>} : vector<8x128xbf16>, vector<128x128xbf16>, vector<8x128xf32> -> vector<8x128xf32>
    %c0_86 = arith.constant 0 : index
    %c0_87 = arith.constant 0 : index
    %82 = vector.load %arg15[%c0_86, %c0_87] : memref<1x128xf32, #tpu.memory_space<vmem>>, vector<1x128xf32>
    %83 = vector.broadcast %82 : vector<1x128xf32> to vector<8x128xf32>
    %84 = arith.addf %81, %83 : vector<8x128xf32>
    %c0_88 = arith.constant 0 : index
    %c0_89 = arith.constant 0 : index
    %85 = vector.load %arg16[%c0_88, %c0_89] : memref<8x128xf32, #tpu.memory_space<vmem>>, vector<8x128xf32>
    tpu.vector_store %arg16[%c0_88, %c0_89], %84 {strides = array<i32>} : memref<8x128xf32, #tpu.memory_space<vmem>>, vector<8x128xf32>,
    return
  }
  func.func @transform_0(%arg0: i32) -> (i32, i32) {
    %c0_i32 = arith.constant 0 : i32
    %c0_i32_0 = arith.constant 0 : i32
    return %arg0, %c0_i32 : i32, i32
  }
  func.func @transform_1(%arg0: i32) -> (i32, i32) {
    %c0_i32 = arith.constant 0 : i32
    %c0_i32_0 = arith.constant 0 : i32
    %c0_i32_1 = arith.constant 0 : i32
    return %c0_i32, %c0_i32_0 : i32, i32
  }
  func.func @transform_2(%arg0: i32) -> (i32, i32) {
    %c0_i32 = arith.constant 0 : i32
    %c0_i32_0 = arith.constant 0 : i32
    %c0_i32_1 = arith.constant 0 : i32
    return %c0_i32, %c0_i32_0 : i32, i32
  }
  func.func @transform_3(%arg0: i32) -> (i32, i32) {
    %c0_i32 = arith.constant 0 : i32
    %c0_i32_0 = arith.constant 0 : i32
    %c0_i32_1 = arith.constant 0 : i32
    return %c0_i32, %c0_i32_0 : i32, i32
  }
  func.func @transform_4(%arg0: i32) -> (i32, i32) {
    %c0_i32 = arith.constant 0 : i32
    %c0_i32_0 = arith.constant 0 : i32
    %c0_i32_1 = arith.constant 0 : i32
    return %c0_i32, %c0_i32_0 : i32, i32
  }
  func.func @transform_5(%arg0: i32) -> (i32, i32) {
    %c0_i32 = arith.constant 0 : i32
    %c0_i32_0 = arith.constant 0 : i32
    %c0_i32_1 = arith.constant 0 : i32
    return %c0_i32, %c0_i32_0 : i32, i32
  }
  func.func @transform_6(%arg0: i32) -> (i32, i32) {
    %c0_i32 = arith.constant 0 : i32
    %c0_i32_0 = arith.constant 0 : i32
    %c0_i32_1 = arith.constant 0 : i32
    return %c0_i32, %c0_i32_0 : i32, i32
  }
  func.func @transform_7(%arg0: i32) -> (i32, i32) {
    %c0_i32 = arith.constant 0 : i32
    %c0_i32_0 = arith.constant 0 : i32
    %c0_i32_1 = arith.constant 0 : i32
    return %c0_i32, %c0_i32_0 : i32, i32
  }
  func.func @transform_8(%arg0: i32) -> (i32, i32) {
    %c0_i32 = arith.constant 0 : i32
    %c0_i32_0 = arith.constant 0 : i32
    %c0_i32_1 = arith.constant 0 : i32
    return %c0_i32, %c0_i32_0 : i32, i32
  }
  func.func @transform_9(%arg0: i32) -> (i32, i32) {
    %c0_i32 = arith.constant 0 : i32
    %c0_i32_0 = arith.constant 0 : i32
    %c0_i32_1 = arith.constant 0 : i32
    return %c0_i32, %c0_i32_0 : i32, i32
  }
  func.func @transform_10(%arg0: i32) -> (i32, i32) {
    %c0_i32 = arith.constant 0 : i32
    %c0_i32_0 = arith.constant 0 : i32
    %c0_i32_1 = arith.constant 0 : i32
    return %c0_i32, %c0_i32_0 : i32, i32
  }
  func.func @transform_11(%arg0: i32) -> (i32, i32) {
    %c0_i32 = arith.constant 0 : i32
    %c0_i32_0 = arith.constant 0 : i32
    %c0_i32_1 = arith.constant 0 : i32
    return %c0_i32, %c0_i32_0 : i32, i32
  }
  func.func @transform_12(%arg0: i32) -> (i32, i32) {
    %c0_i32 = arith.constant 0 : i32
    %c0_i32_0 = arith.constant 0 : i32
    %c0_i32_1 = arith.constant 0 : i32
    return %c0_i32, %c0_i32_0 : i32, i32
  }
  func.func @transform_13(%arg0: i32) -> (i32, i32) {
    %c0_i32 = arith.constant 0 : i32
    %c0_i32_0 = arith.constant 0 : i32
    %c0_i32_1 = arith.constant 0 : i32
    return %c0_i32, %c0_i32_0 : i32, i32
  }
  func.func @transform_14(%arg0: i32) -> (i32, i32) {
    %c0_i32 = arith.constant 0 : i32
    %c0_i32_0 = arith.constant 0 : i32
    %c0_i32_1 = arith.constant 0 : i32
    return %c0_i32, %c0_i32_0 : i32, i32
  }
  func.func @transform_15(%arg0: i32) -> (i32, i32) {
    %c0_i32 = arith.constant 0 : i32
    %c0_i32_0 = arith.constant 0 : i32
    return %arg0, %c0_i32 : i32, i32
  }
}

</mosaic_0001>

<llo_original>
// kernel: net_forward.1
$region0: #{net_forward.1}
  #allocation0 [shape = 'u32[]', space=smem, size = 0x4, offset = 0x4, fixed_abs, tag = 'smem constant byte address 0x4 - core index']
  #allocation1 [shape = 'u32[144,128]{1,0:T(1,128)}', space=vmem, size = 0x12000, scoped, tag = 'internal scratch']
  #allocation2 [shape = 'f32[264,128]{1,0:T(8,128)}', space=vmem, size = 0x21000, scoped, tag = 'scratch operand']
  #allocation3 [shape = 'f32[256,128]{1,0:T(8,128)}', space=vmem, size = 0x20000, scoped, tag = 'scratch operand']
  #allocation4 [shape = 'f32[136,128]{1,0:T(8,128)}', space=vmem, size = 0x11000, scoped, tag = 'scratch operand']
  #allocation5 [shape = 'f32[128,128]{1,0:T(8,128)}', space=vmem, size = 0x10000, scoped, tag = 'scratch operand']
  #allocation6 [shape = 'f32[64,128]{1,0:T(8,128)}', space=vmem, size = 0x8000, scoped, tag = 'scratch operand']
  %s0 = inlined_call_operand.vmem [shape: f32[512,128], index: 0, kind: input, shape index: {}]
  %s1 = inlined_call_operand.vmem [shape: bf16[640,168], index: 1, kind: input, shape index: {}]
  %s2 = inlined_call_operand.vmem [shape: f32[1,168], index: 2, kind: input, shape index: {}]
  %s3 = inlined_call_operand.vmem [shape: bf16[168,128], index: 3, kind: input, shape index: {}]
  %s4 = inlined_call_operand.vmem [shape: bf16[168,128], index: 4, kind: input, shape index: {}]
  %s5 = inlined_call_operand.vmem [shape: bf16[640,160], index: 5, kind: input, shape index: {}]
  %s6 = inlined_call_operand.vmem [shape: f32[1,160], index: 6, kind: input, shape index: {}]
  %s7 = inlined_call_operand.vmem [shape: bf16[160,128], index: 7, kind: input, shape index: {}]
  %s8 = inlined_call_operand.vmem [shape: bf16[160,128], index: 8, kind: input, shape index: {}]
  %s9 = inlined_call_operand.vmem [shape: bf16[640,128], index: 9, kind: input, shape index: {}]
  %s10 = inlined_call_operand.vmem [shape: f32[1,128], index: 10, kind: input, shape index: {}]
  %s11 = inlined_call_operand.vmem [shape: bf16[128,128], index: 11, kind: input, shape index: {}]
  %s12 = inlined_call_operand.vmem [shape: f32[1,128], index: 12, kind: input, shape index: {}]
  %s13 = inlined_call_operand.vmem [shape: bf16[128,128], index: 13, kind: input, shape index: {}]
  %s14 = inlined_call_operand.vmem [shape: f32[1,128], index: 14, kind: input, shape index: {}]
  %s15 = inlined_call_operand.vmem [shape: f32[16,128], index: 15, kind: output, shape index: {}]
  %s16 = sld [smem:[#allocation0]]
  $region93: #{net_forward.1} parent=0
    _
  %s18 = ssub.s32 1, %s16
  %s19 = scalar_select 0, %s18, %s16
  loop: start=0, step=1, limit=4
  $region2: #{net_forward.1} parent=0 // loop_pre_header
    _
  $region3: #{net_forward.1} parent=0 // loop_header
    %s21 = sphi 0, %s25
    %p22 = scmp.ge.s32.totalorder %s21, 4
    %s31 = sphi 0, %s33
    %s34 = sphi 0, %s31
    %s35 = sphi 0, %s34
    %s51 = sphi 0, %s35
    %s55 = sphi 0, %s55
    %s57 = sphi 0, %s55
    %s58 = sphi 0, %s57
    %s72 = sphi 0, %s58
    %s76 = sphi 0, %s76
    %s78 = sphi 0, %s76
    %s79 = sphi 0, %s78
    %s93 = sphi 0, %s79
    %s97 = sphi 0, %s97
    %s99 = sphi 0, %s97
    %s100 = sphi 0, %s99
    %s114 = sphi 0, %s100
    %s118 = sphi 0, %s118
    %s120 = sphi 0, %s118
    %s121 = sphi 0, %s120
    %s135 = sphi 0, %s121
    %s139 = sphi 0, %s139
    %s141 = sphi 0, %s139
    %s142 = sphi 0, %s141
    %s156 = sphi 0, %s142
    %s160 = sphi 0, %s160
    %s162 = sphi 0, %s160
    %s163 = sphi 0, %s162
    %s177 = sphi 0, %s163
    %s181 = sphi 0, %s181
    %s183 = sphi 0, %s181
    %s184 = sphi 0, %s183
    %s198 = sphi 0, %s184
    %s202 = sphi 0, %s202
    %s204 = sphi 0, %s202
    %s205 = sphi 0, %s204
    %s219 = sphi 0, %s205
    %s223 = sphi 0, %s223
    %s225 = sphi 0, %s223
    %s226 = sphi 0, %s225
    %s240 = sphi 0, %s226
    %s244 = sphi 0, %s244
    %s246 = sphi 0, %s244
    %s247 = sphi 0, %s246
    %s261 = sphi 0, %s247
    %s265 = sphi 0, %s265
    %s267 = sphi 0, %s265
    %s268 = sphi 0, %s267
    %s282 = sphi 0, %s268
    %s286 = sphi 0, %s286
    %s288 = sphi 0, %s286
    %s289 = sphi 0, %s288
    %s303 = sphi 0, %s289
    %s307 = sphi 0, %s307
    %s309 = sphi 0, %s307
    %s310 = sphi 0, %s309
    %s324 = sphi 0, %s310
    %s328 = sphi 0, %s328
    %s330 = sphi 0, %s328
    %s331 = sphi 0, %s330
    %s345 = sphi 0, %s331
    %s351 = sphi 0, %s353
    %s354 = sphi 0, %s351
    %s355 = sphi 0, %s354
    %s371 = sphi 0, %s355
  $region4: #{net_forward.1} parent=0 // loop_header_branch
    %24 = sbr.rel (%p22) target = $region8
  $region5: #{net_forward.1} parent=0 // loop_body
    %s26 = ssub.s32 %s21, 1
    %s27 = ssub.s32 %s21, 2
    %s28 = sadd.s32 %s21, 1
    %s29 = ssub.s32 %s21, %s28
    %p30 = scmp.eq.s32.totalorder %s29, 0
    %s32 = sadd.s32 %s31, 1
    %s33 = scalar_select %p30, %s31, %s32
    %p36 = pneg %p30
    %p37 = scmp.eq.s32.totalorder %s21, 1
    %p38 = por %p36, %p37
    %p39 = scmp.ne.s32.totalorder %s31, %s34
    %p40 = scmp.eq.s32.totalorder %s21, 0
    %p41 = por %p39, %p40
    %p42 = scmp.ne.s32.totalorder %s31, %s34
    %p43 = scmp.eq.s32.totalorder %s26, 1
    %p44 = por %p42, %p43
    %p45 = scmp.ne.s32.totalorder %s34, %s35
    %p46 = scmp.eq.s32.totalorder %s26, 0
    %p47 = por %p45, %p46
    %p48 = scmp.ne.s32.totalorder %s34, %s35
    %p49 = scmp.eq.s32.totalorder %s27, 1
    %p50 = por %p48, %p49
    %p52 = scmp.ne.s32.totalorder %s35, %s51
    %p53 = scmp.eq.s32.totalorder %s27, 0
    %p54 = por %p52, %p53
    %s56 = sadd.s32 %s55, 1
    %p59 = scmp.eq.s32.totalorder %s21, 1
    %p60 = scmp.ne.s32.totalorder %s55, %s57
    %p61 = scmp.eq.s32.totalorder %s21, 0
    %p62 = por %p60, %p61
    %p63 = scmp.ne.s32.totalorder %s55, %s57
    %p64 = scmp.eq.s32.totalorder %s26, 1
    %p65 = por %p63, %p64
    %p66 = scmp.ne.s32.totalorder %s57, %s58
    %p67 = scmp.eq.s32.totalorder %s26, 0
    %p68 = por %p66, %p67
    %p69 = scmp.ne.s32.totalorder %s57, %s58
    %p70 = scmp.eq.s32.totalorder %s27, 1
    %p71 = por %p69, %p70
    %p73 = scmp.ne.s32.totalorder %s58, %s72
    %p74 = scmp.eq.s32.totalorder %s27, 0
    %p75 = por %p73, %p74
    %s77 = sadd.s32 %s76, 1
    %p80 = scmp.eq.s32.totalorder %s21, 1
    %p81 = scmp.ne.s32.totalorder %s76, %s78
    %p82 = scmp.eq.s32.totalorder %s21, 0
    %p83 = por %p81, %p82
    %p84 = scmp.ne.s32.totalorder %s76, %s78
    %p85 = scmp.eq.s32.totalorder %s26, 1
    %p86 = por %p84, %p85
    %p87 = scmp.ne.s32.totalorder %s78, %s79
    %p88 = scmp.eq.s32.totalorder %s26, 0
    %p89 = por %p87, %p88
    %p90 = scmp.ne.s32.totalorder %s78, %s79
    %p91 = scmp.eq.s32.totalorder %s27, 1
    %p92 = por %p90, %p91
    %p94 = scmp.ne.s32.totalorder %s79, %s93
    %p95 = scmp.eq.s32.totalorder %s27, 0
    %p96 = por %p94, %p95
    %s98 = sadd.s32 %s97, 1
    %p101 = scmp.eq.s32.totalorder %s21, 1
    %p102 = scmp.ne.s32.totalorder %s97, %s99
    %p103 = scmp.eq.s32.totalorder %s21, 0
    %p104 = por %p102, %p103
    %p105 = scmp.ne.s32.totalorder %s97, %s99
    %p106 = scmp.eq.s32.totalorder %s26, 1
    %p107 = por %p105, %p106
    %p108 = scmp.ne.s32.totalorder %s99, %s100
    %p109 = scmp.eq.s32.totalorder %s26, 0
    %p110 = por %p108, %p109
    %p111 = scmp.ne.s32.totalorder %s99, %s100
    %p112 = scmp.eq.s32.totalorder %s27, 1
    %p113 = por %p111, %p112
    %p115 = scmp.ne.s32.totalorder %s100, %s114
    %p116 = scmp.eq.s32.totalorder %s27, 0
    %p117 = por %p115, %p116
    %s119 = sadd.s32 %s118, 1
    %p122 = scmp.eq.s32.totalorder %s21, 1
    %p123 = scmp.ne.s32.totalorder %s118, %s120
    %p124 = scmp.eq.s32.totalorder %s21, 0
    %p125 = por %p123, %p124
    %p126 = scmp.ne.s32.totalorder %s118, %s120
    %p127 = scmp.eq.s32.totalorder %s26, 1
    %p128 = por %p126, %p127
    %p129 = scmp.ne.s32.totalorder %s120, %s121
    %p130 = scmp.eq.s32.totalorder %s26, 0
    %p131 = por %p129, %p130
    %p132 = scmp.ne.s32.totalorder %s120, %s121
    %p133 = scmp.eq.s32.totalorder %s27, 1
    %p134 = por %p132, %p133
    %p136 = scmp.ne.s32.totalorder %s121, %s135
    %p137 = scmp.eq.s32.totalorder %s27, 0
    %p138 = por %p136, %p137
    %s140 = sadd.s32 %s139, 1
    %p143 = scmp.eq.s32.totalorder %s21, 1
    %p144 = scmp.ne.s32.totalorder %s139, %s141
    %p145 = scmp.eq.s32.totalorder %s21, 0
    %p146 = por %p144, %p145
    %p147 = scmp.ne.s32.totalorder %s139, %s141
    %p148 = scmp.eq.s32.totalorder %s26, 1
    %p149 = por %p147, %p148
    %p150 = scmp.ne.s32.totalorder %s141, %s142
    %p151 = scmp.eq.s32.totalorder %s26, 0
    %p152 = por %p150, %p151
    %p153 = scmp.ne.s32.totalorder %s141, %s142
    %p154 = scmp.eq.s32.totalorder %s27, 1
    %p155 = por %p153, %p154
    %p157 = scmp.ne.s32.totalorder %s142, %s156
    %p158 = scmp.eq.s32.totalorder %s27, 0
    %p159 = por %p157, %p158
    %s161 = sadd.s32 %s160, 1
    %p164 = scmp.eq.s32.totalorder %s21, 1
    %p165 = scmp.ne.s32.totalorder %s160, %s162
    %p166 = scmp.eq.s32.totalorder %s21, 0
    %p167 = por %p165, %p166
    %p168 = scmp.ne.s32.totalorder %s160, %s162
    %p169 = scmp.eq.s32.totalorder %s26, 1
    %p170 = por %p168, %p169
    %p171 = scmp.ne.s32.totalorder %s162, %s163
    %p172 = scmp.eq.s32.totalorder %s26, 0
    %p173 = por %p171, %p172
    %p174 = scmp.ne.s32.totalorder %s162, %s163
    %p175 = scmp.eq.s32.totalorder %s27, 1
    %p176 = por %p174, %p175
    %p178 = scmp.ne.s32.totalorder %s163, %s177
    %p179 = scmp.eq.s32.totalorder %s27, 0
    %p180 = por %p178, %p179
    %s182 = sadd.s32 %s181, 1
    %p185 = scmp.eq.s32.totalorder %s21, 1
    %p186 = scmp.ne.s32.totalorder %s181, %s183
    %p187 = scmp.eq.s32.totalorder %s21, 0
    %p188 = por %p186, %p187
    %p189 = scmp.ne.s32.totalorder %s181, %s183
    %p190 = scmp.eq.s32.totalorder %s26, 1
    %p191 = por %p189, %p190
    %p192 = scmp.ne.s32.totalorder %s183, %s184
    %p193 = scmp.eq.s32.totalorder %s26, 0
    %p194 = por %p192, %p193
    %p195 = scmp.ne.s32.totalorder %s183, %s184
    %p196 = scmp.eq.s32.totalorder %s27, 1
    %p197 = por %p195, %p196
    %p199 = scmp.ne.s32.totalorder %s184, %s198
    %p200 = scmp.eq.s32.totalorder %s27, 0
    %p201 = por %p199, %p200
    %s203 = sadd.s32 %s202, 1
    %p206 = scmp.eq.s32.totalorder %s21, 1
    %p207 = scmp.ne.s32.totalorder %s202, %s204
    %p208 = scmp.eq.s32.totalorder %s21, 0
    %p209 = por %p207, %p208
    %p210 = scmp.ne.s32.totalorder %s202, %s204
    %p211 = scmp.eq.s32.totalorder %s26, 1
    %p212 = por %p210, %p211
    %p213 = scmp.ne.s32.totalorder %s204, %s205
    %p214 = scmp.eq.s32.totalorder %s26, 0
    %p215 = por %p213, %p214
    %p216 = scmp.ne.s32.totalorder %s204, %s205
    %p217 = scmp.eq.s32.totalorder %s27, 1
    %p218 = por %p216, %p217
    %p220 = scmp.ne.s32.totalorder %s205, %s219
    %p221 = scmp.eq.s32.totalorder %s27, 0
    %p222 = por %p220, %p221
    %s224 = sadd.s32 %s223, 1
    %p227 = scmp.eq.s32.totalorder %s21, 1
    %p228 = scmp.ne.s32.totalorder %s223, %s225
    %p229 = scmp.eq.s32.totalorder %s21, 0
    %p230 = por %p228, %p229
    %p231 = scmp.ne.s32.totalorder %s223, %s225
    %p232 = scmp.eq.s32.totalorder %s26, 1
    %p233 = por %p231, %p232
    %p234 = scmp.ne.s32.totalorder %s225, %s226
    %p235 = scmp.eq.s32.totalorder %s26, 0
    %p236 = por %p234, %p235
    %p237 = scmp.ne.s32.totalorder %s225, %s226
    %p238 = scmp.eq.s32.totalorder %s27, 1
    %p239 = por %p237, %p238
    %p241 = scmp.ne.s32.totalorder %s226, %s240
    %p242 = scmp.eq.s32.totalorder %s27, 0
    %p243 = por %p241, %p242
    %s245 = sadd.s32 %s244, 1
    %p248 = scmp.eq.s32.totalorder %s21, 1
    %p249 = scmp.ne.s32.totalorder %s244, %s246
    %p250 = scmp.eq.s32.totalorder %s21, 0
    %p251 = por %p249, %p250
    %p252 = scmp.ne.s32.totalorder %s244, %s246
    %p253 = scmp.eq.s32.totalorder %s26, 1
    %p254 = por %p252, %p253
    %p255 = scmp.ne.s32.totalorder %s246, %s247
    %p256 = scmp.eq.s32.totalorder %s26, 0
    %p257 = por %p255, %p256
    %p258 = scmp.ne.s32.totalorder %s246, %s247
    %p259 = scmp.eq.s32.totalorder %s27, 1
    %p260 = por %p258, %p259
    %p262 = scmp.ne.s32.totalorder %s247, %s261
    %p263 = scmp.eq.s32.totalorder %s27, 0
    %p264 = por %p262, %p263
    %s266 = sadd.s32 %s265, 1
    %p269 = scmp.eq.s32.totalorder %s21, 1
    %p270 = scmp.ne.s32.totalorder %s265, %s267
    %p271 = scmp.eq.s32.totalorder %s21, 0
    %p272 = por %p270, %p271
    %p273 = scmp.ne.s32.totalorder %s265, %s267
    %p274 = scmp.eq.s32.totalorder %s26, 1
    %p275 = por %p273, %p274
    %p276 = scmp.ne.s32.totalorder %s267, %s268
    %p277 = scmp.eq.s32.totalorder %s26, 0
    %p278 = por %p276, %p277
    %p279 = scmp.ne.s32.totalorder %s267, %s268
    %p280 = scmp.eq.s32.totalorder %s27, 1
    %p281 = por %p279, %p280
    %p283 = scmp.ne.s32.totalorder %s268, %s282
    %p284 = scmp.eq.s32.totalorder %s27, 0
    %p285 = por %p283, %p284
    %s287 = sadd.s32 %s286, 1
    %p290 = scmp.eq.s32.totalorder %s21, 1
    %p291 = scmp.ne.s32.totalorder %s286, %s288
    %p292 = scmp.eq.s32.totalorder %s21, 0
    %p293 = por %p291, %p292
    %p294 = scmp.ne.s32.totalorder %s286, %s288
    %p295 = scmp.eq.s32.totalorder %s26, 1
    %p296 = por %p294, %p295
    %p297 = scmp.ne.s32.totalorder %s288, %s289
    %p298 = scmp.eq.s32.totalorder %s26, 0
    %p299 = por %p297, %p298
    %p300 = scmp.ne.s32.totalorder %s288, %s289
    %p301 = scmp.eq.s32.totalorder %s27, 1
    %p302 = por %p300, %p301
    %p304 = scmp.ne.s32.totalorder %s289, %s303
    %p305 = scmp.eq.s32.totalorder %s27, 0
    %p306 = por %p304, %p305
    %s308 = sadd.s32 %s307, 1
    %p311 = scmp.eq.s32.totalorder %s21, 1
    %p312 = scmp.ne.s32.totalorder %s307, %s309
    %p313 = scmp.eq.s32.totalorder %s21, 0
    %p314 = por %p312, %p313
    %p315 = scmp.ne.s32.totalorder %s307, %s309
    %p316 = scmp.eq.s32.totalorder %s26, 1
    %p317 = por %p315, %p316
    %p318 = scmp.ne.s32.totalorder %s309, %s310
    %p319 = scmp.eq.s32.totalorder %s26, 0
    %p320 = por %p318, %p319
    %p321 = scmp.ne.s32.totalorder %s309, %s310
    %p322 = scmp.eq.s32.totalorder %s27, 1
    %p323 = por %p321, %p322
    %p325 = scmp.ne.s32.totalorder %s310, %s324
    %p326 = scmp.eq.s32.totalorder %s27, 0
    %p327 = por %p325, %p326
    %s329 = sadd.s32 %s328, 1
    %p332 = scmp.eq.s32.totalorder %s21, 1
    %p333 = scmp.ne.s32.totalorder %s328, %s330
    %p334 = scmp.eq.s32.totalorder %s21, 0
    %p335 = por %p333, %p334
    %p336 = scmp.ne.s32.totalorder %s328, %s330
    %p337 = scmp.eq.s32.totalorder %s26, 1
    %p338 = por %p336, %p337
    %p339 = scmp.ne.s32.totalorder %s330, %s331
    %p340 = scmp.eq.s32.totalorder %s26, 0
    %p341 = por %p339, %p340
    %p342 = scmp.ne.s32.totalorder %s330, %s331
    %p343 = scmp.eq.s32.totalorder %s27, 1
    %p344 = por %p342, %p343
    %p346 = scmp.ne.s32.totalorder %s331, %s345
    %p347 = scmp.eq.s32.totalorder %s27, 0
    %p348 = por %p346, %p347
    %s349 = ssub.s32 %s21, %s28
    %p350 = scmp.eq.s32.totalorder %s349, 0
    %s352 = sadd.s32 %s351, 1
    %s353 = scalar_select %p350, %s351, %s352
    %p356 = pneg %p350
    %p357 = scmp.eq.s32.totalorder %s21, 1
    %p358 = por %p356, %p357
    %p359 = scmp.ne.s32.totalorder %s351, %s354
    %p360 = scmp.eq.s32.totalorder %s21, 0
    %p361 = por %p359, %p360
    %p362 = scmp.ne.s32.totalorder %s351, %s354
    %p363 = scmp.eq.s32.totalorder %s26, 1
    %p364 = por %p362, %p363
    %p365 = scmp.ne.s32.totalorder %s354, %s355
    %p366 = scmp.eq.s32.totalorder %s26, 0
    %p367 = por %p365, %p366
    %p368 = scmp.ne.s32.totalorder %s354, %s355
    %p369 = scmp.eq.s32.totalorder %s27, 1
    %p370 = por %p368, %p369
    %p372 = scmp.ne.s32.totalorder %s355, %s371
    %p373 = scmp.eq.s32.totalorder %s27, 0
    %p374 = por %p372, %p373
    %p375 = scmp.le.s32.totalorder 1, %s21
    %p376 = scmp.lt.s32.totalorder %s21, 3
    %p377 = pnand %p375, %p376
    %p378 = pneg %p377
    // Predicated region
    $region9: #{net_forward.1} parent=5 // pred_check
      _
    $region10: #{net_forward.1} parent=5 // pred_check_branch
      %380 = sbr.rel (%p377) target = $region12
    $region11: #{net_forward.1} parent=5 // pred_region
      %s381 = ssub.s32 %s21, 1
      // Predicated region
      $region13: #{net_forward.1} parent=11 // pred_check
        %p382 = pneg %p68
      $region14: #{net_forward.1} parent=11 // pred_check_branch
        %384 = sbr.rel (%p382) target = $region16
      $region15: #{net_forward.1} parent=11 // pred_region
        _
      $region16: #{net_forward.1} parent=11 // pred_fallthru
        _
      // Predicated region
      $region17: #{net_forward.1} parent=11 // pred_check
        %p385 = pneg %p89
      $region18: #{net_forward.1} parent=11 // pred_check_branch
        %387 = sbr.rel (%p385) target = $region20
      $region19: #{net_forward.1} parent=11 // pred_region
        _
      $region20: #{net_forward.1} parent=11 // pred_fallthru
        _
      // Predicated region
      $region21: #{net_forward.1} parent=11 // pred_check
        %p388 = pneg %p110
      $region22: #{net_forward.1} parent=11 // pred_check_branch
        %390 = sbr.rel (%p388) target = $region24
      $region23: #{net_forward.1} parent=11 // pred_region
        _
      $region24: #{net_forward.1} parent=11 // pred_fallthru
        _
      // Predicated region
      $region25: #{net_forward.1} parent=11 // pred_check
        %p391 = pneg %p131
      $region26: #{net_forward.1} parent=11 // pred_check_branch
        %393 = sbr.rel (%p391) target = $region28
      $region27: #{net_forward.1} parent=11 // pred_region
        _
      $region28: #{net_forward.1} parent=11 // pred_fallthru
        _
      // Predicated region
      $region29: #{net_forward.1} parent=11 // pred_check
        %p394 = pneg %p152
      $region30: #{net_forward.1} parent=11 // pred_check_branch
        %396 = sbr.rel (%p394) target = $region32
      $region31: #{net_forward.1} parent=11 // pred_region
        _
      $region32: #{net_forward.1} parent=11 // pred_fallthru
        _
      // Predicated region
      $region33: #{net_forward.1} parent=11 // pred_check
        %p397 = pneg %p173
      $region34: #{net_forward.1} parent=11 // pred_check_branch
        %399 = sbr.rel (%p397) target = $region36
      $region35: #{net_forward.1} parent=11 // pred_region
        _
      $region36: #{net_forward.1} parent=11 // pred_fallthru
        _
      // Predicated region
      $region37: #{net_forward.1} parent=11 // pred_check
        %p400 = pneg %p194
      $region38: #{net_forward.1} parent=11 // pred_check_branch
        %402 = sbr.rel (%p400) target = $region40
      $region39: #{net_forward.1} parent=11 // pred_region
        _
      $region40: #{net_forward.1} parent=11 // pred_fallthru
        _
      // Predicated region
      $region41: #{net_forward.1} parent=11 // pred_check
        %p403 = pneg %p215
      $region42: #{net_forward.1} parent=11 // pred_check_branch
        %405 = sbr.rel (%p403) target = $region44
      $region43: #{net_forward.1} parent=11 // pred_region
        _
      $region44: #{net_forward.1} parent=11 // pred_fallthru
        _
      // Predicated region
      $region45: #{net_forward.1} parent=11 // pred_check
        %p406 = pneg %p236
      $region46: #{net_forward.1} parent=11 // pred_check_branch
        %408 = sbr.rel (%p406) target = $region48
      $region47: #{net_forward.1} parent=11 // pred_region
        _
      $region48: #{net_forward.1} parent=11 // pred_fallthru
        _
      // Predicated region
      $region49: #{net_forward.1} parent=11 // pred_check
        %p409 = pneg %p257
      $region50: #{net_forward.1} parent=11 // pred_check_branch
        %411 = sbr.rel (%p409) target = $region52
      $region51: #{net_forward.1} parent=11 // pred_region
        _
      $region52: #{net_forward.1} parent=11 // pred_fallthru
        _
      // Predicated region
      $region53: #{net_forward.1} parent=11 // pred_check
        %p412 = pneg %p278
      $region54: #{net_forward.1} parent=11 // pred_check_branch
        %414 = sbr.rel (%p412) target = $region56
      $region55: #{net_forward.1} parent=11 // pred_region
        _
      $region56: #{net_forward.1} parent=11 // pred_fallthru
        _
      // Predicated region
      $region57: #{net_forward.1} parent=11 // pred_check
        %p415 = pneg %p299
      $region58: #{net_forward.1} parent=11 // pred_check_branch
        %417 = sbr.rel (%p415) target = $region60
      $region59: #{net_forward.1} parent=11 // pred_region
        _
      $region60: #{net_forward.1} parent=11 // pred_fallthru
        _
      // Predicated region
      $region61: #{net_forward.1} parent=11 // pred_check
        %p418 = pneg %p320
      $region62: #{net_forward.1} parent=11 // pred_check_branch
        %420 = sbr.rel (%p418) target = $region64
      $region63: #{net_forward.1} parent=11 // pred_region
        _
      $region64: #{net_forward.1} parent=11 // pred_fallthru
        _
      // Predicated region
      $region65: #{net_forward.1} parent=11 // pred_check
        %p421 = pneg %p341
      $region66: #{net_forward.1} parent=11 // pred_check_branch
        %423 = sbr.rel (%p421) target = $region68
      $region67: #{net_forward.1} parent=11 // pred_region
        _
      $region68: #{net_forward.1} parent=11 // pred_fallthru
        _
    $region12: #{net_forward.1} parent=5 // pred_fallthru
      _
    %p424 = scmp.lt.s32.totalorder %s21, 2
    // Predicated region
    $region69: #{net_forward.1} parent=5 // pred_check
      %p425 = pneg %p424
    $region70: #{net_forward.1} parent=5 // pred_check_branch
      %427 = sbr.rel (%p425) target = $region72
    $region71: #{net_forward.1} parent=5 // pred_region
      // Predicated region
      $region73: #{net_forward.1} parent=71 // pred_check
        %p428 = pneg %p41
      $region74: #{net_forward.1} parent=71 // pred_check_branch
        %430 = sbr.rel (%p428) target = $region76
      $region75: #{net_forward.1} parent=71 // pred_region
        %s431 = smul.u32 32, %s21
        %p432 = scmp.lt.s32.totalorder %s431, 63
        %s433 = scalar_select %p432, %s431, 63
        %s434 = smul.addr %s433, 8
        %s435 = scalar_lea.vmem %s0, %s434
        %s436 = smul.u32 32, %s21
      $region76: #{net_forward.1} parent=71 // pred_fallthru
        _
    $region72: #{net_forward.1} parent=5 // pred_fallthru
      _
    %p437 = scmp.le.s32.totalorder 1, %s21
    %p438 = scmp.lt.s32.totalorder %s21, 3
    %p439 = pnand %p437, %p438
    %p440 = pneg %p439
    // Predicated region
    $region77: #{net_forward.1} parent=5 // pred_check
      _
    $region78: #{net_forward.1} parent=5 // pred_check_branch
      %442 = sbr.rel (%p439) target = $region80
    $region79: #{net_forward.1} parent=5 // pred_region
      %s443 = ssub.s32 %s21, 1
      %s444 = smul.u32 32, %s26
      %p445 = scmp.lt.s32.totalorder %s444, 63
      %s446 = scalar_select %p445, %s444, 63
      %s447 = smul.addr %s446, 8
      %s448 = scalar_lea.vmem %s0, %s447
      %p449 = pneg %p47
      %p450 = pneg %p44
      %p451 = pneg %p68
      %p452 = pneg %p65
      %p453 = pneg %p89
      %p454 = pneg %p86
      %p455 = pneg %p110
      %p456 = pneg %p107
      %p457 = pneg %p131
      %p458 = pneg %p128
      %p459 = pneg %p152
      %p460 = pneg %p149
      %p461 = pneg %p173
      %p462 = pneg %p170
      %p463 = pneg %p194
      %p464 = pneg %p191
      %p465 = pneg %p215
      %p466 = pneg %p212
      %p467 = pneg %p236
      %p468 = pneg %p233
      %p469 = pneg %p257
      %p470 = pneg %p254
      %p471 = pneg %p278
      %p472 = pneg %p275
      %p473 = pneg %p299
      %p474 = pneg %p296
      %p475 = pneg %p320
      %p476 = pneg %p317
      %p477 = pneg %p341
      %p478 = pneg %p338
      %p479 = pneg %p367
      %p480 = pneg %p364
      %p481 = scmp.lt.s32.totalorder %s26, 1
      %s482 = scalar_select %p481, %s26, 1
      %s483 = smul.addr %s482, 8
      %s484 = scalar_lea.vmem %s15, %s483
      %s485 = smul.u32 32, %s26
      %p486 = scmp.lt.s32.totalorder %s485, 63
      %s487 = scalar_select %p486, %s485, 63
      %s488 = smul.addr %s487, 8
      %s489 = scalar_lea.vmem %s0, %s488
      %s490 = smul.u32 32, %s26
      %p491 = scmp.lt.s32.totalorder %s26, 1
      %s492 = scalar_select %p491, %s26, 1
      %s493 = smul.addr %s492, 8
      %s494 = scalar_lea.vmem %s15, %s493
      %v496 = vld [vmem:[%s489] sm:$0xff]
      %v497 = vld [vmem:[%s489 + $0x8] sm:$0xff]
      %v498 = vld [vmem:[%s489 + $0x10] sm:$0xff]
      %v499 = vld [vmem:[%s489 + $0x18] sm:$0xff]
      %v500 = vld [vmem:[%s489 + $0x20] sm:$0xff]
      %v501 = vld [vmem:[%s489 + $0x28] sm:$0xff]
      %v502 = vld [vmem:[%s489 + $0x30] sm:$0xff]
      %v503 = vld [vmem:[%s489 + $0x38] sm:$0xff]
      %v504 = vld [vmem:[%s489 + $0x40] sm:$0xff]
      %v505 = vld [vmem:[%s489 + $0x48] sm:$0xff]
      %v506 = vld [vmem:[%s489 + $0x50] sm:$0xff]
      %v507 = vld [vmem:[%s489 + $0x58] sm:$0xff]
      %v508 = vld [vmem:[%s489 + $0x60] sm:$0xff]
      %v509 = vld [vmem:[%s489 + $0x68] sm:$0xff]
      %v510 = vld [vmem:[%s489 + $0x70] sm:$0xff]
      %v511 = vld [vmem:[%s489 + $0x78] sm:$0xff]
      %v512 = vld [vmem:[%s489 + $0x80] sm:$0xff]
      %v513 = vld [vmem:[%s489 + $0x88] sm:$0xff]
      %v514 = vld [vmem:[%s489 + $0x90] sm:$0xff]
      %v515 = vld [vmem:[%s489 + $0x98] sm:$0xff]
      %v516 = vld [vmem:[%s489 + $0xa0] sm:$0xff]
      %v517 = vld [vmem:[%s489 + $0xa8] sm:$0xff]
      %v518 = vld [vmem:[%s489 + $0xb0] sm:$0xff]
      %v519 = vld [vmem:[%s489 + $0xb8] sm:$0xff]
      %v520 = vld [vmem:[%s489 + $0xc0] sm:$0xff]
      %v521 = vld [vmem:[%s489 + $0xc8] sm:$0xff]
      %v522 = vld [vmem:[%s489 + $0xd0] sm:$0xff]
      %v523 = vld [vmem:[%s489 + $0xd8] sm:$0xff]
      %v524 = vld [vmem:[%s489 + $0xe0] sm:$0xff]
      %v525 = vld [vmem:[%s489 + $0xe8] sm:$0xff]
      %v526 = vld [vmem:[%s489 + $0xf0] sm:$0xff]
      %v527 = vld [vmem:[%s489 + $0xf8] sm:$0xff]
      %528 = vst [vmem:[#allocation2] sm:$0xff] %v496
      %529 = vst [vmem:[#allocation2 + $0x8] sm:$0xff] %v497
      %530 = vst [vmem:[#allocation2 + $0x10] sm:$0xff] %v498
      %531 = vst [vmem:[#allocation2 + $0x18] sm:$0xff] %v499
      %532 = vst [vmem:[#allocation2 + $0x20] sm:$0xff] %v500
      %533 = vst [vmem:[#allocation2 + $0x28] sm:$0xff] %v501
      %534 = vst [vmem:[#allocation2 + $0x30] sm:$0xff] %v502
      %535 = vst [vmem:[#allocation2 + $0x38] sm:$0xff] %v503
      %536 = vst [vmem:[#allocation2 + $0x40] sm:$0xff] %v504
      %537 = vst [vmem:[#allocation2 + $0x48] sm:$0xff] %v505
      %538 = vst [vmem:[#allocation2 + $0x50] sm:$0xff] %v506
      %539 = vst [vmem:[#allocation2 + $0x58] sm:$0xff] %v507
      %540 = vst [vmem:[#allocation2 + $0x60] sm:$0xff] %v508
      %541 = vst [vmem:[#allocation2 + $0x68] sm:$0xff] %v509
      %542 = vst [vmem:[#allocation2 + $0x70] sm:$0xff] %v510
      %543 = vst [vmem:[#allocation2 + $0x78] sm:$0xff] %v511
      %544 = vst [vmem:[#allocation2 + $0x80] sm:$0xff] %v512
      %545 = vst [vmem:[#allocation2 + $0x88] sm:$0xff] %v513
      %546 = vst [vmem:[#allocation2 + $0x90] sm:$0xff] %v514
      %547 = vst [vmem:[#allocation2 + $0x98] sm:$0xff] %v515
      %548 = vst [vmem:[#allocation2 + $0xa0] sm:$0xff] %v516
      %549 = vst [vmem:[#allocation2 + $0xa8] sm:$0xff] %v517
      %550 = vst [vmem:[#allocation2 + $0xb0] sm:$0xff] %v518
      %551 = vst [vmem:[#allocation2 + $0xb8] sm:$0xff] %v519
      %552 = vst [vmem:[#allocation2 + $0xc0] sm:$0xff] %v520
      %553 = vst [vmem:[#allocation2 + $0xc8] sm:$0xff] %v521
      %554 = vst [vmem:[#allocation2 + $0xd0] sm:$0xff] %v522
      %555 = vst [vmem:[#allocation2 + $0xd8] sm:$0xff] %v523
      %556 = vst [vmem:[#allocation2 + $0xe0] sm:$0xff] %v524
      %557 = vst [vmem:[#allocation2 + $0xe8] sm:$0xff] %v525
      %558 = vst [vmem:[#allocation2 + $0xf0] sm:$0xff] %v526
      %559 = vst [vmem:[#allocation2 + $0xf8] sm:$0xff] %v527
      %560 = vst [vmem:[#allocation2 + $0x100] sm:$0xff] 0.0
      %v561 = vld [vmem:[#allocation2] sm:$0xff]
      %v562 = vld [vmem:[#allocation2 + $0x8] sm:$0xff]
      %v563 = vld [vmem:[#allocation2 + $0x10] sm:$0xff]
      %v564 = vld [vmem:[#allocation2 + $0x18] sm:$0xff]
      %v565 = vld [vmem:[#allocation2 + $0x20] sm:$0xff]
      %v566 = vld [vmem:[#allocation2 + $0x28] sm:$0xff]
      %v567 = vld [vmem:[#allocation2 + $0x30] sm:$0xff]
      %v568 = vld [vmem:[#allocation2 + $0x38] sm:$0xff]
      %v569 = vld [vmem:[#allocation2 + $0x40] sm:$0xff]
      %v570 = vld [vmem:[#allocation2 + $0x48] sm:$0xff]
      %v571 = vld [vmem:[#allocation2 + $0x50] sm:$0xff]
      %v572 = vld [vmem:[#allocation2 + $0x58] sm:$0xff]
      %v573 = vld [vmem:[#allocation2 + $0x60] sm:$0xff]
      %v574 = vld [vmem:[#allocation2 + $0x68] sm:$0xff]
      %v575 = vld [vmem:[#allocation2 + $0x70] sm:$0xff]
      %v576 = vld [vmem:[#allocation2 + $0x78] sm:$0xff]
      %v577 = vld [vmem:[#allocation2 + $0x80] sm:$0xff]
      %v578 = vld [vmem:[#allocation2 + $0x88] sm:$0xff]
      %v579 = vld [vmem:[#allocation2 + $0x90] sm:$0xff]
      %v580 = vld [vmem:[#allocation2 + $0x98] sm:$0xff]
      %v581 = vld [vmem:[#allocation2 + $0xa0] sm:$0xff]
      %v582 = vld [vmem:[#allocation2 + $0xa8] sm:$0xff]
      %v583 = vld [vmem:[#allocation2 + $0xb0] sm:$0xff]
      %v584 = vld [vmem:[#allocation2 + $0xb8] sm:$0xff]
      %v585 = vld [vmem:[#allocation2 + $0xc0] sm:$0xff]
      %v586 = vld [vmem:[#allocation2 + $0xc8] sm:$0xff]
      %v587 = vld [vmem:[#allocation2 + $0xd0] sm:$0xff]
      %v588 = vld [vmem:[#allocation2 + $0xd8] sm:$0xff]
      %v589 = vld [vmem:[#allocation2 + $0xe0] sm:$0xff]
      %v590 = vld [vmem:[#allocation2 + $0xe8] sm:$0xff]
      %v591 = vld [vmem:[#allocation2 + $0xf0] sm:$0xff]
      %v592 = vld [vmem:[#allocation2 + $0xf8] sm:$0xff]
      %v593 = vld [vmem:[#allocation2 + $0x1] sm:$0xff]
      %v594 = vld [vmem:[#allocation2 + $0x9] sm:$0xff]
      %v595 = vld [vmem:[#allocation2 + $0x11] sm:$0xff]
      %v596 = vld [vmem:[#allocation2 + $0x19] sm:$0xff]
      %v597 = vld [vmem:[#allocation2 + $0x21] sm:$0xff]
      %v598 = vld [vmem:[#allocation2 + $0x29] sm:$0xff]
      %v599 = vld [vmem:[#allocation2 + $0x31] sm:$0xff]
      %v600 = vld [vmem:[#allocation2 + $0x39] sm:$0xff]
      %v601 = vld [vmem:[#allocation2 + $0x41] sm:$0xff]
      %v602 = vld [vmem:[#allocation2 + $0x49] sm:$0xff]
      %v603 = vld [vmem:[#allocation2 + $0x51] sm:$0xff]
      %v604 = vld [vmem:[#allocation2 + $0x59] sm:$0xff]
      %v605 = vld [vmem:[#allocation2 + $0x61] sm:$0xff]
      %v606 = vld [vmem:[#allocation2 + $0x69] sm:$0xff]
      %v607 = vld [vmem:[#allocation2 + $0x71] sm:$0xff]
      %v608 = vld [vmem:[#allocation2 + $0x79] sm:$0xff]
      %v609 = vld [vmem:[#allocation2 + $0x81] sm:$0xff]
      %v610 = vld [vmem:[#allocation2 + $0x89] sm:$0xff]
      %v611 = vld [vmem:[#allocation2 + $0x91] sm:$0xff]
      %v612 = vld [vmem:[#allocation2 + $0x99] sm:$0xff]
      %v613 = vld [vmem:[#allocation2 + $0xa1] sm:$0xff]
      %v614 = vld [vmem:[#allocation2 + $0xa9] sm:$0xff]
      %v615 = vld [vmem:[#allocation2 + $0xb1] sm:$0xff]
      %v616 = vld [vmem:[#allocation2 + $0xb9] sm:$0xff]
      %v617 = vld [vmem:[#allocation2 + $0xc1] sm:$0xff]
      %v618 = vld [vmem:[#allocation2 + $0xc9] sm:$0xff]
      %v619 = vld [vmem:[#allocation2 + $0xd1] sm:$0xff]
      %v620 = vld [vmem:[#allocation2 + $0xd9] sm:$0xff]
      %v621 = vld [vmem:[#allocation2 + $0xe1] sm:$0xff]
      %v622 = vld [vmem:[#allocation2 + $0xe9] sm:$0xff]
      %v623 = vld [vmem:[#allocation2 + $0xf1] sm:$0xff]
      %v624 = vld [vmem:[#allocation2 + $0xf9] sm:$0xff]
      %v625 = vld [vmem:[#allocation2 + $0x2] sm:$0xff]
      %v626 = vld [vmem:[#allocation2 + $0xa] sm:$0xff]
      %v627 = vld [vmem:[#allocation2 + $0x12] sm:$0xff]
      %v628 = vld [vmem:[#allocation2 + $0x1a] sm:$0xff]
      %v629 = vld [vmem:[#allocation2 + $0x22] sm:$0xff]
      %v630 = vld [vmem:[#allocation2 + $0x2a] sm:$0xff]
      %v631 = vld [vmem:[#allocation2 + $0x32] sm:$0xff]
      %v632 = vld [vmem:[#allocation2 + $0x3a] sm:$0xff]
      %v633 = vld [vmem:[#allocation2 + $0x42] sm:$0xff]
      %v634 = vld [vmem:[#allocation2 + $0x4a] sm:$0xff]
      %v635 = vld [vmem:[#allocation2 + $0x52] sm:$0xff]
      %v636 = vld [vmem:[#allocation2 + $0x5a] sm:$0xff]
      %v637 = vld [vmem:[#allocation2 + $0x62] sm:$0xff]
      %v638 = vld [vmem:[#allocation2 + $0x6a] sm:$0xff]
      %v639 = vld [vmem:[#allocation2 + $0x72] sm:$0xff]
      %v640 = vld [vmem:[#allocation2 + $0x7a] sm:$0xff]
      %v641 = vld [vmem:[#allocation2 + $0x82] sm:$0xff]
      %v642 = vld [vmem:[#allocation2 + $0x8a] sm:$0xff]
      %v643 = vld [vmem:[#allocation2 + $0x92] sm:$0xff]
      %v644 = vld [vmem:[#allocation2 + $0x9a] sm:$0xff]
      %v645 = vld [vmem:[#allocation2 + $0xa2] sm:$0xff]
      %v646 = vld [vmem:[#allocation2 + $0xaa] sm:$0xff]
      %v647 = vld [vmem:[#allocation2 + $0xb2] sm:$0xff]
      %v648 = vld [vmem:[#allocation2 + $0xba] sm:$0xff]
      %v649 = vld [vmem:[#allocation2 + $0xc2] sm:$0xff]
      %v650 = vld [vmem:[#allocation2 + $0xca] sm:$0xff]
      %v651 = vld [vmem:[#allocation2 + $0xd2] sm:$0xff]
      %v652 = vld [vmem:[#allocation2 + $0xda] sm:$0xff]
      %v653 = vld [vmem:[#allocation2 + $0xe2] sm:$0xff]
      %v654 = vld [vmem:[#allocation2 + $0xea] sm:$0xff]
      %v655 = vld [vmem:[#allocation2 + $0xf2] sm:$0xff]
      %v656 = vld [vmem:[#allocation2 + $0xfa] sm:$0xff]
      %v657 = vld [vmem:[#allocation2 + $0x3] sm:$0xff]
      %v658 = vld [vmem:[#allocation2 + $0xb] sm:$0xff]
      %v659 = vld [vmem:[#allocation2 + $0x13] sm:$0xff]
      %v660 = vld [vmem:[#allocation2 + $0x1b] sm:$0xff]
      %v661 = vld [vmem:[#allocation2 + $0x23] sm:$0xff]
      %v662 = vld [vmem:[#allocation2 + $0x2b] sm:$0xff]
      %v663 = vld [vmem:[#allocation2 + $0x33] sm:$0xff]
      %v664 = vld [vmem:[#allocation2 + $0x3b] sm:$0xff]
      %v665 = vld [vmem:[#allocation2 + $0x43] sm:$0xff]
      %v666 = vld [vmem:[#allocation2 + $0x4b] sm:$0xff]
      %v667 = vld [vmem:[#allocation2 + $0x53] sm:$0xff]
      %v668 = vld [vmem:[#allocation2 + $0x5b] sm:$0xff]
      %v669 = vld [vmem:[#allocation2 + $0x63] sm:$0xff]
      %v670 = vld [vmem:[#allocation2 + $0x6b] sm:$0xff]
      %v671 = vld [vmem:[#allocation2 + $0x73] sm:$0xff]
      %v672 = vld [vmem:[#allocation2 + $0x7b] sm:$0xff]
      %v673 = vld [vmem:[#allocation2 + $0x83] sm:$0xff]
      %v674 = vld [vmem:[#allocation2 + $0x8b] sm:$0xff]
      %v675 = vld [vmem:[#allocation2 + $0x93] sm:$0xff]
      %v676 = vld [vmem:[#allocation2 + $0x9b] sm:$0xff]
      %v677 = vld [vmem:[#allocation2 + $0xa3] sm:$0xff]
      %v678 = vld [vmem:[#allocation2 + $0xab] sm:$0xff]
      %v679 = vld [vmem:[#allocation2 + $0xb3] sm:$0xff]
      %v680 = vld [vmem:[#allocation2 + $0xbb] sm:$0xff]
      %v681 = vld [vmem:[#allocation2 + $0xc3] sm:$0xff]
      %v682 = vld [vmem:[#allocation2 + $0xcb] sm:$0xff]
      %v683 = vld [vmem:[#allocation2 + $0xd3] sm:$0xff]
      %v684 = vld [vmem:[#allocation2 + $0xdb] sm:$0xff]
      %v685 = vld [vmem:[#allocation2 + $0xe3] sm:$0xff]
      %v686 = vld [vmem:[#allocation2 + $0xeb] sm:$0xff]
      %v687 = vld [vmem:[#allocation2 + $0xf3] sm:$0xff]
      %v688 = vld [vmem:[#allocation2 + $0xfb] sm:$0xff]
      %v689 = vld [vmem:[#allocation2 + $0x4] sm:$0xff]
      %v690 = vld [vmem:[#allocation2 + $0xc] sm:$0xff]
      %v691 = vld [vmem:[#allocation2 + $0x14] sm:$0xff]
      %v692 = vld [vmem:[#allocation2 + $0x1c] sm:$0xff]
      %v693 = vld [vmem:[#allocation2 + $0x24] sm:$0xff]
      %v694 = vld [vmem:[#allocation2 + $0x2c] sm:$0xff]
      %v695 = vld [vmem:[#allocation2 + $0x34] sm:$0xff]
      %v696 = vld [vmem:[#allocation2 + $0x3c] sm:$0xff]
      %v697 = vld [vmem:[#allocation2 + $0x44] sm:$0xff]
      %v698 = vld [vmem:[#allocation2 + $0x4c] sm:$0xff]
      %v699 = vld [vmem:[#allocation2 + $0x54] sm:$0xff]
      %v700 = vld [vmem:[#allocation2 + $0x5c] sm:$0xff]
      %v701 = vld [vmem:[#allocation2 + $0x64] sm:$0xff]
      %v702 = vld [vmem:[#allocation2 + $0x6c] sm:$0xff]
      %v703 = vld [vmem:[#allocation2 + $0x74] sm:$0xff]
      %v704 = vld [vmem:[#allocation2 + $0x7c] sm:$0xff]
      %v705 = vld [vmem:[#allocation2 + $0x84] sm:$0xff]
      %v706 = vld [vmem:[#allocation2 + $0x8c] sm:$0xff]
      %v707 = vld [vmem:[#allocation2 + $0x94] sm:$0xff]
      %v708 = vld [vmem:[#allocation2 + $0x9c] sm:$0xff]
      %v709 = vld [vmem:[#allocation2 + $0xa4] sm:$0xff]
      %v710 = vld [vmem:[#allocation2 + $0xac] sm:$0xff]
      %v711 = vld [vmem:[#allocation2 + $0xb4] sm:$0xff]
      %v712 = vld [vmem:[#allocation2 + $0xbc] sm:$0xff]
      %v713 = vld [vmem:[#allocation2 + $0xc4] sm:$0xff]
      %v714 = vld [vmem:[#allocation2 + $0xcc] sm:$0xff]
      %v715 = vld [vmem:[#allocation2 + $0xd4] sm:$0xff]
      %v716 = vld [vmem:[#allocation2 + $0xdc] sm:$0xff]
      %v717 = vld [vmem:[#allocation2 + $0xe4] sm:$0xff]
      %v718 = vld [vmem:[#allocation2 + $0xec] sm:$0xff]
      %v719 = vld [vmem:[#allocation2 + $0xf4] sm:$0xff]
      %v720 = vld [vmem:[#allocation2 + $0xfc] sm:$0xff]
      %v721 = vpack.c.bf16 %v562, %v561
      %v722 = vpack.c.bf16 %v594, %v593
      %v723 = vpack.c.bf16 %v626, %v625
      %v724 = vpack.c.bf16 %v658, %v657
      %v725 = vpack.c.bf16 %v690, %v689
      %v726 = vpack.c.bf16 %v564, %v563
      %v727 = vpack.c.bf16 %v596, %v595
      %v728 = vpack.c.bf16 %v628, %v627
      %v729 = vpack.c.bf16 %v660, %v659
      %v730 = vpack.c.bf16 %v692, %v691
      %v731 = vpack.c.bf16 %v566, %v565
      %v732 = vpack.c.bf16 %v598, %v597
      %v733 = vpack.c.bf16 %v630, %v629
      %v734 = vpack.c.bf16 %v662, %v661
      %v735 = vpack.c.bf16 %v694, %v693
      %v736 = vpack.c.bf16 %v568, %v567
      %v737 = vpack.c.bf16 %v600, %v599
      %v738 = vpack.c.bf16 %v632, %v631
      %v739 = vpack.c.bf16 %v664, %v663
      %v740 = vpack.c.bf16 %v696, %v695
      %v741 = vpack.c.bf16 %v570, %v569
      %v742 = vpack.c.bf16 %v602, %v601
      %v743 = vpack.c.bf16 %v634, %v633
      %v744 = vpack.c.bf16 %v666, %v665
      %v745 = vpack.c.bf16 %v698, %v697
      %v746 = vpack.c.bf16 %v572, %v571
      %v747 = vpack.c.bf16 %v604, %v603
      %v748 = vpack.c.bf16 %v636, %v635
      %v749 = vpack.c.bf16 %v668, %v667
      %v750 = vpack.c.bf16 %v700, %v699
      %v751 = vpack.c.bf16 %v574, %v573
      %v752 = vpack.c.bf16 %v606, %v605
      %v753 = vpack.c.bf16 %v638, %v637
      %v754 = vpack.c.bf16 %v670, %v669
      %v755 = vpack.c.bf16 %v702, %v701
      %v756 = vpack.c.bf16 %v576, %v575
      %v757 = vpack.c.bf16 %v608, %v607
      %v758 = vpack.c.bf16 %v640, %v639
      %v759 = vpack.c.bf16 %v672, %v671
      %v760 = vpack.c.bf16 %v704, %v703
      %v761 = vpack.c.bf16 %v578, %v577
      %v762 = vpack.c.bf16 %v610, %v609
      %v763 = vpack.c.bf16 %v642, %v641
      %v764 = vpack.c.bf16 %v674, %v673
      %v765 = vpack.c.bf16 %v706, %v705
      %v766 = vpack.c.bf16 %v580, %v579
      %v767 = vpack.c.bf16 %v612, %v611
      %v768 = vpack.c.bf16 %v644, %v643
      %v769 = vpack.c.bf16 %v676, %v675
      %v770 = vpack.c.bf16 %v708, %v707
      %v771 = vpack.c.bf16 %v582, %v581
      %v772 = vpack.c.bf16 %v614, %v613
      %v773 = vpack.c.bf16 %v646, %v645
      %v774 = vpack.c.bf16 %v678, %v677
      %v775 = vpack.c.bf16 %v710, %v709
      %v776 = vpack.c.bf16 %v584, %v583
      %v777 = vpack.c.bf16 %v616, %v615
      %v778 = vpack.c.bf16 %v648, %v647
      %v779 = vpack.c.bf16 %v680, %v679
      %v780 = vpack.c.bf16 %v712, %v711
      %v781 = vpack.c.bf16 %v586, %v585
      %v782 = vpack.c.bf16 %v618, %v617
      %v783 = vpack.c.bf16 %v650, %v649
      %v784 = vpack.c.bf16 %v682, %v681
      %v785 = vpack.c.bf16 %v714, %v713
      %v786 = vpack.c.bf16 %v588, %v587
      %v787 = vpack.c.bf16 %v620, %v619
      %v788 = vpack.c.bf16 %v652, %v651
      %v789 = vpack.c.bf16 %v684, %v683
      %v790 = vpack.c.bf16 %v716, %v715
      %v791 = vpack.c.bf16 %v590, %v589
      %v792 = vpack.c.bf16 %v622, %v621
      %v793 = vpack.c.bf16 %v654, %v653
      %v794 = vpack.c.bf16 %v686, %v685
      %v795 = vpack.c.bf16 %v718, %v717
      %v796 = vpack.c.bf16 %v592, %v591
      %v797 = vpack.c.bf16 %v624, %v623
      %v798 = vpack.c.bf16 %v656, %v655
      %v799 = vpack.c.bf16 %v688, %v687
      %v800 = vpack.c.bf16 %v720, %v719
      %v801 = vld [vmem:[%s1] sm:$0xff]
      %v802 = vld [vmem:[%s1 + $0x8] sm:$0xff]
      %v803 = vld [vmem:[%s1 + $0x10] sm:$0xff]
      %v804 = vld [vmem:[%s1 + $0x18] sm:$0xff]
      %v805 = vld [vmem:[%s1 + $0x20] sm:$0xff]
      %v806 = vld [vmem:[%s1 + $0x28] sm:$0xff]
      %v807 = vld [vmem:[%s1 + $0x30] sm:$0xff]
      %v808 = vld [vmem:[%s1 + $0x38] sm:$0xff]
      %v809 = vld [vmem:[%s1 + $0x40] sm:$0xff]
      %v810 = vld [vmem:[%s1 + $0x48] sm:$0xff]
      %v811 = vld [vmem:[%s1 + $0x50] sm:$0xff]
      %v812 = vld [vmem:[%s1 + $0x58] sm:$0xff]
      %v813 = vld [vmem:[%s1 + $0x60] sm:$0xff]
      %v814 = vld [vmem:[%s1 + $0x68] sm:$0xff]
      %v815 = vld [vmem:[%s1 + $0x70] sm:$0xff]
      %v816 = vld [vmem:[%s1 + $0x78] sm:$0xff]
      %v817 = vld [vmem:[%s1 + $0x80] sm:$0xff]
      %v818 = vld [vmem:[%s1 + $0x88] sm:$0xff]
      %v819 = vld [vmem:[%s1 + $0x90] sm:$0xff]
      %v820 = vld [vmem:[%s1 + $0x98] sm:$0xff]
      %v821 = vld [vmem:[%s1 + $0xa0] sm:$0xff]
      %v822 = vld [vmem:[%s1 + $0xa8] sm:$0xff]
      %v823 = vld [vmem:[%s1 + $0xb0] sm:$0xff]
      %v824 = vld [vmem:[%s1 + $0xb8] sm:$0xff]
      %v825 = vld [vmem:[%s1 + $0xc0] sm:$0xff]
      %v826 = vld [vmem:[%s1 + $0xc8] sm:$0xff]
      %v827 = vld [vmem:[%s1 + $0xd0] sm:$0xff]
      %v828 = vld [vmem:[%s1 + $0xd8] sm:$0xff]
      %v829 = vld [vmem:[%s1 + $0xe0] sm:$0xff]
      %v830 = vld [vmem:[%s1 + $0xe8] sm:$0xff]
      %v831 = vld [vmem:[%s1 + $0xf0] sm:$0xff]
      %v832 = vld [vmem:[%s1 + $0xf8] sm:$0xff]
      %v833 = vld [vmem:[%s1 + $0x100] sm:$0xff]
      %v834 = vld [vmem:[%s1 + $0x108] sm:$0xff]
      %v835 = vld [vmem:[%s1 + $0x110] sm:$0xff]
      %v836 = vld [vmem:[%s1 + $0x118] sm:$0xff]
      %v837 = vld [vmem:[%s1 + $0x120] sm:$0xff]
      %v838 = vld [vmem:[%s1 + $0x128] sm:$0xff]
      %v839 = vld [vmem:[%s1 + $0x130] sm:$0xff]
      %v840 = vld [vmem:[%s1 + $0x138] sm:$0xff]
      %v841 = vld [vmem:[%s1 + $0x140] sm:$0xff]
      %v842 = vld [vmem:[%s1 + $0x148] sm:$0xff]
      %v843 = vld [vmem:[%s1 + $0x150] sm:$0xff]
      %v844 = vld [vmem:[%s1 + $0x158] sm:$0xff]
      %v845 = vld [vmem:[%s1 + $0x160] sm:$0xff]
      %v846 = vld [vmem:[%s1 + $0x168] sm:$0xff]
      %v847 = vld [vmem:[%s1 + $0x170] sm:$0xff]
      %v848 = vld [vmem:[%s1 + $0x178] sm:$0xff]
      %v849 = vld [vmem:[%s1 + $0x180] sm:$0xff]
      %v850 = vld [vmem:[%s1 + $0x188] sm:$0xff]
      %v851 = vld [vmem:[%s1 + $0x190] sm:$0xff]
      %v852 = vld [vmem:[%s1 + $0x198] sm:$0xff]
      %v853 = vld [vmem:[%s1 + $0x1a0] sm:$0xff]
      %v854 = vld [vmem:[%s1 + $0x1a8] sm:$0xff]
      %v855 = vld [vmem:[%s1 + $0x1b0] sm:$0xff]
      %v856 = vld [vmem:[%s1 + $0x1b8] sm:$0xff]
      %v857 = vld [vmem:[%s1 + $0x1c0] sm:$0xff]
      %v858 = vld [vmem:[%s1 + $0x1c8] sm:$0xff]
      %v859 = vld [vmem:[%s1 + $0x1d0] sm:$0xff]
      %v860 = vld [vmem:[%s1 + $0x1d8] sm:$0xff]
      %v861 = vld [vmem:[%s1 + $0x1e0] sm:$0xff]
      %v862 = vld [vmem:[%s1 + $0x1e8] sm:$0xff]
      %v863 = vld [vmem:[%s1 + $0x1f0] sm:$0xff]
      %v864 = vld [vmem:[%s1 + $0x1f8] sm:$0xff]
      %v865 = vld [vmem:[%s1 + $0x200] sm:$0xff]
      %v866 = vld [vmem:[%s1 + $0x208] sm:$0xff]
      %v867 = vld [vmem:[%s1 + $0x210] sm:$0xff]
      %v868 = vld [vmem:[%s1 + $0x218] sm:$0xff]
      %v869 = vld [vmem:[%s1 + $0x220] sm:$0xff]
      %v870 = vld [vmem:[%s1 + $0x228] sm:$0xff]
      %v871 = vld [vmem:[%s1 + $0x230] sm:$0xff]
      %v872 = vld [vmem:[%s1 + $0x238] sm:$0xff]
      %v873 = vld [vmem:[%s1 + $0x240] sm:$0xff]
      %v874 = vld [vmem:[%s1 + $0x248] sm:$0xff]
      %v875 = vld [vmem:[%s1 + $0x250] sm:$0xff]
      %v876 = vld [vmem:[%s1 + $0x258] sm:$0xff]
      %v877 = vld [vmem:[%s1 + $0x260] sm:$0xff]
      %v878 = vld [vmem:[%s1 + $0x268] sm:$0xff]
      %v879 = vld [vmem:[%s1 + $0x270] sm:$0xff]
      %v880 = vld [vmem:[%s1 + $0x278] sm:$0xff]
      %v881 = vld [vmem:[%s2] sm:$0x3]
      %v883 = vlaneseq
      %v884 = vshrl.u32 %v883, 7
      %v885 = vsub.s32 0, %v884
      %v886 = vrot.slane %v881, %v885
      %v887 = vlaneseq
      %v888 = vshrl.u32 %v887, 7
      %v889 = vsub.s32 1, %v888
      %v890 = vrot.slane %v881, %v889
      %v973 = vunpack.c.l.b16 %v801
      %v974 = vunpack.c.h.b16 %v801
      %v975 = vunpack.c.l.b16 %v802
      %v976 = vunpack.c.h.b16 %v802
      %v977 = vunpack.c.l.b16 %v803
      %v978 = vunpack.c.h.b16 %v803
      %v979 = vunpack.c.l.b16 %v804
      %v980 = vunpack.c.h.b16 %v804
      %v981 = vunpack.c.l.b16 %v805
      %v982 = vunpack.c.h.b16 %v805
      %v983 = vunpack.c.l.b16 %v806
      %v984 = vunpack.c.h.b16 %v806
      %v985 = vunpack.c.l.b16 %v807
      %v986 = vunpack.c.h.b16 %v807
      %v987 = vunpack.c.l.b16 %v808
      %v988 = vunpack.c.h.b16 %v808
      %v989 = vunpack.c.l.b16 %v809
      %v990 = vunpack.c.h.b16 %v809
      %v991 = vunpack.c.l.b16 %v810
      %v992 = vunpack.c.h.b16 %v810
      %v993 = vunpack.c.l.b16 %v811
      %v994 = vunpack.c.h.b16 %v811
      %v995 = vunpack.c.l.b16 %v812
      %v996 = vunpack.c.h.b16 %v812
      %v997 = vunpack.c.l.b16 %v813
      %v998 = vunpack.c.h.b16 %v813
      %v999 = vunpack.c.l.b16 %v814
      %v1000 = vunpack.c.h.b16 %v814
      %v1001 = vunpack.c.l.b16 %v815
      %v1002 = vunpack.c.h.b16 %v815
      %v1003 = vunpack.c.l.b16 %v816
      %v1004 = vunpack.c.h.b16 %v816
      %v1005 = vunpack.c.l.b16 %v817
      %v1006 = vunpack.c.h.b16 %v817
      %v1007 = vunpack.c.l.b16 %v818
      %v1008 = vunpack.c.h.b16 %v818
      %v1009 = vunpack.c.l.b16 %v819
      %v1010 = vunpack.c.h.b16 %v819
      %v1011 = vunpack.c.l.b16 %v820
      %v1012 = vunpack.c.h.b16 %v820
      %v1013 = vunpack.c.l.b16 %v821
      %v1014 = vunpack.c.h.b16 %v821
      %v1015 = vunpack.c.l.b16 %v822
      %v1016 = vunpack.c.h.b16 %v822
      %v1017 = vunpack.c.l.b16 %v823
      %v1018 = vunpack.c.h.b16 %v823
      %v1019 = vunpack.c.l.b16 %v824
      %v1020 = vunpack.c.h.b16 %v824
      %v1021 = vunpack.c.l.b16 %v825
      %v1022 = vunpack.c.h.b16 %v825
      %v1023 = vunpack.c.l.b16 %v826
      %v1024 = vunpack.c.h.b16 %v826
      %v1025 = vunpack.c.l.b16 %v827
      %v1026 = vunpack.c.h.b16 %v827
      %v1027 = vunpack.c.l.b16 %v828
      %v1028 = vunpack.c.h.b16 %v828
      %v1029 = vunpack.c.l.b16 %v829
      %v1030 = vunpack.c.h.b16 %v829
      %v1031 = vunpack.c.l.b16 %v830
      %v1032 = vunpack.c.h.b16 %v830
      %v1033 = vunpack.c.l.b16 %v831
      %v1034 = vunpack.c.h.b16 %v831
      %v1035 = vunpack.c.l.b16 %v832
      %v1036 = vunpack.c.h.b16 %v832
      %v1037 = vunpack.c.l.b16 %v833
      %v1038 = vunpack.c.h.b16 %v833
      %v1039 = vunpack.c.l.b16 %v834
      %v1040 = vunpack.c.h.b16 %v834
      %v1041 = vunpack.c.l.b16 %v835
      %v1042 = vunpack.c.h.b16 %v835
      %v1043 = vunpack.c.l.b16 %v836
      %v1044 = vunpack.c.h.b16 %v836
      %v1045 = vunpack.c.l.b16 %v837
      %v1046 = vunpack.c.h.b16 %v837
      %v1047 = vunpack.c.l.b16 %v838
      %v1048 = vunpack.c.h.b16 %v838
      %v1049 = vunpack.c.l.b16 %v839
      %v1050 = vunpack.c.h.b16 %v839
      %v1051 = vunpack.c.l.b16 %v840
      %v1052 = vunpack.c.h.b16 %v840
      %v1053 = vunpack.c.l.b16 %v841
      %v1054 = vunpack.c.h.b16 %v841
      %v1055 = vunpack.c.l.b16 %v842
      %v1056 = vunpack.c.h.b16 %v842
      %v1057 = vunpack.c.l.b16 %v843
      %v1058 = vunpack.c.h.b16 %v843
      %v1059 = vunpack.c.l.b16 %v844
      %v1060 = vunpack.c.h.b16 %v844
      %v1061 = vunpack.c.l.b16 %v845
      %v1062 = vunpack.c.h.b16 %v845
      %v1063 = vunpack.c.l.b16 %v846
      %v1064 = vunpack.c.h.b16 %v846
      %v1065 = vunpack.c.l.b16 %v847
      %v1066 = vunpack.c.h.b16 %v847
      %v1067 = vunpack.c.l.b16 %v848
      %v1068 = vunpack.c.h.b16 %v848
      %v1069 = vunpack.c.l.b16 %v849
      %v1070 = vunpack.c.h.b16 %v849
      %v1071 = vunpack.c.l.b16 %v850
      %v1072 = vunpack.c.h.b16 %v850
      %v1073 = vunpack.c.l.b16 %v851
      %v1074 = vunpack.c.h.b16 %v851
      %v1075 = vunpack.c.l.b16 %v852
      %v1076 = vunpack.c.h.b16 %v852
      %v1077 = vunpack.c.l.b16 %v853
      %v1078 = vunpack.c.h.b16 %v853
      %v1079 = vunpack.c.l.b16 %v854
      %v1080 = vunpack.c.h.b16 %v854
      %v1081 = vunpack.c.l.b16 %v855
      %v1082 = vunpack.c.h.b16 %v855
      %v1083 = vunpack.c.l.b16 %v856
      %v1084 = vunpack.c.h.b16 %v856
      %v1085 = vunpack.c.l.b16 %v857
      %v1086 = vunpack.c.h.b16 %v857
      %v1087 = vunpack.c.l.b16 %v858
      %v1088 = vunpack.c.h.b16 %v858
      %v1089 = vunpack.c.l.b16 %v859
      %v1090 = vunpack.c.h.b16 %v859
      %v1091 = vunpack.c.l.b16 %v860
      %v1092 = vunpack.c.h.b16 %v860
      %v1093 = vunpack.c.l.b16 %v861
      %v1094 = vunpack.c.h.b16 %v861
      %v1095 = vunpack.c.l.b16 %v862
      %v1096 = vunpack.c.h.b16 %v862
      %v1097 = vunpack.c.l.b16 %v863
      %v1098 = vunpack.c.h.b16 %v863
      %v1099 = vunpack.c.l.b16 %v864
      %v1100 = vunpack.c.h.b16 %v864
      %v1101 = vunpack.c.l.b16 %v865
      %v1102 = vunpack.c.h.b16 %v865
      %v1103 = vunpack.c.l.b16 %v866
      %v1104 = vunpack.c.h.b16 %v866
      %v1105 = vunpack.c.l.b16 %v867
      %v1106 = vunpack.c.h.b16 %v867
      %v1107 = vunpack.c.l.b16 %v868
      %v1108 = vunpack.c.h.b16 %v868
      %v1109 = vunpack.c.l.b16 %v869
      %v1110 = vunpack.c.h.b16 %v869
      %v1111 = vunpack.c.l.b16 %v870
      %v1112 = vunpack.c.h.b16 %v870
      %v1113 = vunpack.c.l.b16 %v871
      %v1114 = vunpack.c.h.b16 %v871
      %v1115 = vunpack.c.l.b16 %v872
      %v1116 = vunpack.c.h.b16 %v872
      %v1117 = vunpack.c.l.b16 %v873
      %v1118 = vunpack.c.h.b16 %v873
      %v1119 = vunpack.c.l.b16 %v874
      %v1120 = vunpack.c.h.b16 %v874
      %v1121 = vunpack.c.l.b16 %v875
      %v1122 = vunpack.c.h.b16 %v875
      %v1123 = vunpack.c.l.b16 %v876
      %v1124 = vunpack.c.h.b16 %v876
      %v1125 = vunpack.c.l.b16 %v877
      %v1126 = vunpack.c.h.b16 %v877
      %v1127 = vunpack.c.l.b16 %v878
      %v1128 = vunpack.c.h.b16 %v878
      %v1129 = vunpack.c.l.b16 %v879
      %v1130 = vunpack.c.h.b16 %v879
      %v1131 = vunpack.c.l.b16 %v880
      %v1132 = vunpack.c.h.b16 %v880
      %v1133 = vpack.c.b16 %v975, %v973
      %v1134 = vpack.c.b16 %v976, %v974
      %v1135 = vpack.c.b16 %v979, %v977
      %v1136 = vpack.c.b16 %v980, %v978
      %v1137 = vpack.c.b16 %v983, %v981
      %v1138 = vpack.c.b16 %v984, %v982
      %v1139 = vpack.c.b16 %v987, %v985
      %v1140 = vpack.c.b16 %v988, %v986
      %v1141 = vpack.c.b16 %v991, %v989
      %v1142 = vpack.c.b16 %v992, %v990
      %v1143 = vpack.c.b16 %v995, %v993
      %v1144 = vpack.c.b16 %v996, %v994
      %v1145 = vpack.c.b16 %v999, %v997
      %v1146 = vpack.c.b16 %v1000, %v998
      %v1147 = vpack.c.b16 %v1003, %v1001
      %v1148 = vpack.c.b16 %v1004, %v1002
      %v1149 = vpack.c.b16 %v1007, %v1005
      %v1150 = vpack.c.b16 %v1008, %v1006
      %v1151 = vpack.c.b16 %v1011, %v1009
      %v1152 = vpack.c.b16 %v1012, %v1010
      %v1153 = vpack.c.b16 %v1015, %v1013
      %v1154 = vpack.c.b16 %v1016, %v1014
      %v1155 = vpack.c.b16 %v1019, %v1017
      %v1156 = vpack.c.b16 %v1020, %v1018
      %v1157 = vpack.c.b16 %v1023, %v1021
      %v1158 = vpack.c.b16 %v1024, %v1022
      %v1159 = vpack.c.b16 %v1027, %v1025
      %v1160 = vpack.c.b16 %v1028, %v1026
      %v1161 = vpack.c.b16 %v1031, %v1029
      %v1162 = vpack.c.b16 %v1032, %v1030
      %v1163 = vpack.c.b16 %v1035, %v1033
      %v1164 = vpack.c.b16 %v1036, %v1034
      %v1165 = vpack.c.b16 %v1039, %v1037
      %v1166 = vpack.c.b16 %v1040, %v1038
      %v1167 = vpack.c.b16 %v1043, %v1041
      %v1168 = vpack.c.b16 %v1044, %v1042
      %v1169 = vpack.c.b16 %v1047, %v1045
      %v1170 = vpack.c.b16 %v1048, %v1046
      %v1171 = vpack.c.b16 %v1051, %v1049
      %v1172 = vpack.c.b16 %v1052, %v1050
      %v1173 = vpack.c.b16 %v1055, %v1053
      %v1174 = vpack.c.b16 %v1056, %v1054
      %v1175 = vpack.c.b16 %v1059, %v1057
      %v1176 = vpack.c.b16 %v1060, %v1058
      %v1177 = vpack.c.b16 %v1063, %v1061
      %v1178 = vpack.c.b16 %v1064, %v1062
      %v1179 = vpack.c.b16 %v1067, %v1065
      %v1180 = vpack.c.b16 %v1068, %v1066
      %v1181 = vpack.c.b16 %v1071, %v1069
      %v1182 = vpack.c.b16 %v1072, %v1070
      %v1183 = vpack.c.b16 %v1075, %v1073
      %v1184 = vpack.c.b16 %v1076, %v1074
      %v1185 = vpack.c.b16 %v1079, %v1077
      %v1186 = vpack.c.b16 %v1080, %v1078
      %v1187 = vpack.c.b16 %v1083, %v1081
      %v1188 = vpack.c.b16 %v1084, %v1082
      %v1189 = vpack.c.b16 %v1087, %v1085
      %v1190 = vpack.c.b16 %v1088, %v1086
      %v1191 = vpack.c.b16 %v1091, %v1089
      %v1192 = vpack.c.b16 %v1092, %v1090
      %v1193 = vpack.c.b16 %v1095, %v1093
      %v1194 = vpack.c.b16 %v1096, %v1094
      %v1195 = vpack.c.b16 %v1099, %v1097
      %v1196 = vpack.c.b16 %v1100, %v1098
      %v1197 = vpack.c.b16 %v1103, %v1101
      %v1198 = vpack.c.b16 %v1104, %v1102
      %v1199 = vpack.c.b16 %v1107, %v1105
      %v1200 = vpack.c.b16 %v1108, %v1106
      %v1201 = vpack.c.b16 %v1111, %v1109
      %v1202 = vpack.c.b16 %v1112, %v1110
      %v1203 = vpack.c.b16 %v1115, %v1113
      %v1204 = vpack.c.b16 %v1116, %v1114
      %v1205 = vpack.c.b16 %v1119, %v1117
      %v1206 = vpack.c.b16 %v1120, %v1118
      %v1207 = vpack.c.b16 %v1123, %v1121
      %v1208 = vpack.c.b16 %v1124, %v1122
      %v1209 = vpack.c.b16 %v1127, %v1125
      %v1210 = vpack.c.b16 %v1128, %v1126
      %v1211 = vpack.c.b16 %v1131, %v1129
      %v1212 = vpack.c.b16 %v1132, %v1130
      %1293 = vmatprep.subr.bf16.mxu0 %v1134
      %1294 = vmatpush1.bf16.msra.mxu0 %v1133
      %1295 = vmatprep.subr.bf16.mxu0 %v1136
      %1296 = vmatpush1.bf16.msra.mxu0 %v1135
      %1297 = vmatprep.subr.bf16.mxu0 %v1138
      %1298 = vmatpush1.bf16.msra.mxu0 %v1137
      %1299 = vmatprep.subr.bf16.mxu0 %v1140
      %1300 = vmatpush1.bf16.msra.mxu0 %v1139
      %1301 = vmatprep.subr.bf16.mxu0 %v1142
      %1302 = vmatpush1.bf16.msra.mxu0 %v1141
      %1303 = vmatprep.subr.bf16.mxu0 %v1144
      %1304 = vmatpush1.bf16.msra.mxu0 %v1143
      %1305 = vmatprep.subr.bf16.mxu0 %v1146
      %1306 = vmatpush1.bf16.msra.mxu0 %v1145
      %1307 = vmatprep.subr.bf16.mxu0 %v1148
      %1308 = vmatpush1.bf16.msra.mxu0 %v1147
      %1309 = vmatprep.subr.bf16.mxu0 %v1150
      %1310 = vmatpush1.bf16.msra.mxu0 %v1149
      %1311 = vmatprep.subr.bf16.mxu0 %v1152
      %1312 = vmatpush1.bf16.msra.mxu0 %v1151
      %1313 = vmatprep.subr.bf16.mxu0 %v1154
      %1314 = vmatpush1.bf16.msra.mxu0 %v1153
      %1315 = vmatprep.subr.bf16.mxu0 %v1156
      %1316 = vmatpush1.bf16.msra.mxu0 %v1155
      %1317 = vmatprep.subr.bf16.mxu0 %v1158
      %1318 = vmatpush1.bf16.msra.mxu0 %v1157
      %1319 = vmatprep.subr.bf16.mxu0 %v1160
      %1320 = vmatpush1.bf16.msra.mxu0 %v1159
      %1321 = vmatprep.subr.bf16.mxu0 %v1162
      %1322 = vmatpush1.bf16.msra.mxu0 %v1161
      %1323 = vmatprep.subr.bf16.mxu0 %v1164
      %1324 = vmatpush1.bf16.msra.mxu0 %v1163
      %1325 = vmatprep.mubr.bf16.mxu0 %v722
      %1326 = vmatmul.mubr.bf16.gmra.mrb[0].mxu0 %v721
      %v1327 = vpop.f32.mrb[0].mxu0
      %v1328 = vadd.f32 %v886, %v1327
      %v1329 = vpop.f32.mrb[0].mxu0
      %v1330 = vadd.f32 %v890, %v1329
      %v1331 = vpop.f32.mrb[0].mxu0
      %v1332 = vadd.f32 %v886, %v1331
      %v1333 = vpop.f32.mrb[0].mxu0
      %v1334 = vadd.f32 %v890, %v1333
      %1335 = vmatprep.mubr.bf16.mxu0 %v727
      %1336 = vmatmul.mubr.bf16.gmra.mrb[0].mxu0 %v726
      %v1337 = vpop.f32.mrb[0].mxu0
      %v1338 = vadd.f32 %v886, %v1337
      %v1339 = vpop.f32.mrb[0].mxu0
      %v1340 = vadd.f32 %v890, %v1339
      %v1341 = vpop.f32.mrb[0].mxu0
      %v1342 = vadd.f32 %v886, %v1341
      %v1343 = vpop.f32.mrb[0].mxu0
      %v1344 = vadd.f32 %v890, %v1343
      %1345 = vmatprep.mubr.bf16.mxu0 %v732
      %1346 = vmatmul.mubr.bf16.gmra.mrb[0].mxu0 %v731
      %v1347 = vpop.f32.mrb[0].mxu0
      %v1348 = vadd.f32 %v886, %v1347
      %v1349 = vpop.f32.mrb[0].mxu0
      %v1350 = vadd.f32 %v890, %v1349
      %v1351 = vpop.f32.mrb[0].mxu0
      %v1352 = vadd.f32 %v886, %v1351
      %v1353 = vpop.f32.mrb[0].mxu0
      %v1354 = vadd.f32 %v890, %v1353
      %1355 = vmatprep.mubr.bf16.mxu0 %v737
      %1356 = vmatmul.mubr.bf16.gmra.mrb[0].mxu0 %v736
      %v1357 = vpop.f32.mrb[0].mxu0
      %v1358 = vadd.f32 %v886, %v1357
      %v1359 = vpop.f32.mrb[0].mxu0
      %v1360 = vadd.f32 %v890, %v1359
      %v1361 = vpop.f32.mrb[0].mxu0
      %v1362 = vadd.f32 %v886, %v1361
      %v1363 = vpop.f32.mrb[0].mxu0
      %v1364 = vadd.f32 %v890, %v1363
      %1365 = vmatprep.mubr.bf16.mxu0 %v742
      %1366 = vmatmul.mubr.bf16.gmra.mrb[0].mxu0 %v741
      %v1367 = vpop.f32.mrb[0].mxu0
      %v1368 = vadd.f32 %v886, %v1367
      %v1369 = vpop.f32.mrb[0].mxu0
      %v1370 = vadd.f32 %v890, %v1369
      %v1371 = vpop.f32.mrb[0].mxu0
      %v1372 = vadd.f32 %v886, %v1371
      %v1373 = vpop.f32.mrb[0].mxu0
      %v1374 = vadd.f32 %v890, %v1373
      %1375 = vmatprep.mubr.bf16.mxu0 %v747
      %1376 = vmatmul.mubr.bf16.gmra.mrb[0].mxu0 %v746
      %v1377 = vpop.f32.mrb[0].mxu0
      %v1378 = vadd.f32 %v886, %v1377
      %v1379 = vpop.f32.mrb[0].mxu0
      %v1380 = vadd.f32 %v890, %v1379
      %v1381 = vpop.f32.mrb[0].mxu0
      %v1382 = vadd.f32 %v886, %v1381
      %v1383 = vpop.f32.mrb[0].mxu0
      %v1384 = vadd.f32 %v890, %v1383
      %1385 = vmatprep.mubr.bf16.mxu0 %v752
      %1386 = vmatmul.mubr.bf16.gmra.mrb[0].mxu0 %v751
      %v1387 = vpop.f32.mrb[0].mxu0
      %v1388 = vadd.f32 %v886, %v1387
      %v1389 = vpop.f32.mrb[0].mxu0
      %v1390 = vadd.f32 %v890, %v1389
      %v1391 = vpop.f32.mrb[0].mxu0
      %v1392 = vadd.f32 %v886, %v1391
      %v1393 = vpop.f32.mrb[0].mxu0
      %v1394 = vadd.f32 %v890, %v1393
      %1395 = vmatprep.mubr.bf16.mxu0 %v757
      %1396 = vmatmul.mubr.bf16.gmra.mrb[0].mxu0 %v756
      %v1397 = vpop.f32.mrb[0].mxu0
      %v1398 = vadd.f32 %v886, %v1397
      %v1399 = vpop.f32.mrb[0].mxu0
      %v1400 = vadd.f32 %v890, %v1399
      %v1401 = vpop.f32.mrb[0].mxu0
      %v1402 = vadd.f32 %v886, %v1401
      %v1403 = vpop.f32.mrb[0].mxu0
      %v1404 = vadd.f32 %v890, %v1403
      %1405 = vmatprep.mubr.bf16.mxu0 %v762
      %1406 = vmatmul.mubr.bf16.gmra.mrb[0].mxu0 %v761
      %v1407 = vpop.f32.mrb[0].mxu0
      %v1408 = vadd.f32 %v886, %v1407
      %v1409 = vpop.f32.mrb[0].mxu0
      %v1410 = vadd.f32 %v890, %v1409
      %v1411 = vpop.f32.mrb[0].mxu0
      %v1412 = vadd.f32 %v886, %v1411
      %v1413 = vpop.f32.mrb[0].mxu0
      %v1414 = vadd.f32 %v890, %v1413
      %1415 = vmatprep.mubr.bf16.mxu0 %v767
      %1416 = vmatmul.mubr.bf16.gmra.mrb[0].mxu0 %v766
      %v1417 = vpop.f32.mrb[0].mxu0
      %v1418 = vadd.f32 %v886, %v1417
      %v1419 = vpop.f32.mrb[0].mxu0
      %v1420 = vadd.f32 %v890, %v1419
      %v1421 = vpop.f32.mrb[0].mxu0
      %v1422 = vadd.f32 %v886, %v1421
      %v1423 = vpop.f32.mrb[0].mxu0
      %v1424 = vadd.f32 %v890, %v1423
      %1425 = vmatprep.mubr.bf16.mxu0 %v772
      %1426 = vmatmul.mubr.bf16.gmra.mrb[0].mxu0 %v771
      %v1427 = vpop.f32.mrb[0].mxu0
      %v1428 = vadd.f32 %v886, %v1427
      %v1429 = vpop.f32.mrb[0].mxu0
      %v1430 = vadd.f32 %v890, %v1429
      %v1431 = vpop.f32.mrb[0].mxu0
      %v1432 = vadd.f32 %v886, %v1431
      %v1433 = vpop.f32.mrb[0].mxu0
      %v1434 = vadd.f32 %v890, %v1433
      %1435 = vmatprep.mubr.bf16.mxu0 %v777
      %1436 = vmatmul.mubr.bf16.gmra.mrb[0].mxu0 %v776
      %v1437 = vpop.f32.mrb[0].mxu0
      %v1438 = vadd.f32 %v886, %v1437
      %v1439 = vpop.f32.mrb[0].mxu0
      %v1440 = vadd.f32 %v890, %v1439
      %v1441 = vpop.f32.mrb[0].mxu0
      %v1442 = vadd.f32 %v886, %v1441
      %v1443 = vpop.f32.mrb[0].mxu0
      %v1444 = vadd.f32 %v890, %v1443
      %1445 = vmatprep.mubr.bf16.mxu0 %v782
      %1446 = vmatmul.mubr.bf16.gmra.mrb[0].mxu0 %v781
      %v1447 = vpop.f32.mrb[0].mxu0
      %v1448 = vadd.f32 %v886, %v1447
      %v1449 = vpop.f32.mrb[0].mxu0
      %v1450 = vadd.f32 %v890, %v1449
      %v1451 = vpop.f32.mrb[0].mxu0
      %v1452 = vadd.f32 %v886, %v1451
      %v1453 = vpop.f32.mrb[0].mxu0
      %v1454 = vadd.f32 %v890, %v1453
      %1455 = vmatprep.mubr.bf16.mxu0 %v787
      %1456 = vmatmul.mubr.bf16.gmra.mrb[0].mxu0 %v786
      %v1457 = vpop.f32.mrb[0].mxu0
      %v1458 = vadd.f32 %v886, %v1457
      %v1459 = vpop.f32.mrb[0].mxu0
      %v1460 = vadd.f32 %v890, %v1459
      %v1461 = vpop.f32.mrb[0].mxu0
      %v1462 = vadd.f32 %v886, %v1461
      %v1463 = vpop.f32.mrb[0].mxu0
      %v1464 = vadd.f32 %v890, %v1463
      %1465 = vmatprep.mubr.bf16.mxu0 %v792
      %1466 = vmatmul.mubr.bf16.gmra.mrb[0].mxu0 %v791
      %v1467 = vpop.f32.mrb[0].mxu0
      %v1468 = vadd.f32 %v886, %v1467
      %v1469 = vpop.f32.mrb[0].mxu0
      %v1470 = vadd.f32 %v890, %v1469
      %v1471 = vpop.f32.mrb[0].mxu0
      %v1472 = vadd.f32 %v886, %v1471
      %v1473 = vpop.f32.mrb[0].mxu0
      %v1474 = vadd.f32 %v890, %v1473
      %1475 = vmatprep.mubr.bf16.mxu0 %v797
      %1476 = vmatmul.mubr.bf16.gmra.mrb[0].mxu0 %v796
      %v1477 = vpop.f32.mrb[0].mxu0
      %v1478 = vadd.f32 %v886, %v1477
      %v1479 = vpop.f32.mrb[0].mxu0
      %v1480 = vadd.f32 %v890, %v1479
      %v1481 = vpop.f32.mrb[0].mxu0
      %v1482 = vadd.f32 %v886, %v1481
      %v1483 = vpop.f32.mrb[0].mxu0
      %v1484 = vadd.f32 %v890, %v1483
      %1485 = vdwg.mxu0
      %1486 = vmatprep.subr.bf16.mxu0 %v1166
      %1487 = vmatpush1.bf16.msra.mxu0 %v1165
      %1488 = vmatprep.subr.bf16.mxu0 %v1168
      %1489 = vmatpush1.bf16.msra.mxu0 %v1167
      %1490 = vmatprep.subr.bf16.mxu0 %v1170
      %1491 = vmatpush1.bf16.msra.mxu0 %v1169
      %1492 = vmatprep.subr.bf16.mxu0 %v1172
      %1493 = vmatpush1.bf16.msra.mxu0 %v1171
      %1494 = vmatprep.subr.bf16.mxu0 %v1174
      %1495 = vmatpush1.bf16.msra.mxu0 %v1173
      %1496 = vmatprep.subr.bf16.mxu0 %v1176
      %1497 = vmatpush1.bf16.msra.mxu0 %v1175
      %1498 = vmatprep.subr.bf16.mxu0 %v1178
      %1499 = vmatpush1.bf16.msra.mxu0 %v1177
      %1500 = vmatprep.subr.bf16.mxu0 %v1180
      %1501 = vmatpush1.bf16.msra.mxu0 %v1179
      %1502 = vmatprep.subr.bf16.mxu0 %v1182
      %1503 = vmatpush1.bf16.msra.mxu0 %v1181
      %1504 = vmatprep.subr.bf16.mxu0 %v1184
      %1505 = vmatpush1.bf16.msra.mxu0 %v1183
      %1506 = vmatprep.subr.bf16.mxu0 %v1186
      %1507 = vmatpush1.bf16.msra.mxu0 %v1185
      %1508 = vmatprep.subr.bf16.mxu0 %v1188
      %1509 = vmatpush1.bf16.msra.mxu0 %v1187
      %1510 = vmatprep.subr.bf16.mxu0 %v1190
      %1511 = vmatpush1.bf16.msra.mxu0 %v1189
      %1512 = vmatprep.subr.bf16.mxu0 %v1192
      %1513 = vmatpush1.bf16.msra.mxu0 %v1191
      %1514 = vmatprep.subr.bf16.mxu0 %v1194
      %1515 = vmatpush1.bf16.msra.mxu0 %v1193
      %1516 = vmatprep.subr.bf16.mxu0 %v1196
      %1517 = vmatpush1.bf16.msra.mxu0 %v1195
      %1518 = vmatprep.mubr.bf16.mxu0 %v724
      %1519 = vmatmul.mubr.bf16.gmra.mrb[0].mxu0 %v723
      %v1520 = vpop.f32.mrb[0].mxu0
      %v1521 = vadd.f32 %v1328, %v1520
      %v1522 = vpop.f32.mrb[0].mxu0
      %v1523 = vadd.f32 %v1330, %v1522
      %v1524 = vpop.f32.mrb[0].mxu0
      %v1525 = vadd.f32 %v1332, %v1524
      %v1526 = vpop.f32.mrb[0].mxu0
      %v1527 = vadd.f32 %v1334, %v1526
      %1528 = vmatprep.mubr.bf16.mxu0 %v729
      %1529 = vmatmul.mubr.bf16.gmra.mrb[0].mxu0 %v728
      %v1530 = vpop.f32.mrb[0].mxu0
      %v1531 = vadd.f32 %v1338, %v1530
      %v1532 = vpop.f32.mrb[0].mxu0
      %v1533 = vadd.f32 %v1340, %v1532
      %v1534 = vpop.f32.mrb[0].mxu0
      %v1535 = vadd.f32 %v1342, %v1534
      %v1536 = vpop.f32.mrb[0].mxu0
      %v1537 = vadd.f32 %v1344, %v1536
      %1538 = vmatprep.mubr.bf16.mxu0 %v734
      %1539 = vmatmul.mubr.bf16.gmra.mrb[0].mxu0 %v733
      %v1540 = vpop.f32.mrb[0].mxu0
      %v1541 = vadd.f32 %v1348, %v1540
      %v1542 = vpop.f32.mrb[0].mxu0
      %v1543 = vadd.f32 %v1350, %v1542
      %v1544 = vpop.f32.mrb[0].mxu0
      %v1545 = vadd.f32 %v1352, %v1544
      %v1546 = vpop.f32.mrb[0].mxu0
      %v1547 = vadd.f32 %v1354, %v1546
      %1548 = vmatprep.mubr.bf16.mxu0 %v739
      %1549 = vmatmul.mubr.bf16.gmra.mrb[0].mxu0 %v738
      %v1550 = vpop.f32.mrb[0].mxu0
      %v1551 = vadd.f32 %v1358, %v1550
      %v1552 = vpop.f32.mrb[0].mxu0
      %v1553 = vadd.f32 %v1360, %v1552
      %v1554 = vpop.f32.mrb[0].mxu0
      %v1555 = vadd.f32 %v1362, %v1554
      %v1556 = vpop.f32.mrb[0].mxu0
      %v1557 = vadd.f32 %v1364, %v1556
      %1558 = vmatprep.mubr.bf16.mxu0 %v744
      %1559 = vmatmul.mubr.bf16.gmra.mrb[0].mxu0 %v743
      %v1560 = vpop.f32.mrb[0].mxu0
      %v1561 = vadd.f32 %v1368, %v1560
      %v1562 = vpop.f32.mrb[0].mxu0
      %v1563 = vadd.f32 %v1370, %v1562
      %v1564 = vpop.f32.mrb[0].mxu0
      %v1565 = vadd.f32 %v1372, %v1564
      %v1566 = vpop.f32.mrb[0].mxu0
      %v1567 = vadd.f32 %v1374, %v1566
      %1568 = vmatprep.mubr.bf16.mxu0 %v749
      %1569 = vmatmul.mubr.bf16.gmra.mrb[0].mxu0 %v748
      %v1570 = vpop.f32.mrb[0].mxu0
      %v1571 = vadd.f32 %v1378, %v1570
      %v1572 = vpop.f32.mrb[0].mxu0
      %v1573 = vadd.f32 %v1380, %v1572
      %v1574 = vpop.f32.mrb[0].mxu0
      %v1575 = vadd.f32 %v1382, %v1574
      %v1576 = vpop.f32.mrb[0].mxu0
      %v1577 = vadd.f32 %v1384, %v1576
      %1578 = vmatprep.mubr.bf16.mxu0 %v754
      %1579 = vmatmul.mubr.bf16.gmra.mrb[0].mxu0 %v753
      %v1580 = vpop.f32.mrb[0].mxu0
      %v1581 = vadd.f32 %v1388, %v1580
      %v1582 = vpop.f32.mrb[0].mxu0
      %v1583 = vadd.f32 %v1390, %v1582
      %v1584 = vpop.f32.mrb[0].mxu0
      %v1585 = vadd.f32 %v1392, %v1584
      %v1586 = vpop.f32.mrb[0].mxu0
      %v1587 = vadd.f32 %v1394, %v1586
      %1588 = vmatprep.mubr.bf16.mxu0 %v759
      %1589 = vmatmul.mubr.bf16.gmra.mrb[0].mxu0 %v758
      %v1590 = vpop.f32.mrb[0].mxu0
      %v1591 = vadd.f32 %v1398, %v1590
      %v1592 = vpop.f32.mrb[0].mxu0
      %v1593 = vadd.f32 %v1400, %v1592
      %v1594 = vpop.f32.mrb[0].mxu0
      %v1595 = vadd.f32 %v1402, %v1594
      %v1596 = vpop.f32.mrb[0].mxu0
      %v1597 = vadd.f32 %v1404, %v1596
      %1598 = vmatprep.mubr.bf16.mxu0 %v764
      %1599 = vmatmul.mubr.bf16.gmra.mrb[0].mxu0 %v763
      %v1600 = vpop.f32.mrb[0].mxu0
      %v1601 = vadd.f32 %v1408, %v1600
      %v1602 = vpop.f32.mrb[0].mxu0
      %v1603 = vadd.f32 %v1410, %v1602
      %v1604 = vpop.f32.mrb[0].mxu0
      %v1605 = vadd.f32 %v1412, %v1604
      %v1606 = vpop.f32.mrb[0].mxu0
      %v1607 = vadd.f32 %v1414, %v1606
      %1608 = vmatprep.mubr.bf16.mxu0 %v769
      %1609 = vmatmul.mubr.bf16.gmra.mrb[0].mxu0 %v768
      %v1610 = vpop.f32.mrb[0].mxu0
      %v1611 = vadd.f32 %v1418, %v1610
      %v1612 = vpop.f32.mrb[0].mxu0
      %v1613 = vadd.f32 %v1420, %v1612
      %v1614 = vpop.f32.mrb[0].mxu0
      %v1615 = vadd.f32 %v1422, %v1614
      %v1616 = vpop.f32.mrb[0].mxu0
      %v1617 = vadd.f32 %v1424, %v1616
      %1618 = vmatprep.mubr.bf16.mxu0 %v774
      %1619 = vmatmul.mubr.bf16.gmra.mrb[0].mxu0 %v773
      %v1620 = vpop.f32.mrb[0].mxu0
      %v1621 = vadd.f32 %v1428, %v1620
      %v1622 = vpop.f32.mrb[0].mxu0
      %v1623 = vadd.f32 %v1430, %v1622
      %v1624 = vpop.f32.mrb[0].mxu0
      %v1625 = vadd.f32 %v1432, %v1624
      %v1626 = vpop.f32.mrb[0].mxu0
      %v1627 = vadd.f32 %v1434, %v1626
      %1628 = vmatprep.mubr.bf16.mxu0 %v779
      %1629 = vmatmul.mubr.bf16.gmra.mrb[0].mxu0 %v778
      %v1630 = vpop.f32.mrb[0].mxu0
      %v1631 = vadd.f32 %v1438, %v1630
      %v1632 = vpop.f32.mrb[0].mxu0
      %v1633 = vadd.f32 %v1440, %v1632
      %v1634 = vpop.f32.mrb[0].mxu0
      %v1635 = vadd.f32 %v1442, %v1634
      %v1636 = vpop.f32.mrb[0].mxu0
      %v1637 = vadd.f32 %v1444, %v1636
      %1638 = vmatprep.mubr.bf16.mxu0 %v784
      %1639 = vmatmul.mubr.bf16.gmra.mrb[0].mxu0 %v783
      %v1640 = vpop.f32.mrb[0].mxu0
      %v1641 = vadd.f32 %v1448, %v1640
      %v1642 = vpop.f32.mrb[0].mxu0
      %v1643 = vadd.f32 %v1450, %v1642
      %v1644 = vpop.f32.mrb[0].mxu0
      %v1645 = vadd.f32 %v1452, %v1644
      %v1646 = vpop.f32.mrb[0].mxu0
      %v1647 = vadd.f32 %v1454, %v1646
      %1648 = vmatprep.mubr.bf16.mxu0 %v789
      %1649 = vmatmul.mubr.bf16.gmra.mrb[0].mxu0 %v788
      %v1650 = vpop.f32.mrb[0].mxu0
      %v1651 = vadd.f32 %v1458, %v1650
      %v1652 = vpop.f32.mrb[0].mxu0
      %v1653 = vadd.f32 %v1460, %v1652
      %v1654 = vpop.f32.mrb[0].mxu0
      %v1655 = vadd.f32 %v1462, %v1654
      %v1656 = vpop.f32.mrb[0].mxu0
      %v1657 = vadd.f32 %v1464, %v1656
      %1658 = vmatprep.mubr.bf16.mxu0 %v794
      %1659 = vmatmul.mubr.bf16.gmra.mrb[0].mxu0 %v793
      %v1660 = vpop.f32.mrb[0].mxu0
      %v1661 = vadd.f32 %v1468, %v1660
      %v1662 = vpop.f32.mrb[0].mxu0
      %v1663 = vadd.f32 %v1470, %v1662
      %v1664 = vpop.f32.mrb[0].mxu0
      %v1665 = vadd.f32 %v1472, %v1664
      %v1666 = vpop.f32.mrb[0].mxu0
      %v1667 = vadd.f32 %v1474, %v1666
      %1668 = vmatprep.mubr.bf16.mxu0 %v799
      %1669 = vmatmul.mubr.bf16.gmra.mrb[0].mxu0 %v798
      %v1670 = vpop.f32.mrb[0].mxu0
      %v1671 = vadd.f32 %v1478, %v1670
      %v1672 = vpop.f32.mrb[0].mxu0
      %v1673 = vadd.f32 %v1480, %v1672
      %v1674 = vpop.f32.mrb[0].mxu0
      %v1675 = vadd.f32 %v1482, %v1674
      %v1676 = vpop.f32.mrb[0].mxu0
      %v1677 = vadd.f32 %v1484, %v1676
      %1678 = vdwg.mxu0
      %1679 = vmatprep.subr.bf16.mxu0 %v1198
      %1680 = vmatpush1.bf16.msra.mxu0 %v1197
      %1681 = vmatprep.subr.bf16.mxu0 %v1200
      %1682 = vmatpush1.bf16.msra.mxu0 %v1199
      %1683 = vmatprep.subr.bf16.mxu0 %v1202
      %1684 = vmatpush1.bf16.msra.mxu0 %v1201
      %1685 = vmatprep.subr.bf16.mxu0 %v1204
      %1686 = vmatpush1.bf16.msra.mxu0 %v1203
      %1687 = vmatprep.subr.bf16.mxu0 %v1206
      %1688 = vmatpush1.bf16.msra.mxu0 %v1205
      %1689 = vmatprep.subr.bf16.mxu0 %v1208
      %1690 = vmatpush1.bf16.msra.mxu0 %v1207
      %1691 = vmatprep.subr.bf16.mxu0 %v1210
      %1692 = vmatpush1.bf16.msra.mxu0 %v1209
      %1693 = vmatprep.subr.bf16.mxu0 %v1212
      %1694 = vmatpush1.bf16.msra.mxu0 %v1211
      %1695 = vmatprep.subr.bf16.mxu0 0
      %1696 = vmatpush1.bf16.msra.mxu0 0
      %1697 = vmatprep.subr.bf16.mxu0 0
      %1698 = vmatpush1.bf16.msra.mxu0 0
      %1699 = vmatprep.subr.bf16.mxu0 0
      %1700 = vmatpush1.bf16.msra.mxu0 0
      %1701 = vmatprep.subr.bf16.mxu0 0
      %1702 = vmatpush1.bf16.msra.mxu0 0
      %1703 = vmatprep.subr.bf16.mxu0 0
      %1704 = vmatpush1.bf16.msra.mxu0 0
      %1705 = vmatprep.subr.bf16.mxu0 0
      %1706 = vmatpush1.bf16.msra.mxu0 0
      %1707 = vmatprep.subr.bf16.mxu0 0
      %1708 = vmatpush1.bf16.msra.mxu0 0
      %1709 = vmatprep.subr.bf16.mxu0 0
      %1710 = vmatpush1.bf16.msra.mxu0 0
      %1711 = vmatprep.mubr.bf16.mxu0 0
      %1712 = vmatmul.mubr.bf16.gmra.mrb[0].mxu0 %v725
      %v1713 = vpop.f32.mrb[0].mxu0
      %v1714 = vadd.f32 %v1521, %v1713
      %v1715 = vpop.f32.mrb[0].mxu0
      %v1716 = vadd.f32 %v1523, %v1715
      %v1717 = vpop.f32.mrb[0].mxu0
      %v1718 = vadd.f32 %v1525, %v1717
      %v1719 = vpop.f32.mrb[0].mxu0
      %v1720 = vadd.f32 %v1527, %v1719
      %1721 = vmatprep.mubr.bf16.mxu0 0
      %1722 = vmatmul.mubr.bf16.gmra.mrb[0].mxu0 %v730
      %v1723 = vpop.f32.mrb[0].mxu0
      %v1724 = vadd.f32 %v1531, %v1723
      %v1725 = vpop.f32.mrb[0].mxu0
      %v1726 = vadd.f32 %v1533, %v1725
      %v1727 = vpop.f32.mrb[0].mxu0
      %v1728 = vadd.f32 %v1535, %v1727
      %v1729 = vpop.f32.mrb[0].mxu0
      %v1730 = vadd.f32 %v1537, %v1729
      %1731 = vmatprep.mubr.bf16.mxu0 0
      %1732 = vmatmul.mubr.bf16.gmra.mrb[0].mxu0 %v735
      %v1733 = vpop.f32.mrb[0].mxu0
      %v1734 = vadd.f32 %v1541, %v1733
      %v1735 = vpop.f32.mrb[0].mxu0
      %v1736 = vadd.f32 %v1543, %v1735
      %v1737 = vpop.f32.mrb[0].mxu0
      %v1738 = vadd.f32 %v1545, %v1737
      %v1739 = vpop.f32.mrb[0].mxu0
      %v1740 = vadd.f32 %v1547, %v1739
      %1741 = vmatprep.mubr.bf16.mxu0 0
      %1742 = vmatmul.mubr.bf16.gmra.mrb[0].mxu0 %v740
      %v1743 = vpop.f32.mrb[0].mxu0
      %v1744 = vadd.f32 %v1551, %v1743
      %v1745 = vpop.f32.mrb[0].mxu0
      %v1746 = vadd.f32 %v1553, %v1745
      %v1747 = vpop.f32.mrb[0].mxu0
      %v1748 = vadd.f32 %v1555, %v1747
      %v1749 = vpop.f32.mrb[0].mxu0
      %v1750 = vadd.f32 %v1557, %v1749
      %1751 = vmatprep.mubr.bf16.mxu0 0
      %1752 = vmatmul.mubr.bf16.gmra.mrb[0].mxu0 %v745
      %v1753 = vpop.f32.mrb[0].mxu0
      %v1754 = vadd.f32 %v1561, %v1753
      %v1755 = vpop.f32.mrb[0].mxu0
      %v1756 = vadd.f32 %v1563, %v1755
      %v1757 = vpop.f32.mrb[0].mxu0
      %v1758 = vadd.f32 %v1565, %v1757
      %v1759 = vpop.f32.mrb[0].mxu0
      %v1760 = vadd.f32 %v1567, %v1759
      %1761 = vmatprep.mubr.bf16.mxu0 0
      %1762 = vmatmul.mubr.bf16.gmra.mrb[0].mxu0 %v750
      %v1763 = vpop.f32.mrb[0].mxu0
      %v1764 = vadd.f32 %v1571, %v1763
      %v1765 = vpop.f32.mrb[0].mxu0
      %v1766 = vadd.f32 %v1573, %v1765
      %v1767 = vpop.f32.mrb[0].mxu0
      %v1768 = vadd.f32 %v1575, %v1767
      %v1769 = vpop.f32.mrb[0].mxu0
      %v1770 = vadd.f32 %v1577, %v1769
      %1771 = vmatprep.mubr.bf16.mxu0 0
      %1772 = vmatmul.mubr.bf16.gmra.mrb[0].mxu0 %v755
      %v1773 = vpop.f32.mrb[0].mxu0
      %v1774 = vadd.f32 %v1581, %v1773
      %v1775 = vpop.f32.mrb[0].mxu0
      %v1776 = vadd.f32 %v1583, %v1775
      %v1777 = vpop.f32.mrb[0].mxu0
      %v1778 = vadd.f32 %v1585, %v1777
      %v1779 = vpop.f32.mrb[0].mxu0
      %v1780 = vadd.f32 %v1587, %v1779
      %1781 = vmatprep.mubr.bf16.mxu0 0
      %1782 = vmatmul.mubr.bf16.gmra.mrb[0].mxu0 %v760
      %v1783 = vpop.f32.mrb[0].mxu0
      %v1784 = vadd.f32 %v1591, %v1783
      %v1785 = vpop.f32.mrb[0].mxu0
      %v1786 = vadd.f32 %v1593, %v1785
      %v1787 = vpop.f32.mrb[0].mxu0
      %v1788 = vadd.f32 %v1595, %v1787
      %v1789 = vpop.f32.mrb[0].mxu0
      %v1790 = vadd.f32 %v1597, %v1789
      %1791 = vmatprep.mubr.bf16.mxu0 0
      %1792 = vmatmul.mubr.bf16.gmra.mrb[0].mxu0 %v765
      %v1793 = vpop.f32.mrb[0].mxu0
      %v1794 = vadd.f32 %v1601, %v1793
      %v1795 = vpop.f32.mrb[0].mxu0
      %v1796 = vadd.f32 %v1603, %v1795
      %v1797 = vpop.f32.mrb[0].mxu0
      %v1798 = vadd.f32 %v1605, %v1797
      %v1799 = vpop.f32.mrb[0].mxu0
      %v1800 = vadd.f32 %v1607, %v1799
      %1801 = vmatprep.mubr.bf16.mxu0 0
      %1802 = vmatmul.mubr.bf16.gmra.mrb[0].mxu0 %v770
      %v1803 = vpop.f32.mrb[0].mxu0
      %v1804 = vadd.f32 %v1611, %v1803
      %v1805 = vpop.f32.mrb[0].mxu0
      %v1806 = vadd.f32 %v1613, %v1805
      %v1807 = vpop.f32.mrb[0].mxu0
      %v1808 = vadd.f32 %v1615, %v1807
      %v1809 = vpop.f32.mrb[0].mxu0
      %v1810 = vadd.f32 %v1617, %v1809
      %1811 = vmatprep.mubr.bf16.mxu0 0
      %1812 = vmatmul.mubr.bf16.gmra.mrb[0].mxu0 %v775
      %v1813 = vpop.f32.mrb[0].mxu0
      %v1814 = vadd.f32 %v1621, %v1813
      %v1815 = vpop.f32.mrb[0].mxu0
      %v1816 = vadd.f32 %v1623, %v1815
      %v1817 = vpop.f32.mrb[0].mxu0
      %v1818 = vadd.f32 %v1625, %v1817
      %v1819 = vpop.f32.mrb[0].mxu0
      %v1820 = vadd.f32 %v1627, %v1819
      %1821 = vmatprep.mubr.bf16.mxu0 0
      %1822 = vmatmul.mubr.bf16.gmra.mrb[0].mxu0 %v780
      %v1823 = vpop.f32.mrb[0].mxu0
      %v1824 = vadd.f32 %v1631, %v1823
      %v1825 = vpop.f32.mrb[0].mxu0
      %v1826 = vadd.f32 %v1633, %v1825
      %v1827 = vpop.f32.mrb[0].mxu0
      %v1828 = vadd.f32 %v1635, %v1827
      %v1829 = vpop.f32.mrb[0].mxu0
      %v1830 = vadd.f32 %v1637, %v1829
      %1831 = vmatprep.mubr.bf16.mxu0 0
      %1832 = vmatmul.mubr.bf16.gmra.mrb[0].mxu0 %v785
      %v1833 = vpop.f32.mrb[0].mxu0
      %v1834 = vadd.f32 %v1641, %v1833
      %v1835 = vpop.f32.mrb[0].mxu0
      %v1836 = vadd.f32 %v1643, %v1835
      %v1837 = vpop.f32.mrb[0].mxu0
      %v1838 = vadd.f32 %v1645, %v1837
      %v1839 = vpop.f32.mrb[0].mxu0
      %v1840 = vadd.f32 %v1647, %v1839
      %1841 = vmatprep.mubr.bf16.mxu0 0
      %1842 = vmatmul.mubr.bf16.gmra.mrb[0].mxu0 %v790
      %v1843 = vpop.f32.mrb[0].mxu0
      %v1844 = vadd.f32 %v1651, %v1843
      %v1845 = vpop.f32.mrb[0].mxu0
      %v1846 = vadd.f32 %v1653, %v1845
      %v1847 = vpop.f32.mrb[0].mxu0
      %v1848 = vadd.f32 %v1655, %v1847
      %v1849 = vpop.f32.mrb[0].mxu0
      %v1850 = vadd.f32 %v1657, %v1849
      %1851 = vmatprep.mubr.bf16.mxu0 0
      %1852 = vmatmul.mubr.bf16.gmra.mrb[0].mxu0 %v795
      %v1853 = vpop.f32.mrb[0].mxu0
      %v1854 = vadd.f32 %v1661, %v1853
      %v1855 = vpop.f32.mrb[0].mxu0
      %v1856 = vadd.f32 %v1663, %v1855
      %v1857 = vpop.f32.mrb[0].mxu0
      %v1858 = vadd.f32 %v1665, %v1857
      %v1859 = vpop.f32.mrb[0].mxu0
      %v1860 = vadd.f32 %v1667, %v1859
      %1861 = vmatprep.mubr.bf16.mxu0 0
      %1862 = vmatmul.mubr.bf16.gmra.mrb[0].mxu0 %v800
      %v1863 = vpop.f32.mrb[0].mxu0
      %v1864 = vadd.f32 %v1671, %v1863
      %v1865 = vpop.f32.mrb[0].mxu0
      %v1866 = vadd.f32 %v1673, %v1865
      %v1867 = vpop.f32.mrb[0].mxu0
      %v1868 = vadd.f32 %v1675, %v1867
      %v1869 = vpop.f32.mrb[0].mxu0
      %v1870 = vadd.f32 %v1677, %v1869
      %1871 = vdwg.mxu0
      %v1872 = vmax.f32 %v1714, 0.0
      %v1873 = vmax.f32 %v1716, 0.0
      %v1874 = vmax.f32 %v1718, 0.0
      %v1875 = vmax.f32 %v1720, 0.0
      %v1876 = vmax.f32 %v1724, 0.0
      %v1877 = vmax.f32 %v1726, 0.0
      %v1878 = vmax.f32 %v1728, 0.0
      %v1879 = vmax.f32 %v1730, 0.0
      %v1880 = vmax.f32 %v1734, 0.0
      %v1881 = vmax.f32 %v1736, 0.0
      %v1882 = vmax.f32 %v1738, 0.0
      %v1883 = vmax.f32 %v1740, 0.0
      %v1884 = vmax.f32 %v1744, 0.0
      %v1885 = vmax.f32 %v1746, 0.0
      %v1886 = vmax.f32 %v1748, 0.0
      %v1887 = vmax.f32 %v1750, 0.0
      %v1888 = vmax.f32 %v1754, 0.0
      %v1889 = vmax.f32 %v1756, 0.0
      %v1890 = vmax.f32 %v1758, 0.0
      %v1891 = vmax.f32 %v1760, 0.0
      %v1892 = vmax.f32 %v1764, 0.0
      %v1893 = vmax.f32 %v1766, 0.0
      %v1894 = vmax.f32 %v1768, 0.0
      %v1895 = vmax.f32 %v1770, 0.0
      %v1896 = vmax.f32 %v1774, 0.0
      %v1897 = vmax.f32 %v1776, 0.0
      %v1898 = vmax.f32 %v1778, 0.0
      %v1899 = vmax.f32 %v1780, 0.0
      %v1900 = vmax.f32 %v1784, 0.0
      %v1901 = vmax.f32 %v1786, 0.0
      %v1902 = vmax.f32 %v1788, 0.0
      %v1903 = vmax.f32 %v1790, 0.0
      %v1904 = vmax.f32 %v1794, 0.0
      %v1905 = vmax.f32 %v1796, 0.0
      %v1906 = vmax.f32 %v1798, 0.0
      %v1907 = vmax.f32 %v1800, 0.0
      %v1908 = vmax.f32 %v1804, 0.0
      %v1909 = vmax.f32 %v1806, 0.0
      %v1910 = vmax.f32 %v1808, 0.0
      %v1911 = vmax.f32 %v1810, 0.0
      %v1912 = vmax.f32 %v1814, 0.0
      %v1913 = vmax.f32 %v1816, 0.0
      %v1914 = vmax.f32 %v1818, 0.0
      %v1915 = vmax.f32 %v1820, 0.0
      %v1916 = vmax.f32 %v1824, 0.0
      %v1917 = vmax.f32 %v1826, 0.0
      %v1918 = vmax.f32 %v1828, 0.0
      %v1919 = vmax.f32 %v1830, 0.0
      %v1920 = vmax.f32 %v1834, 0.0
      %v1921 = vmax.f32 %v1836, 0.0
      %v1922 = vmax.f32 %v1838, 0.0
      %v1923 = vmax.f32 %v1840, 0.0
      %v1924 = vmax.f32 %v1844, 0.0
      %v1925 = vmax.f32 %v1846, 0.0
      %v1926 = vmax.f32 %v1848, 0.0
      %v1927 = vmax.f32 %v1850, 0.0
      %v1928 = vmax.f32 %v1854, 0.0
      %v1929 = vmax.f32 %v1856, 0.0
      %v1930 = vmax.f32 %v1858, 0.0
      %v1931 = vmax.f32 %v1860, 0.0
      %v1932 = vmax.f32 %v1864, 0.0
      %v1933 = vmax.f32 %v1866, 0.0
      %v1934 = vmax.f32 %v1868, 0.0
      %v1935 = vmax.f32 %v1870, 0.0
      %v1936 = vpack.c.bf16 %v1874, %v1872
      %v1937 = vpack.c.bf16 %v1875, %v1873
      %v1938 = vpack.c.bf16 %v1878, %v1876
      %v1939 = vpack.c.bf16 %v1879, %v1877
      %v1940 = vpack.c.bf16 %v1882, %v1880
      %v1941 = vpack.c.bf16 %v1883, %v1881
      %v1942 = vpack.c.bf16 %v1886, %v1884
      %v1943 = vpack.c.bf16 %v1887, %v1885
      %v1944 = vpack.c.bf16 %v1890, %v1888
      %v1945 = vpack.c.bf16 %v1891, %v1889
      %v1946 = vpack.c.bf16 %v1894, %v1892
      %v1947 = vpack.c.bf16 %v1895, %v1893
      %v1948 = vpack.c.bf16 %v1898, %v1896
      %v1949 = vpack.c.bf16 %v1899, %v1897
      %v1950 = vpack.c.bf16 %v1902, %v1900
      %v1951 = vpack.c.bf16 %v1903, %v1901
      %v1952 = vpack.c.bf16 %v1906, %v1904
      %v1953 = vpack.c.bf16 %v1907, %v1905
      %v1954 = vpack.c.bf16 %v1910, %v1908
      %v1955 = vpack.c.bf16 %v1911, %v1909
      %v1956 = vpack.c.bf16 %v1914, %v1912
      %v1957 = vpack.c.bf16 %v1915, %v1913
      %v1958 = vpack.c.bf16 %v1918, %v1916
      %v1959 = vpack.c.bf16 %v1919, %v1917
      %v1960 = vpack.c.bf16 %v1922, %v1920
      %v1961 = vpack.c.bf16 %v1923, %v1921
      %v1962 = vpack.c.bf16 %v1926, %v1924
      %v1963 = vpack.c.bf16 %v1927, %v1925
      %v1964 = vpack.c.bf16 %v1930, %v1928
      %v1965 = vpack.c.bf16 %v1931, %v1929
      %v1966 = vpack.c.bf16 %v1934, %v1932
      %v1967 = vpack.c.bf16 %v1935, %v1933
      %v1968 = vld [vmem:[%s3] sm:$0xf]
      %v1969 = vld [vmem:[%s3 + $0x4] sm:$0xf]
      %v1970 = vld [vmem:[%s3 + $0x8] sm:$0xf]
      %v1971 = vld [vmem:[%s3 + $0xc] sm:$0xf]
      %v1972 = vld [vmem:[%s3 + $0x10] sm:$0xf]
      %v1973 = vld [vmem:[%s3 + $0x14] sm:$0xf]
      %v1974 = vld [vmem:[%s3 + $0x18] sm:$0xf]
      %v1975 = vld [vmem:[%s3 + $0x1c] sm:$0xf]
      %v1976 = vld [vmem:[%s3 + $0x20] sm:$0xf]
      %v1977 = vld [vmem:[%s3 + $0x24] sm:$0xf]
      %v1978 = vld [vmem:[%s3 + $0x28] sm:$0xf]
      %v1979 = vld [vmem:[%s3 + $0x2c] sm:$0xf]
      %v1980 = vld [vmem:[%s3 + $0x30] sm:$0xf]
      %v1981 = vld [vmem:[%s3 + $0x34] sm:$0xf]
      %v1982 = vld [vmem:[%s3 + $0x38] sm:$0xf]
      %v1983 = vld [vmem:[%s3 + $0x3c] sm:$0xf]
      %v1984 = vld [vmem:[%s3 + $0x40] sm:$0xf]
      %v1985 = vld [vmem:[%s3 + $0x44] sm:$0xf]
      %v1986 = vld [vmem:[%s3 + $0x48] sm:$0xf]
      %v1987 = vld [vmem:[%s3 + $0x4c] sm:$0xf]
      %v1988 = vld [vmem:[%s3 + $0x50] sm:$0xf]
      %v2010 = vunpack.c.l.b16 %v1968
      %v2011 = vunpack.c.l.b16 %v1969
      %v2012 = vunpack.c.l.b16 %v1970
      %v2013 = vunpack.c.l.b16 %v1971
      %v2014 = vunpack.c.l.b16 %v1972
      %v2015 = vunpack.c.l.b16 %v1973
      %v2016 = vunpack.c.l.b16 %v1974
      %v2017 = vunpack.c.l.b16 %v1975
      %v2018 = vunpack.c.l.b16 %v1976
      %v2019 = vunpack.c.l.b16 %v1977
      %v2020 = vunpack.c.l.b16 %v1978
      %v2021 = vunpack.c.l.b16 %v1979
      %v2022 = vunpack.c.l.b16 %v1980
      %v2023 = vunpack.c.l.b16 %v1981
      %v2024 = vunpack.c.l.b16 %v1982
      %v2025 = vunpack.c.l.b16 %v1983
      %v2026 = vunpack.c.l.b16 %v1984
      %v2027 = vunpack.c.l.b16 %v1985
      %v2028 = vunpack.c.l.b16 %v1986
      %v2029 = vunpack.c.l.b16 %v1987
      %v2030 = vunpack.c.l.b16 %v1988
      %v2031 = vpack.c.b16 %v2011, %v2010
      %v2032 = vpack.c.b16 %v2013, %v2012
      %v2033 = vpack.c.b16 %v2015, %v2014
      %v2034 = vpack.c.b16 %v2017, %v2016
      %v2035 = vpack.c.b16 %v2019, %v2018
      %v2036 = vpack.c.b16 %v2021, %v2020
      %v2037 = vpack.c.b16 %v2023, %v2022
      %v2038 = vpack.c.b16 %v2025, %v2024
      %v2039 = vpack.c.b16 %v2027, %v2026
      %v2040 = vpack.c.b16 %v2029, %v2028
      %v2041 = vpack.c.b16 %v2030, %v2030
      %vm2052 = vcmask 326656
      %v2054 = vsel %vm2052, %v1937, 0
      %v2057 = vsel %vm2052, %v1939, 0
      %v2060 = vsel %vm2052, %v1941, 0
      %v2063 = vsel %vm2052, %v1943, 0
      %v2066 = vsel %vm2052, %v1945, 0
      %v2069 = vsel %vm2052, %v1947, 0
      %v2072 = vsel %vm2052, %v1949, 0
      %v2075 = vsel %vm2052, %v1951, 0
      %v2078 = vsel %vm2052, %v1953, 0
      %v2081 = vsel %vm2052, %v1955, 0
      %v2084 = vsel %vm2052, %v1957, 0
      %v2087 = vsel %vm2052, %v1959, 0
      %v2090 = vsel %vm2052, %v1961, 0
      %v2093 = vsel %vm2052, %v1963, 0
      %v2096 = vsel %vm2052, %v1965, 0
      %v2099 = vsel %vm2052, %v1967, 0
      %vm2101 = vcmask 1043456
      %v2103 = vsel %vm2101, %v2041, 0
      %2105 = vmatprep.subr.bf16.mxu0 0
      %2106 = vmatpush1.bf16.msra.mxu0 %v2031
      %2107 = vmatprep.subr.bf16.mxu0 0
      %2108 = vmatpush1.bf16.msra.mxu0 %v2032
      %2109 = vmatprep.subr.bf16.mxu0 0
      %2110 = vmatpush1.bf16.msra.mxu0 %v2033
      %2111 = vmatprep.subr.bf16.mxu0 0
      %2112 = vmatpush1.bf16.msra.mxu0 %v2034
      %2113 = vmatprep.subr.bf16.mxu0 0
      %2114 = vmatpush1.bf16.msra.mxu0 %v2035
      %2115 = vmatprep.subr.bf16.mxu0 0
      %2116 = vmatpush1.bf16.msra.mxu0 %v2036
      %2117 = vmatprep.subr.bf16.mxu0 0
      %2118 = vmatpush1.bf16.msra.mxu0 %v2037
      %2119 = vmatprep.subr.bf16.mxu0 0
      %2120 = vmatpush1.bf16.msra.mxu0 %v2038
      %2121 = vmatprep.subr.bf16.mxu0 0
      %2122 = vmatpush1.bf16.msra.mxu0 %v2039
      %2123 = vmatprep.subr.bf16.mxu0 0
      %2124 = vmatpush1.bf16.msra.mxu0 %v2040
      %2125 = vmatprep.subr.bf16.mxu0 0
      %2126 = vmatpush1.bf16.msra.mxu0 %v2103
      %2127 = vmatprep.subr.bf16.mxu0 0
      %2128 = vmatpush1.bf16.msra.mxu0 0
      %2129 = vmatprep.subr.bf16.mxu0 0
      %2130 = vmatpush1.bf16.msra.mxu0 0
      %2131 = vmatprep.subr.bf16.mxu0 0
      %2132 = vmatpush1.bf16.msra.mxu0 0
      %2133 = vmatprep.subr.bf16.mxu0 0
      %2134 = vmatpush1.bf16.msra.mxu0 0
      %2135 = vmatprep.subr.bf16.mxu0 0
      %2136 = vmatpush1.bf16.msra.mxu0 0
      %2137 = vmatprep.mubr.bf16.mxu0 %v2054
      %2138 = vmatmul.mubr.bf16.gmra.mrb[0].mxu0 %v1936
      %v2139 = vpop.f32.mrb[0].mxu0
      %v2140 = vadd.f32 0.0, %v2139
      %v2141 = vpop.f32.mrb[0].mxu0
      %v2142 = vpop.f32.mrb[0].mxu0
      %v2143 = vadd.f32 0.0, %v2142
      %v2144 = vpop.f32.mrb[0].mxu0
      %2145 = vmatprep.mubr.bf16.mxu0 %v2057
      %2146 = vmatmul.mubr.bf16.gmra.mrb[0].mxu0 %v1938
      %v2147 = vpop.f32.mrb[0].mxu0
      %v2148 = vadd.f32 0.0, %v2147
      %v2149 = vpop.f32.mrb[0].mxu0
      %v2150 = vpop.f32.mrb[0].mxu0
      %v2151 = vadd.f32 0.0, %v2150
      %v2152 = vpop.f32.mrb[0].mxu0
      %2153 = vmatprep.mubr.bf16.mxu0 %v2060
      %2154 = vmatmul.mubr.bf16.gmra.mrb[0].mxu0 %v1940
      %v2155 = vpop.f32.mrb[0].mxu0
      %v2156 = vadd.f32 0.0, %v2155
      %v2157 = vpop.f32.mrb[0].mxu0
      %v2158 = vpop.f32.mrb[0].mxu0
      %v2159 = vadd.f32 0.0, %v2158
      %v2160 = vpop.f32.mrb[0].mxu0
      %2161 = vmatprep.mubr.bf16.mxu0 %v2063
      %2162 = vmatmul.mubr.bf16.gmra.mrb[0].mxu0 %v1942
      %v2163 = vpop.f32.mrb[0].mxu0
      %v2164 = vadd.f32 0.0, %v2163
      %v2165 = vpop.f32.mrb[0].mxu0
      %v2166 = vpop.f32.mrb[0].mxu0
      %v2167 = vadd.f32 0.0, %v2166
      %v2168 = vpop.f32.mrb[0].mxu0
      %2169 = vmatprep.mubr.bf16.mxu0 %v2066
      %2170 = vmatmul.mubr.bf16.gmra.mrb[0].mxu0 %v1944
      %v2171 = vpop.f32.mrb[0].mxu0
      %v2172 = vadd.f32 0.0, %v2171
      %v2173 = vpop.f32.mrb[0].mxu0
      %v2174 = vpop.f32.mrb[0].mxu0
      %v2175 = vadd.f32 0.0, %v2174
      %v2176 = vpop.f32.mrb[0].mxu0
      %2177 = vmatprep.mubr.bf16.mxu0 %v2069
      %2178 = vmatmul.mubr.bf16.gmra.mrb[0].mxu0 %v1946
      %v2179 = vpop.f32.mrb[0].mxu0
      %v2180 = vadd.f32 0.0, %v2179
      %v2181 = vpop.f32.mrb[0].mxu0
      %v2182 = vpop.f32.mrb[0].mxu0
      %v2183 = vadd.f32 0.0, %v2182
      %v2184 = vpop.f32.mrb[0].mxu0
      %2185 = vmatprep.mubr.bf16.mxu0 %v2072
      %2186 = vmatmul.mubr.bf16.gmra.mrb[0].mxu0 %v1948
      %v2187 = vpop.f32.mrb[0].mxu0
      %v2188 = vadd.f32 0.0, %v2187
      %v2189 = vpop.f32.mrb[0].mxu0
      %v2190 = vpop.f32.mrb[0].mxu0
      %v2191 = vadd.f32 0.0, %v2190
      %v2192 = vpop.f32.mrb[0].mxu0
      %2193 = vmatprep.mubr.bf16.mxu0 %v2075
      %2194 = vmatmul.mubr.bf16.gmra.mrb[0].mxu0 %v1950
      %v2195 = vpop.f32.mrb[0].mxu0
      %v2196 = vadd.f32 0.0, %v2195
      %v2197 = vpop.f32.mrb[0].mxu0
      %v2198 = vpop.f32.mrb[0].mxu0
      %v2199 = vadd.f32 0.0, %v2198
      %v2200 = vpop.f32.mrb[0].mxu0
      %2201 = vmatprep.mubr.bf16.mxu0 %v2078
      %2202 = vmatmul.mubr.bf16.gmra.mrb[0].mxu0 %v1952
      %v2203 = vpop.f32.mrb[0].mxu0
      %v2204 = vadd.f32 0.0, %v2203
      %v2205 = vpop.f32.mrb[0].mxu0
      %v2206 = vpop.f32.mrb[0].mxu0
      %v2207 = vadd.f32 0.0, %v2206
      %v2208 = vpop.f32.mrb[0].mxu0
      %2209 = vmatprep.mubr.bf16.mxu0 %v2081
      %2210 = vmatmul.mubr.bf16.gmra.mrb[0].mxu0 %v1954
      %v2211 = vpop.f32.mrb[0].mxu0
      %v2212 = vadd.f32 0.0, %v2211
      %v2213 = vpop.f32.mrb[0].mxu0
      %v2214 = vpop.f32.mrb[0].mxu0
      %v2215 = vadd.f32 0.0, %v2214
      %v2216 = vpop.f32.mrb[0].mxu0
      %2217 = vmatprep.mubr.bf16.mxu0 %v2084
      %2218 = vmatmul.mubr.bf16.gmra.mrb[0].mxu0 %v1956
      %v2219 = vpop.f32.mrb[0].mxu0
      %v2220 = vadd.f32 0.0, %v2219
      %v2221 = vpop.f32.mrb[0].mxu0
      %v2222 = vpop.f32.mrb[0].mxu0
      %v2223 = vadd.f32 0.0, %v2222
      %v2224 = vpop.f32.mrb[0].mxu0
      %2225 = vmatprep.mubr.bf16.mxu0 %v2087
      %2226 = vmatmul.mubr.bf16.gmra.mrb[0].mxu0 %v1958
      %v2227 = vpop.f32.mrb[0].mxu0
      %v2228 = vadd.f32 0.0, %v2227
      %v2229 = vpop.f32.mrb[0].mxu0
      %v2230 = vpop.f32.mrb[0].mxu0
      %v2231 = vadd.f32 0.0, %v2230
      %v2232 = vpop.f32.mrb[0].mxu0
      %2233 = vmatprep.mubr.bf16.mxu0 %v2090
      %2234 = vmatmul.mubr.bf16.gmra.mrb[0].mxu0 %v1960
      %v2235 = vpop.f32.mrb[0].mxu0
      %v2236 = vadd.f32 0.0, %v2235
      %v2237 = vpop.f32.mrb[0].mxu0
      %v2238 = vpop.f32.mrb[0].mxu0
      %v2239 = vadd.f32 0.0, %v2238
      %v2240 = vpop.f32.mrb[0].mxu0
      %2241 = vmatprep.mubr.bf16.mxu0 %v2093
      %2242 = vmatmul.mubr.bf16.gmra.mrb[0].mxu0 %v1962
      %v2243 = vpop.f32.mrb[0].mxu0
      %v2244 = vadd.f32 0.0, %v2243
      %v2245 = vpop.f32.mrb[0].mxu0
      %v2246 = vpop.f32.mrb[0].mxu0
      %v2247 = vadd.f32 0.0, %v2246
      %v2248 = vpop.f32.mrb[0].mxu0
      %2249 = vmatprep.mubr.bf16.mxu0 %v2096
      %2250 = vmatmul.mubr.bf16.gmra.mrb[0].mxu0 %v1964
      %v2251 = vpop.f32.mrb[0].mxu0
      %v2252 = vadd.f32 0.0, %v2251
      %v2253 = vpop.f32.mrb[0].mxu0
      %v2254 = vpop.f32.mrb[0].mxu0
      %v2255 = vadd.f32 0.0, %v2254
      %v2256 = vpop.f32.mrb[0].mxu0
      %2257 = vmatprep.mubr.bf16.mxu0 %v2099
      %2258 = vmatmul.mubr.bf16.gmra.mrb[0].mxu0 %v1966
      %v2259 = vpop.f32.mrb[0].mxu0
      %v2260 = vadd.f32 0.0, %v2259
      %v2261 = vpop.f32.mrb[0].mxu0
      %v2262 = vpop.f32.mrb[0].mxu0
      %v2263 = vadd.f32 0.0, %v2262
      %v2264 = vpop.f32.mrb[0].mxu0
      %2265 = vdwg.mxu0
      %v2266 = vld [vmem:[%s4] sm:$0xf]
      %v2267 = vld [vmem:[%s4 + $0x4] sm:$0xf]
      %v2268 = vld [vmem:[%s4 + $0x8] sm:$0xf]
      %v2269 = vld [vmem:[%s4 + $0xc] sm:$0xf]
      %v2270 = vld [vmem:[%s4 + $0x10] sm:$0xf]
      %v2271 = vld [vmem:[%s4 + $0x14] sm:$0xf]
      %v2272 = vld [vmem:[%s4 + $0x18] sm:$0xf]
      %v2273 = vld [vmem:[%s4 + $0x1c] sm:$0xf]
      %v2274 = vld [vmem:[%s4 + $0x20] sm:$0xf]
      %v2275 = vld [vmem:[%s4 + $0x24] sm:$0xf]
      %v2276 = vld [vmem:[%s4 + $0x28] sm:$0xf]
      %v2277 = vld [vmem:[%s4 + $0x2c] sm:$0xf]
      %v2278 = vld [vmem:[%s4 + $0x30] sm:$0xf]
      %v2279 = vld [vmem:[%s4 + $0x34] sm:$0xf]
      %v2280 = vld [vmem:[%s4 + $0x38] sm:$0xf]
      %v2281 = vld [vmem:[%s4 + $0x3c] sm:$0xf]
      %v2282 = vld [vmem:[%s4 + $0x40] sm:$0xf]
      %v2283 = vld [vmem:[%s4 + $0x44] sm:$0xf]
      %v2284 = vld [vmem:[%s4 + $0x48] sm:$0xf]
      %v2285 = vld [vmem:[%s4 + $0x4c] sm:$0xf]
      %v2286 = vld [vmem:[%s4 + $0x50] sm:$0xf]
      %v2308 = vunpack.c.l.b16 %v2266
      %v2309 = vunpack.c.l.b16 %v2267
      %v2310 = vunpack.c.l.b16 %v2268
      %v2311 = vunpack.c.l.b16 %v2269
      %v2312 = vunpack.c.l.b16 %v2270
      %v2313 = vunpack.c.l.b16 %v2271
      %v2314 = vunpack.c.l.b16 %v2272
      %v2315 = vunpack.c.l.b16 %v2273
      %v2316 = vunpack.c.l.b16 %v2274
      %v2317 = vunpack.c.l.b16 %v2275
      %v2318 = vunpack.c.l.b16 %v2276
      %v2319 = vunpack.c.l.b16 %v2277
      %v2320 = vunpack.c.l.b16 %v2278
      %v2321 = vunpack.c.l.b16 %v2279
      %v2322 = vunpack.c.l.b16 %v2280
      %v2323 = vunpack.c.l.b16 %v2281
      %v2324 = vunpack.c.l.b16 %v2282
      %v2325 = vunpack.c.l.b16 %v2283
      %v2326 = vunpack.c.l.b16 %v2284
      %v2327 = vunpack.c.l.b16 %v2285
      %v2328 = vunpack.c.l.b16 %v2286
      %v2329 = vpack.c.b16 %v2309, %v2308
      %v2330 = vpack.c.b16 %v2311, %v2310
      %v2331 = vpack.c.b16 %v2313, %v2312
      %v2332 = vpack.c.b16 %v2315, %v2314
      %v2333 = vpack.c.b16 %v2317, %v2316
      %v2334 = vpack.c.b16 %v2319, %v2318
      %v2335 = vpack.c.b16 %v2321, %v2320
      %v2336 = vpack.c.b16 %v2323, %v2322
      %v2337 = vpack.c.b16 %v2325, %v2324
      %v2338 = vpack.c.b16 %v2327, %v2326
      %v2339 = vpack.c.b16 %v2328, %v2328
      %v2351 = vsel %vm2101, %v2339, 0
      %2353 = vmatprep.subr.bf16.mxu0 0
      %2354 = vmatpush1.bf16.msra.mxu0 %v2329
      %2355 = vmatprep.subr.bf16.mxu0 0
      %2356 = vmatpush1.bf16.msra.mxu0 %v2330
      %2357 = vmatprep.subr.bf16.mxu0 0
      %2358 = vmatpush1.bf16.msra.mxu0 %v2331
      %2359 = vmatprep.subr.bf16.mxu0 0
      %2360 = vmatpush1.bf16.msra.mxu0 %v2332
      %2361 = vmatprep.subr.bf16.mxu0 0
      %2362 = vmatpush1.bf16.msra.mxu0 %v2333
      %2363 = vmatprep.subr.bf16.mxu0 0
      %2364 = vmatpush1.bf16.msra.mxu0 %v2334
      %2365 = vmatprep.subr.bf16.mxu0 0
      %2366 = vmatpush1.bf16.msra.mxu0 %v2335
      %2367 = vmatprep.subr.bf16.mxu0 0
      %2368 = vmatpush1.bf16.msra.mxu0 %v2336
      %2369 = vmatprep.subr.bf16.mxu0 0
      %2370 = vmatpush1.bf16.msra.mxu0 %v2337
      %2371 = vmatprep.subr.bf16.mxu0 0
      %2372 = vmatpush1.bf16.msra.mxu0 %v2338
      %2373 = vmatprep.subr.bf16.mxu0 0
      %2374 = vmatpush1.bf16.msra.mxu0 %v2351
      %2375 = vmatprep.subr.bf16.mxu0 0
      %2376 = vmatpush1.bf16.msra.mxu0 0
      %2377 = vmatprep.subr.bf16.mxu0 0
      %2378 = vmatpush1.bf16.msra.mxu0 0
      %2379 = vmatprep.subr.bf16.mxu0 0
      %2380 = vmatpush1.bf16.msra.mxu0 0
      %2381 = vmatprep.subr.bf16.mxu0 0
      %2382 = vmatpush1.bf16.msra.mxu0 0
      %2383 = vmatprep.subr.bf16.mxu0 0
      %2384 = vmatpush1.bf16.msra.mxu0 0
      %2385 = vmatprep.mubr.bf16.mxu0 %v2054
      %2386 = vmatmul.mubr.bf16.gmra.mrb[0].mxu0 %v1936
      %v2387 = vpop.f32.mrb[0].mxu0
      %v2388 = vadd.f32 0.0, %v2387
      %v2389 = vpop.f32.mrb[0].mxu0
      %v2390 = vpop.f32.mrb[0].mxu0
      %v2391 = vadd.f32 0.0, %v2390
      %v2392 = vpop.f32.mrb[0].mxu0
      %2393 = vmatprep.mubr.bf16.mxu0 %v2057
      %2394 = vmatmul.mubr.bf16.gmra.mrb[0].mxu0 %v1938
      %v2395 = vpop.f32.mrb[0].mxu0
      %v2396 = vadd.f32 0.0, %v2395
      %v2397 = vpop.f32.mrb[0].mxu0
      %v2398 = vpop.f32.mrb[0].mxu0
      %v2399 = vadd.f32 0.0, %v2398
      %v2400 = vpop.f32.mrb[0].mxu0
      %2401 = vmatprep.mubr.bf16.mxu0 %v2060
      %2402 = vmatmul.mubr.bf16.gmra.mrb[0].mxu0 %v1940
      %v2403 = vpop.f32.mrb[0].mxu0
      %v2404 = vadd.f32 0.0, %v2403
      %v2405 = vpop.f32.mrb[0].mxu0
      %v2406 = vpop.f32.mrb[0].mxu0
      %v2407 = vadd.f32 0.0, %v2406
      %v2408 = vpop.f32.mrb[0].mxu0
      %2409 = vmatprep.mubr.bf16.mxu0 %v2063
      %2410 = vmatmul.mubr.bf16.gmra.mrb[0].mxu0 %v1942
      %v2411 = vpop.f32.mrb[0].mxu0
      %v2412 = vadd.f32 0.0, %v2411
      %v2413 = vpop.f32.mrb[0].mxu0
      %v2414 = vpop.f32.mrb[0].mxu0
      %v2415 = vadd.f32 0.0, %v2414
      %v2416 = vpop.f32.mrb[0].mxu0
      %2417 = vmatprep.mubr.bf16.mxu0 %v2066
      %2418 = vmatmul.mubr.bf16.gmra.mrb[0].mxu0 %v1944
      %v2419 = vpop.f32.mrb[0].mxu0
      %v2420 = vadd.f32 0.0, %v2419
      %v2421 = vpop.f32.mrb[0].mxu0
      %v2422 = vpop.f32.mrb[0].mxu0
      %v2423 = vadd.f32 0.0, %v2422
      %v2424 = vpop.f32.mrb[0].mxu0
      %2425 = vmatprep.mubr.bf16.mxu0 %v2069
      %2426 = vmatmul.mubr.bf16.gmra.mrb[0].mxu0 %v1946
      %v2427 = vpop.f32.mrb[0].mxu0
      %v2428 = vadd.f32 0.0, %v2427
      %v2429 = vpop.f32.mrb[0].mxu0
      %v2430 = vpop.f32.mrb[0].mxu0
      %v2431 = vadd.f32 0.0, %v2430
      %v2432 = vpop.f32.mrb[0].mxu0
      %2433 = vmatprep.mubr.bf16.mxu0 %v2072
      %2434 = vmatmul.mubr.bf16.gmra.mrb[0].mxu0 %v1948
      %v2435 = vpop.f32.mrb[0].mxu0
      %v2436 = vadd.f32 0.0, %v2435
      %v2437 = vpop.f32.mrb[0].mxu0
      %v2438 = vpop.f32.mrb[0].mxu0
      %v2439 = vadd.f32 0.0, %v2438
      %v2440 = vpop.f32.mrb[0].mxu0
      %2441 = vmatprep.mubr.bf16.mxu0 %v2075
      %2442 = vmatmul.mubr.bf16.gmra.mrb[0].mxu0 %v1950
      %v2443 = vpop.f32.mrb[0].mxu0
      %v2444 = vadd.f32 0.0, %v2443
      %v2445 = vpop.f32.mrb[0].mxu0
      %v2446 = vpop.f32.mrb[0].mxu0
      %v2447 = vadd.f32 0.0, %v2446
      %v2448 = vpop.f32.mrb[0].mxu0
      %2449 = vmatprep.mubr.bf16.mxu0 %v2078
      %2450 = vmatmul.mubr.bf16.gmra.mrb[0].mxu0 %v1952
      %v2451 = vpop.f32.mrb[0].mxu0
      %v2452 = vadd.f32 0.0, %v2451
      %v2453 = vpop.f32.mrb[0].mxu0
      %v2454 = vpop.f32.mrb[0].mxu0
      %v2455 = vadd.f32 0.0, %v2454
      %v2456 = vpop.f32.mrb[0].mxu0
      %2457 = vmatprep.mubr.bf16.mxu0 %v2081
      %2458 = vmatmul.mubr.bf16.gmra.mrb[0].mxu0 %v1954
      %v2459 = vpop.f32.mrb[0].mxu0
      %v2460 = vadd.f32 0.0, %v2459
      %v2461 = vpop.f32.mrb[0].mxu0
      %v2462 = vpop.f32.mrb[0].mxu0
      %v2463 = vadd.f32 0.0, %v2462
      %v2464 = vpop.f32.mrb[0].mxu0
      %2465 = vmatprep.mubr.bf16.mxu0 %v2084
      %2466 = vmatmul.mubr.bf16.gmra.mrb[0].mxu0 %v1956
      %v2467 = vpop.f32.mrb[0].mxu0
      %v2468 = vadd.f32 0.0, %v2467
      %v2469 = vpop.f32.mrb[0].mxu0
      %v2470 = vpop.f32.mrb[0].mxu0
      %v2471 = vadd.f32 0.0, %v2470
      %v2472 = vpop.f32.mrb[0].mxu0
      %2473 = vmatprep.mubr.bf16.mxu0 %v2087
      %2474 = vmatmul.mubr.bf16.gmra.mrb[0].mxu0 %v1958
      %v2475 = vpop.f32.mrb[0].mxu0
      %v2476 = vadd.f32 0.0, %v2475
      %v2477 = vpop.f32.mrb[0].mxu0
      %v2478 = vpop.f32.mrb[0].mxu0
      %v2479 = vadd.f32 0.0, %v2478
      %v2480 = vpop.f32.mrb[0].mxu0
      %2481 = vmatprep.mubr.bf16.mxu0 %v2090
      %2482 = vmatmul.mubr.bf16.gmra.mrb[0].mxu0 %v1960
      %v2483 = vpop.f32.mrb[0].mxu0
      %v2484 = vadd.f32 0.0, %v2483
      %v2485 = vpop.f32.mrb[0].mxu0
      %v2486 = vpop.f32.mrb[0].mxu0
      %v2487 = vadd.f32 0.0, %v2486
      %v2488 = vpop.f32.mrb[0].mxu0
      %2489 = vmatprep.mubr.bf16.mxu0 %v2093
      %2490 = vmatmul.mubr.bf16.gmra.mrb[0].mxu0 %v1962
      %v2491 = vpop.f32.mrb[0].mxu0
      %v2492 = vadd.f32 0.0, %v2491
      %v2493 = vpop.f32.mrb[0].mxu0
      %v2494 = vpop.f32.mrb[0].mxu0
      %v2495 = vadd.f32 0.0, %v2494
      %v2496 = vpop.f32.mrb[0].mxu0
      %2497 = vmatprep.mubr.bf16.mxu0 %v2096
      %2498 = vmatmul.mubr.bf16.gmra.mrb[0].mxu0 %v1964
      %v2499 = vpop.f32.mrb[0].mxu0
      %v2500 = vadd.f32 0.0, %v2499
      %v2501 = vpop.f32.mrb[0].mxu0
      %v2502 = vpop.f32.mrb[0].mxu0
      %v2503 = vadd.f32 0.0, %v2502
      %v2504 = vpop.f32.mrb[0].mxu0
      %2505 = vmatprep.mubr.bf16.mxu0 %v2099
      %2506 = vmatmul.mubr.bf16.gmra.mrb[0].mxu0 %v1966
      %v2507 = vpop.f32.mrb[0].mxu0
      %v2508 = vadd.f32 0.0, %v2507
      %v2509 = vpop.f32.mrb[0].mxu0
      %v2510 = vpop.f32.mrb[0].mxu0
      %v2511 = vadd.f32 0.0, %v2510
      %v2512 = vpop.f32.mrb[0].mxu0
      %2513 = vdwg.mxu0
      %v2514 = vmax.f32 %v2140, %v2388
      %v2515 = vmax.f32 %v2143, %v2391
      %v2516 = vmax.f32 %v2148, %v2396
      %v2517 = vmax.f32 %v2151, %v2399
      %v2518 = vmax.f32 %v2156, %v2404
      %v2519 = vmax.f32 %v2159, %v2407
      %v2520 = vmax.f32 %v2164, %v2412
      %v2521 = vmax.f32 %v2167, %v2415
      %v2522 = vmax.f32 %v2172, %v2420
      %v2523 = vmax.f32 %v2175, %v2423
      %v2524 = vmax.f32 %v2180, %v2428
      %v2525 = vmax.f32 %v2183, %v2431
      %v2526 = vmax.f32 %v2188, %v2436
      %v2527 = vmax.f32 %v2191, %v2439
      %v2528 = vmax.f32 %v2196, %v2444
      %v2529 = vmax.f32 %v2199, %v2447
      %v2530 = vmax.f32 %v2204, %v2452
      %v2531 = vmax.f32 %v2207, %v2455
      %v2532 = vmax.f32 %v2212, %v2460
      %v2533 = vmax.f32 %v2215, %v2463
      %v2534 = vmax.f32 %v2220, %v2468
      %v2535 = vmax.f32 %v2223, %v2471
      %v2536 = vmax.f32 %v2228, %v2476
      %v2537 = vmax.f32 %v2231, %v2479
      %v2538 = vmax.f32 %v2236, %v2484
      %v2539 = vmax.f32 %v2239, %v2487
      %v2540 = vmax.f32 %v2244, %v2492
      %v2541 = vmax.f32 %v2247, %v2495
      %v2542 = vmax.f32 %v2252, %v2500
      %v2543 = vmax.f32 %v2255, %v2503
      %v2544 = vmax.f32 %v2260, %v2508
      %v2545 = vmax.f32 %v2263, %v2511
      %2546 = vst [vmem:[#allocation3] sm:$0xff] %v2514
      %2547 = vst [vmem:[#allocation3 + $0x8] sm:$0xff] %v2515
      %2548 = vst [vmem:[#allocation3 + $0x10] sm:$0xff] %v2516
      %2549 = vst [vmem:[#allocation3 + $0x18] sm:$0xff] %v2517
      %2550 = vst [vmem:[#allocation3 + $0x20] sm:$0xff] %v2518
      %2551 = vst [vmem:[#allocation3 + $0x28] sm:$0xff] %v2519
      %2552 = vst [vmem:[#allocation3 + $0x30] sm:$0xff] %v2520
      %2553 = vst [vmem:[#allocation3 + $0x38] sm:$0xff] %v2521
      %2554 = vst [vmem:[#allocation3 + $0x40] sm:$0xff] %v2522
      %2555 = vst [vmem:[#allocation3 + $0x48] sm:$0xff] %v2523
      %2556 = vst [vmem:[#allocation3 + $0x50] sm:$0xff] %v2524
      %2557 = vst [vmem:[#allocation3 + $0x58] sm:$0xff] %v2525
      %2558 = vst [vmem:[#allocation3 + $0x60] sm:$0xff] %v2526
      %2559 = vst [vmem:[#allocation3 + $0x68] sm:$0xff] %v2527
      %2560 = vst [vmem:[#allocation3 + $0x70] sm:$0xff] %v2528
      %2561 = vst [vmem:[#allocation3 + $0x78] sm:$0xff] %v2529
      %2562 = vst [vmem:[#allocation3 + $0x80] sm:$0xff] %v2530
      %2563 = vst [vmem:[#allocation3 + $0x88] sm:$0xff] %v2531
      %2564 = vst [vmem:[#allocation3 + $0x90] sm:$0xff] %v2532
      %2565 = vst [vmem:[#allocation3 + $0x98] sm:$0xff] %v2533
      %2566 = vst [vmem:[#allocation3 + $0xa0] sm:$0xff] %v2534
      %2567 = vst [vmem:[#allocation3 + $0xa8] sm:$0xff] %v2535
      %2568 = vst [vmem:[#allocation3 + $0xb0] sm:$0xff] %v2536
      %2569 = vst [vmem:[#allocation3 + $0xb8] sm:$0xff] %v2537
      %2570 = vst [vmem:[#allocation3 + $0xc0] sm:$0xff] %v2538
      %2571 = vst [vmem:[#allocation3 + $0xc8] sm:$0xff] %v2539
      %2572 = vst [vmem:[#allocation3 + $0xd0] sm:$0xff] %v2540
      %2573 = vst [vmem:[#allocation3 + $0xd8] sm:$0xff] %v2541
      %2574 = vst [vmem:[#allocation3 + $0xe0] sm:$0xff] %v2542
      %2575 = vst [vmem:[#allocation3 + $0xe8] sm:$0xff] %v2543
      %2576 = vst [vmem:[#allocation3 + $0xf0] sm:$0xff] %v2544
      %2577 = vst [vmem:[#allocation3 + $0xf8] sm:$0xff] %v2545
      %v2578 = vld [vmem:[#allocation3] ss:$2 sm:$0xff]
      %s2579 = scalar_lea.vmem [#allocation3], 16
      %v2580 = vld [vmem:[%s2579] ss:$2 sm:$0xff]
      %s2581 = scalar_lea.vmem [#allocation3], 32
      %v2582 = vld [vmem:[%s2581] ss:$2 sm:$0xff]
      %s2583 = scalar_lea.vmem [#allocation3], 48
      %v2584 = vld [vmem:[%s2583] ss:$2 sm:$0xff]
      %s2585 = scalar_lea.vmem [#allocation3], 64
      %v2586 = vld [vmem:[%s2585] ss:$2 sm:$0xff]
      %s2587 = scalar_lea.vmem [#allocation3], 80
      %v2588 = vld [vmem:[%s2587] ss:$2 sm:$0xff]
      %s2589 = scalar_lea.vmem [#allocation3], 96
      %v2590 = vld [vmem:[%s2589] ss:$2 sm:$0xff]
      %s2591 = scalar_lea.vmem [#allocation3], 112
      %v2592 = vld [vmem:[%s2591] ss:$2 sm:$0xff]
      %s2593 = scalar_lea.vmem [#allocation3], 128
      %v2594 = vld [vmem:[%s2593] ss:$2 sm:$0xff]
      %s2595 = scalar_lea.vmem [#allocation3], 144
      %v2596 = vld [vmem:[%s2595] ss:$2 sm:$0xff]
      %s2597 = scalar_lea.vmem [#allocation3], 160
      %v2598 = vld [vmem:[%s2597] ss:$2 sm:$0xff]
      %s2599 = scalar_lea.vmem [#allocation3], 176
      %v2600 = vld [vmem:[%s2599] ss:$2 sm:$0xff]
      %s2601 = scalar_lea.vmem [#allocation3], 192
      %v2602 = vld [vmem:[%s2601] ss:$2 sm:$0xff]
      %s2603 = scalar_lea.vmem [#allocation3], 208
      %v2604 = vld [vmem:[%s2603] ss:$2 sm:$0xff]
      %s2605 = scalar_lea.vmem [#allocation3], 224
      %v2606 = vld [vmem:[%s2605] ss:$2 sm:$0xff]
      %s2607 = scalar_lea.vmem [#allocation3], 240
      %v2608 = vld [vmem:[%s2607] ss:$2 sm:$0xff]
      %s2609 = scalar_lea.vmem [#allocation3], 1
      %v2610 = vld [vmem:[%s2609] ss:$2 sm:$0xff]
      %s2611 = scalar_lea.vmem [#allocation3], 17
      %v2612 = vld [vmem:[%s2611] ss:$2 sm:$0xff]
      %s2613 = scalar_lea.vmem [#allocation3], 33
      %v2614 = vld [vmem:[%s2613] ss:$2 sm:$0xff]
      %s2615 = scalar_lea.vmem [#allocation3], 49
      %v2616 = vld [vmem:[%s2615] ss:$2 sm:$0xff]
      %s2617 = scalar_lea.vmem [#allocation3], 65
      %v2618 = vld [vmem:[%s2617] ss:$2 sm:$0xff]
      %s2619 = scalar_lea.vmem [#allocation3], 81
      %v2620 = vld [vmem:[%s2619] ss:$2 sm:$0xff]
      %s2621 = scalar_lea.vmem [#allocation3], 97
      %v2622 = vld [vmem:[%s2621] ss:$2 sm:$0xff]
      %s2623 = scalar_lea.vmem [#allocation3], 113
      %v2624 = vld [vmem:[%s2623] ss:$2 sm:$0xff]
      %s2625 = scalar_lea.vmem [#allocation3], 129
      %v2626 = vld [vmem:[%s2625] ss:$2 sm:$0xff]
      %s2627 = scalar_lea.vmem [#allocation3], 145
      %v2628 = vld [vmem:[%s2627] ss:$2 sm:$0xff]
      %s2629 = scalar_lea.vmem [#allocation3], 161
      %v2630 = vld [vmem:[%s2629] ss:$2 sm:$0xff]
      %s2631 = scalar_lea.vmem [#allocation3], 177
      %v2632 = vld [vmem:[%s2631] ss:$2 sm:$0xff]
      %s2633 = scalar_lea.vmem [#allocation3], 193
      %v2634 = vld [vmem:[%s2633] ss:$2 sm:$0xff]
      %s2635 = scalar_lea.vmem [#allocation3], 209
      %v2636 = vld [vmem:[%s2635] ss:$2 sm:$0xff]
      %s2637 = scalar_lea.vmem [#allocation3], 225
      %v2638 = vld [vmem:[%s2637] ss:$2 sm:$0xff]
      %s2639 = scalar_lea.vmem [#allocation3], 241
      %v2640 = vld [vmem:[%s2639] ss:$2 sm:$0xff]
      %v2641 = vmax.f32 %v2578, %v2610
      %v2642 = vmax.f32 %v2580, %v2612
      %v2643 = vmax.f32 %v2582, %v2614
      %v2644 = vmax.f32 %v2584, %v2616
      %v2645 = vmax.f32 %v2586, %v2618
      %v2646 = vmax.f32 %v2588, %v2620
      %v2647 = vmax.f32 %v2590, %v2622
      %v2648 = vmax.f32 %v2592, %v2624
      %v2649 = vmax.f32 %v2594, %v2626
      %v2650 = vmax.f32 %v2596, %v2628
      %v2651 = vmax.f32 %v2598, %v2630
      %v2652 = vmax.f32 %v2600, %v2632
      %v2653 = vmax.f32 %v2602, %v2634
      %v2654 = vmax.f32 %v2604, %v2636
      %v2655 = vmax.f32 %v2606, %v2638
      %v2656 = vmax.f32 %v2608, %v2640
      %2657 = vst [vmem:[#allocation4] sm:$0xff] %v2641
      %2658 = vst [vmem:[#allocation4 + $0x8] sm:$0xff] %v2642
      %2659 = vst [vmem:[#allocation4 + $0x10] sm:$0xff] %v2643
      %2660 = vst [vmem:[#allocation4 + $0x18] sm:$0xff] %v2644
      %2661 = vst [vmem:[#allocation4 + $0x20] sm:$0xff] %v2645
      %2662 = vst [vmem:[#allocation4 + $0x28] sm:$0xff] %v2646
      %2663 = vst [vmem:[#allocation4 + $0x30] sm:$0xff] %v2647
      %2664 = vst [vmem:[#allocation4 + $0x38] sm:$0xff] %v2648
      %2665 = vst [vmem:[#allocation4 + $0x40] sm:$0xff] %v2649
      %2666 = vst [vmem:[#allocation4 + $0x48] sm:$0xff] %v2650
      %2667 = vst [vmem:[#allocation4 + $0x50] sm:$0xff] %v2651
      %2668 = vst [vmem:[#allocation4 + $0x58] sm:$0xff] %v2652
      %2669 = vst [vmem:[#allocation4 + $0x60] sm:$0xff] %v2653
      %2670 = vst [vmem:[#allocation4 + $0x68] sm:$0xff] %v2654
      %2671 = vst [vmem:[#allocation4 + $0x70] sm:$0xff] %v2655
      %2672 = vst [vmem:[#allocation4 + $0x78] sm:$0xff] %v2656
      %2673 = vst [vmem:[#allocation4 + $0x80] sm:$0xff] 0.0
      %v2674 = vld [vmem:[#allocation4] sm:$0xff]
      %v2675 = vld [vmem:[#allocation4 + $0x8] sm:$0xff]
      %v2676 = vld [vmem:[#allocation4 + $0x10] sm:$0xff]
      %v2677 = vld [vmem:[#allocation4 + $0x18] sm:$0xff]
      %v2678 = vld [vmem:[#allocation4 + $0x20] sm:$0xff]
      %v2679 = vld [vmem:[#allocation4 + $0x28] sm:$0xff]
      %v2680 = vld [vmem:[#allocation4 + $0x30] sm:$0xff]
      %v2681 = vld [vmem:[#allocation4 + $0x38] sm:$0xff]
      %v2682 = vld [vmem:[#allocation4 + $0x40] sm:$0xff]
      %v2683 = vld [vmem:[#allocation4 + $0x48] sm:$0xff]
      %v2684 = vld [vmem:[#allocation4 + $0x50] sm:$0xff]
      %v2685 = vld [vmem:[#allocation4 + $0x58] sm:$0xff]
      %v2686 = vld [vmem:[#allocation4 + $0x60] sm:$0xff]
      %v2687 = vld [vmem:[#allocation4 + $0x68] sm:$0xff]
      %v2688 = vld [vmem:[#allocation4 + $0x70] sm:$0xff]
      %v2689 = vld [vmem:[#allocation4 + $0x78] sm:$0xff]
      %v2690 = vld [vmem:[#allocation4 + $0x1] sm:$0xff]
      %v2691 = vld [vmem:[#allocation4 + $0x9] sm:$0xff]
      %v2692 = vld [vmem:[#allocation4 + $0x11] sm:$0xff]
      %v2693 = vld [vmem:[#allocation4 + $0x19] sm:$0xff]
      %v2694 = vld [vmem:[#allocation4 + $0x21] sm:$0xff]
      %v2695 = vld [vmem:[#allocation4 + $0x29] sm:$0xff]
      %v2696 = vld [vmem:[#allocation4 + $0x31] sm:$0xff]
      %v2697 = vld [vmem:[#allocation4 + $0x39] sm:$0xff]
      %v2698 = vld [vmem:[#allocation4 + $0x41] sm:$0xff]
      %v2699 = vld [vmem:[#allocation4 + $0x49] sm:$0xff]
      %v2700 = vld [vmem:[#allocation4 + $0x51] sm:$0xff]
      %v2701 = vld [vmem:[#allocation4 + $0x59] sm:$0xff]
      %v2702 = vld [vmem:[#allocation4 + $0x61] sm:$0xff]
      %v2703 = vld [vmem:[#allocation4 + $0x69] sm:$0xff]
      %v2704 = vld [vmem:[#allocation4 + $0x71] sm:$0xff]
      %v2705 = vld [vmem:[#allocation4 + $0x79] sm:$0xff]
      %v2706 = vld [vmem:[#allocation4 + $0x2] sm:$0xff]
      %v2707 = vld [vmem:[#allocation4 + $0xa] sm:$0xff]
      %v2708 = vld [vmem:[#allocation4 + $0x12] sm:$0xff]
      %v2709 = vld [vmem:[#allocation4 + $0x1a] sm:$0xff]
      %v2710 = vld [vmem:[#allocation4 + $0x22] sm:$0xff]
      %v2711 = vld [vmem:[#allocation4 + $0x2a] sm:$0xff]
      %v2712 = vld [vmem:[#allocation4 + $0x32] sm:$0xff]
      %v2713 = vld [vmem:[#allocation4 + $0x3a] sm:$0xff]
      %v2714 = vld [vmem:[#allocation4 + $0x42] sm:$0xff]
      %v2715 = vld [vmem:[#allocation4 + $0x4a] sm:$0xff]
      %v2716 = vld [vmem:[#allocation4 + $0x52] sm:$0xff]
      %v2717 = vld [vmem:[#allocation4 + $0x5a] sm:$0xff]
      %v2718 = vld [vmem:[#allocation4 + $0x62] sm:$0xff]
      %v2719 = vld [vmem:[#allocation4 + $0x6a] sm:$0xff]
      %v2720 = vld [vmem:[#allocation4 + $0x72] sm:$0xff]
      %v2721 = vld [vmem:[#allocation4 + $0x7a] sm:$0xff]
      %v2722 = vld [vmem:[#allocation4 + $0x3] sm:$0xff]
      %v2723 = vld [vmem:[#allocation4 + $0xb] sm:$0xff]
      %v2724 = vld [vmem:[#allocation4 + $0x13] sm:$0xff]
      %v2725 = vld [vmem:[#allocation4 + $0x1b] sm:$0xff]
      %v2726 = vld [vmem:[#allocation4 + $0x23] sm:$0xff]
      %v2727 = vld [vmem:[#allocation4 + $0x2b] sm:$0xff]
      %v2728 = vld [vmem:[#allocation4 + $0x33] sm:$0xff]
      %v2729 = vld [vmem:[#allocation4 + $0x3b] sm:$0xff]
      %v2730 = vld [vmem:[#allocation4 + $0x43] sm:$0xff]
      %v2731 = vld [vmem:[#allocation4 + $0x4b] sm:$0xff]
      %v2732 = vld [vmem:[#allocation4 + $0x53] sm:$0xff]
      %v2733 = vld [vmem:[#allocation4 + $0x5b] sm:$0xff]
      %v2734 = vld [vmem:[#allocation4 + $0x63] sm:$0xff]
      %v2735 = vld [vmem:[#allocation4 + $0x6b] sm:$0xff]
      %v2736 = vld [vmem:[#allocation4 + $0x73] sm:$0xff]
      %v2737 = vld [vmem:[#allocation4 + $0x7b] sm:$0xff]
      %v2738 = vld [vmem:[#allocation4 + $0x4] sm:$0xff]
      %v2739 = vld [vmem:[#allocation4 + $0xc] sm:$0xff]
      %v2740 = vld [vmem:[#allocation4 + $0x14] sm:$0xff]
      %v2741 = vld [vmem:[#allocation4 + $0x1c] sm:$0xff]
      %v2742 = vld [vmem:[#allocation4 + $0x24] sm:$0xff]
      %v2743 = vld [vmem:[#allocation4 + $0x2c] sm:$0xff]
      %v2744 = vld [vmem:[#allocation4 + $0x34] sm:$0xff]
      %v2745 = vld [vmem:[#allocation4 + $0x3c] sm:$0xff]
      %v2746 = vld [vmem:[#allocation4 + $0x44] sm:$0xff]
      %v2747 = vld [vmem:[#allocation4 + $0x4c] sm:$0xff]
      %v2748 = vld [vmem:[#allocation4 + $0x54] sm:$0xff]
      %v2749 = vld [vmem:[#allocation4 + $0x5c] sm:$0xff]
      %v2750 = vld [vmem:[#allocation4 + $0x64] sm:$0xff]
      %v2751 = vld [vmem:[#allocation4 + $0x6c] sm:$0xff]
      %v2752 = vld [vmem:[#allocation4 + $0x74] sm:$0xff]
      %v2753 = vld [vmem:[#allocation4 + $0x7c] sm:$0xff]
      %v2754 = vpack.c.bf16 %v2675, %v2674
      %v2755 = vpack.c.bf16 %v2691, %v2690
      %v2756 = vpack.c.bf16 %v2707, %v2706
      %v2757 = vpack.c.bf16 %v2723, %v2722
      %v2758 = vpack.c.bf16 %v2739, %v2738
      %v2759 = vpack.c.bf16 %v2677, %v2676
      %v2760 = vpack.c.bf16 %v2693, %v2692
      %v2761 = vpack.c.bf16 %v2709, %v2708
      %v2762 = vpack.c.bf16 %v2725, %v2724
      %v2763 = vpack.c.bf16 %v2741, %v2740
      %v2764 = vpack.c.bf16 %v2679, %v2678
      %v2765 = vpack.c.bf16 %v2695, %v2694
      %v2766 = vpack.c.bf16 %v2711, %v2710
      %v2767 = vpack.c.bf16 %v2727, %v2726
      %v2768 = vpack.c.bf16 %v2743, %v2742
      %v2769 = vpack.c.bf16 %v2681, %v2680
      %v2770 = vpack.c.bf16 %v2697, %v2696
      %v2771 = vpack.c.bf16 %v2713, %v2712
      %v2772 = vpack.c.bf16 %v2729, %v2728
      %v2773 = vpack.c.bf16 %v2745, %v2744
      %v2774 = vpack.c.bf16 %v2683, %v2682
      %v2775 = vpack.c.bf16 %v2699, %v2698
      %v2776 = vpack.c.bf16 %v2715, %v2714
      %v2777 = vpack.c.bf16 %v2731, %v2730
      %v2778 = vpack.c.bf16 %v2747, %v2746
      %v2779 = vpack.c.bf16 %v2685, %v2684
      %v2780 = vpack.c.bf16 %v2701, %v2700
      %v2781 = vpack.c.bf16 %v2717, %v2716
      %v2782 = vpack.c.bf16 %v2733, %v2732
      %v2783 = vpack.c.bf16 %v2749, %v2748
      %v2784 = vpack.c.bf16 %v2687, %v2686
      %v2785 = vpack.c.bf16 %v2703, %v2702
      %v2786 = vpack.c.bf16 %v2719, %v2718
      %v2787 = vpack.c.bf16 %v2735, %v2734
      %v2788 = vpack.c.bf16 %v2751, %v2750
      %v2789 = vpack.c.bf16 %v2689, %v2688
      %v2790 = vpack.c.bf16 %v2705, %v2704
      %v2791 = vpack.c.bf16 %v2721, %v2720
      %v2792 = vpack.c.bf16 %v2737, %v2736
      %v2793 = vpack.c.bf16 %v2753, %v2752
      %v2794 = vld [vmem:[%s5] sm:$0xff]
      %v2795 = vld [vmem:[%s5 + $0x8] sm:$0xff]
      %v2796 = vld [vmem:[%s5 + $0x10] sm:$0xff]
      %v2797 = vld [vmem:[%s5 + $0x18] sm:$0xff]
      %v2798 = vld [vmem:[%s5 + $0x20] sm:$0xff]
      %v2799 = vld [vmem:[%s5 + $0x28] sm:$0xff]
      %v2800 = vld [vmem:[%s5 + $0x30] sm:$0xff]
      %v2801 = vld [vmem:[%s5 + $0x38] sm:$0xff]
      %v2802 = vld [vmem:[%s5 + $0x40] sm:$0xff]
      %v2803 = vld [vmem:[%s5 + $0x48] sm:$0xff]
      %v2804 = vld [vmem:[%s5 + $0x50] sm:$0xff]
      %v2805 = vld [vmem:[%s5 + $0x58] sm:$0xff]
      %v2806 = vld [vmem:[%s5 + $0x60] sm:$0xff]
      %v2807 = vld [vmem:[%s5 + $0x68] sm:$0xff]
      %v2808 = vld [vmem:[%s5 + $0x70] sm:$0xff]
      %v2809 = vld [vmem:[%s5 + $0x78] sm:$0xff]
      %v2810 = vld [vmem:[%s5 + $0x80] sm:$0xff]
      %v2811 = vld [vmem:[%s5 + $0x88] sm:$0xff]
      %v2812 = vld [vmem:[%s5 + $0x90] sm:$0xff]
      %v2813 = vld [vmem:[%s5 + $0x98] sm:$0xff]
      %v2814 = vld [vmem:[%s5 + $0xa0] sm:$0xff]
      %v2815 = vld [vmem:[%s5 + $0xa8] sm:$0xff]
      %v2816 = vld [vmem:[%s5 + $0xb0] sm:$0xff]
      %v2817 = vld [vmem:[%s5 + $0xb8] sm:$0xff]
      %v2818 = vld [vmem:[%s5 + $0xc0] sm:$0xff]
      %v2819 = vld [vmem:[%s5 + $0xc8] sm:$0xff]
      %v2820 = vld [vmem:[%s5 + $0xd0] sm:$0xff]
      %v2821 = vld [vmem:[%s5 + $0xd8] sm:$0xff]
      %v2822 = vld [vmem:[%s5 + $0xe0] sm:$0xff]
      %v2823 = vld [vmem:[%s5 + $0xe8] sm:$0xff]
      %v2824 = vld [vmem:[%s5 + $0xf0] sm:$0xff]
      %v2825 = vld [vmem:[%s5 + $0xf8] sm:$0xff]
      %v2826 = vld [vmem:[%s5 + $0x100] sm:$0xff]
      %v2827 = vld [vmem:[%s5 + $0x108] sm:$0xff]
      %v2828 = vld [vmem:[%s5 + $0x110] sm:$0xff]
      %v2829 = vld [vmem:[%s5 + $0x118] sm:$0xff]
      %v2830 = vld [vmem:[%s5 + $0x120] sm:$0xff]
      %v2831 = vld [vmem:[%s5 + $0x128] sm:$0xff]
      %v2832 = vld [vmem:[%s5 + $0x130] sm:$0xff]
      %v2833 = vld [vmem:[%s5 + $0x138] sm:$0xff]
      %v2834 = vld [vmem:[%s5 + $0x140] sm:$0xff]
      %v2835 = vld [vmem:[%s5 + $0x148] sm:$0xff]
      %v2836 = vld [vmem:[%s5 + $0x150] sm:$0xff]
      %v2837 = vld [vmem:[%s5 + $0x158] sm:$0xff]
      %v2838 = vld [vmem:[%s5 + $0x160] sm:$0xff]
      %v2839 = vld [vmem:[%s5 + $0x168] sm:$0xff]
      %v2840 = vld [vmem:[%s5 + $0x170] sm:$0xff]
      %v2841 = vld [vmem:[%s5 + $0x178] sm:$0xff]
      %v2842 = vld [vmem:[%s5 + $0x180] sm:$0xff]
      %v2843 = vld [vmem:[%s5 + $0x188] sm:$0xff]
      %v2844 = vld [vmem:[%s5 + $0x190] sm:$0xff]
      %v2845 = vld [vmem:[%s5 + $0x198] sm:$0xff]
      %v2846 = vld [vmem:[%s5 + $0x1a0] sm:$0xff]
      %v2847 = vld [vmem:[%s5 + $0x1a8] sm:$0xff]
      %v2848 = vld [vmem:[%s5 + $0x1b0] sm:$0xff]
      %v2849 = vld [vmem:[%s5 + $0x1b8] sm:$0xff]
      %v2850 = vld [vmem:[%s5 + $0x1c0] sm:$0xff]
      %v2851 = vld [vmem:[%s5 + $0x1c8] sm:$0xff]
      %v2852 = vld [vmem:[%s5 + $0x1d0] sm:$0xff]
      %v2853 = vld [vmem:[%s5 + $0x1d8] sm:$0xff]
      %v2854 = vld [vmem:[%s5 + $0x1e0] sm:$0xff]
      %v2855 = vld [vmem:[%s5 + $0x1e8] sm:$0xff]
      %v2856 = vld [vmem:[%s5 + $0x1f0] sm:$0xff]
      %v2857 = vld [vmem:[%s5 + $0x1f8] sm:$0xff]
      %v2858 = vld [vmem:[%s5 + $0x200] sm:$0xff]
      %v2859 = vld [vmem:[%s5 + $0x208] sm:$0xff]
      %v2860 = vld [vmem:[%s5 + $0x210] sm:$0xff]
      %v2861 = vld [vmem:[%s5 + $0x218] sm:$0xff]
      %v2862 = vld [vmem:[%s5 + $0x220] sm:$0xff]
      %v2863 = vld [vmem:[%s5 + $0x228] sm:$0xff]
      %v2864 = vld [vmem:[%s5 + $0x230] sm:$0xff]
      %v2865 = vld [vmem:[%s5 + $0x238] sm:$0xff]
      %v2866 = vld [vmem:[%s5 + $0x240] sm:$0xff]
      %v2867 = vld [vmem:[%s5 + $0x248] sm:$0xff]
      %v2868 = vld [vmem:[%s5 + $0x250] sm:$0xff]
      %v2869 = vld [vmem:[%s5 + $0x258] sm:$0xff]
      %v2870 = vld [vmem:[%s5 + $0x260] sm:$0xff]
      %v2871 = vld [vmem:[%s5 + $0x268] sm:$0xff]
      %v2872 = vld [vmem:[%s5 + $0x270] sm:$0xff]
      %v2873 = vld [vmem:[%s5 + $0x278] sm:$0xff]
      %v2874 = vld [vmem:[%s6] sm:$0x3]
      %v2876 = vlaneseq
      %v2877 = vshrl.u32 %v2876, 7
      %v2878 = vsub.s32 0, %v2877
      %v2879 = vrot.slane %v2874, %v2878
      %v2880 = vlaneseq
      %v2881 = vshrl.u32 %v2880, 7
      %v2882 = vsub.s32 1, %v2881
      %v2883 = vrot.slane %v2874, %v2882
      %v2966 = vunpack.c.l.b16 %v2794
      %v2967 = vunpack.c.h.b16 %v2794
      %v2968 = vunpack.c.l.b16 %v2795
      %v2969 = vunpack.c.h.b16 %v2795
      %v2970 = vunpack.c.l.b16 %v2796
      %v2971 = vunpack.c.h.b16 %v2796
      %v2972 = vunpack.c.l.b16 %v2797
      %v2973 = vunpack.c.h.b16 %v2797
      %v2974 = vunpack.c.l.b16 %v2798
      %v2975 = vunpack.c.h.b16 %v2798
      %v2976 = vunpack.c.l.b16 %v2799
      %v2977 = vunpack.c.h.b16 %v2799
      %v2978 = vunpack.c.l.b16 %v2800
      %v2979 = vunpack.c.h.b16 %v2800
      %v2980 = vunpack.c.l.b16 %v2801
      %v2981 = vunpack.c.h.b16 %v2801
      %v2982 = vunpack.c.l.b16 %v2802
      %v2983 = vunpack.c.h.b16 %v2802
      %v2984 = vunpack.c.l.b16 %v2803
      %v2985 = vunpack.c.h.b16 %v2803
      %v2986 = vunpack.c.l.b16 %v2804
      %v2987 = vunpack.c.h.b16 %v2804
      %v2988 = vunpack.c.l.b16 %v2805
      %v2989 = vunpack.c.h.b16 %v2805
      %v2990 = vunpack.c.l.b16 %v2806
      %v2991 = vunpack.c.h.b16 %v2806
      %v2992 = vunpack.c.l.b16 %v2807
      %v2993 = vunpack.c.h.b16 %v2807
      %v2994 = vunpack.c.l.b16 %v2808
      %v2995 = vunpack.c.h.b16 %v2808
      %v2996 = vunpack.c.l.b16 %v2809
      %v2997 = vunpack.c.h.b16 %v2809
      %v2998 = vunpack.c.l.b16 %v2810
      %v2999 = vunpack.c.h.b16 %v2810
      %v3000 = vunpack.c.l.b16 %v2811
      %v3001 = vunpack.c.h.b16 %v2811
      %v3002 = vunpack.c.l.b16 %v2812
      %v3003 = vunpack.c.h.b16 %v2812
      %v3004 = vunpack.c.l.b16 %v2813
      %v3005 = vunpack.c.h.b16 %v2813
      %v3006 = vunpack.c.l.b16 %v2814
      %v3007 = vunpack.c.h.b16 %v2814
      %v3008 = vunpack.c.l.b16 %v2815
      %v3009 = vunpack.c.h.b16 %v2815
      %v3010 = vunpack.c.l.b16 %v2816
      %v3011 = vunpack.c.h.b16 %v2816
      %v3012 = vunpack.c.l.b16 %v2817
      %v3013 = vunpack.c.h.b16 %v2817
      %v3014 = vunpack.c.l.b16 %v2818
      %v3015 = vunpack.c.h.b16 %v2818
      %v3016 = vunpack.c.l.b16 %v2819
      %v3017 = vunpack.c.h.b16 %v2819
      %v3018 = vunpack.c.l.b16 %v2820
      %v3019 = vunpack.c.h.b16 %v2820
      %v3020 = vunpack.c.l.b16 %v2821
      %v3021 = vunpack.c.h.b16 %v2821
      %v3022 = vunpack.c.l.b16 %v2822
      %v3023 = vunpack.c.h.b16 %v2822
      %v3024 = vunpack.c.l.b16 %v2823
      %v3025 = vunpack.c.h.b16 %v2823
      %v3026 = vunpack.c.l.b16 %v2824
      %v3027 = vunpack.c.h.b16 %v2824
      %v3028 = vunpack.c.l.b16 %v2825
      %v3029 = vunpack.c.h.b16 %v2825
      %v3030 = vunpack.c.l.b16 %v2826
      %v3031 = vunpack.c.h.b16 %v2826
      %v3032 = vunpack.c.l.b16 %v2827
      %v3033 = vunpack.c.h.b16 %v2827
      %v3034 = vunpack.c.l.b16 %v2828
      %v3035 = vunpack.c.h.b16 %v2828
      %v3036 = vunpack.c.l.b16 %v2829
      %v3037 = vunpack.c.h.b16 %v2829
      %v3038 = vunpack.c.l.b16 %v2830
      %v3039 = vunpack.c.h.b16 %v2830
      %v3040 = vunpack.c.l.b16 %v2831
      %v3041 = vunpack.c.h.b16 %v2831
      %v3042 = vunpack.c.l.b16 %v2832
      %v3043 = vunpack.c.h.b16 %v2832
      %v3044 = vunpack.c.l.b16 %v2833
      %v3045 = vunpack.c.h.b16 %v2833
      %v3046 = vunpack.c.l.b16 %v2834
      %v3047 = vunpack.c.h.b16 %v2834
      %v3048 = vunpack.c.l.b16 %v2835
      %v3049 = vunpack.c.h.b16 %v2835
      %v3050 = vunpack.c.l.b16 %v2836
      %v3051 = vunpack.c.h.b16 %v2836
      %v3052 = vunpack.c.l.b16 %v2837
      %v3053 = vunpack.c.h.b16 %v2837
      %v3054 = vunpack.c.l.b16 %v2838
      %v3055 = vunpack.c.h.b16 %v2838
      %v3056 = vunpack.c.l.b16 %v2839
      %v3057 = vunpack.c.h.b16 %v2839
      %v3058 = vunpack.c.l.b16 %v2840
      %v3059 = vunpack.c.h.b16 %v2840
      %v3060 = vunpack.c.l.b16 %v2841
      %v3061 = vunpack.c.h.b16 %v2841
      %v3062 = vunpack.c.l.b16 %v2842
      %v3063 = vunpack.c.h.b16 %v2842
      %v3064 = vunpack.c.l.b16 %v2843
      %v3065 = vunpack.c.h.b16 %v2843
      %v3066 = vunpack.c.l.b16 %v2844
      %v3067 = vunpack.c.h.b16 %v2844
      %v3068 = vunpack.c.l.b16 %v2845
      %v3069 = vunpack.c.h.b16 %v2845
      %v3070 = vunpack.c.l.b16 %v2846
      %v3071 = vunpack.c.h.b16 %v2846
      %v3072 = vunpack.c.l.b16 %v2847
      %v3073 = vunpack.c.h.b16 %v2847
      %v3074 = vunpack.c.l.b16 %v2848
      %v3075 = vunpack.c.h.b16 %v2848
      %v3076 = vunpack.c.l.b16 %v2849
      %v3077 = vunpack.c.h.b16 %v2849
      %v3078 = vunpack.c.l.b16 %v2850
      %v3079 = vunpack.c.h.b16 %v2850
      %v3080 = vunpack.c.l.b16 %v2851
      %v3081 = vunpack.c.h.b16 %v2851
      %v3082 = vunpack.c.l.b16 %v2852
      %v3083 = vunpack.c.h.b16 %v2852
      %v3084 = vunpack.c.l.b16 %v2853
      %v3085 = vunpack.c.h.b16 %v2853
      %v3086 = vunpack.c.l.b16 %v2854
      %v3087 = vunpack.c.h.b16 %v2854
      %v3088 = vunpack.c.l.b16 %v2855
      %v3089 = vunpack.c.h.b16 %v2855
      %v3090 = vunpack.c.l.b16 %v2856
      %v3091 = vunpack.c.h.b16 %v2856
      %v3092 = vunpack.c.l.b16 %v2857
      %v3093 = vunpack.c.h.b16 %v2857
      %v3094 = vunpack.c.l.b16 %v2858
      %v3095 = vunpack.c.h.b16 %v2858
      %v3096 = vunpack.c.l.b16 %v2859
      %v3097 = vunpack.c.h.b16 %v2859
      %v3098 = vunpack.c.l.b16 %v2860
      %v3099 = vunpack.c.h.b16 %v2860
      %v3100 = vunpack.c.l.b16 %v2861
      %v3101 = vunpack.c.h.b16 %v2861
      %v3102 = vunpack.c.l.b16 %v2862
      %v3103 = vunpack.c.h.b16 %v2862
      %v3104 = vunpack.c.l.b16 %v2863
      %v3105 = vunpack.c.h.b16 %v2863
      %v3106 = vunpack.c.l.b16 %v2864
      %v3107 = vunpack.c.h.b16 %v2864
      %v3108 = vunpack.c.l.b16 %v2865
      %v3109 = vunpack.c.h.b16 %v2865
      %v3110 = vunpack.c.l.b16 %v2866
      %v3111 = vunpack.c.h.b16 %v2866
      %v3112 = vunpack.c.l.b16 %v2867
      %v3113 = vunpack.c.h.b16 %v2867
      %v3114 = vunpack.c.l.b16 %v2868
      %v3115 = vunpack.c.h.b16 %v2868
      %v3116 = vunpack.c.l.b16 %v2869
      %v3117 = vunpack.c.h.b16 %v2869
      %v3118 = vunpack.c.l.b16 %v2870
      %v3119 = vunpack.c.h.b16 %v2870
      %v3120 = vunpack.c.l.b16 %v2871
      %v3121 = vunpack.c.h.b16 %v2871
      %v3122 = vunpack.c.l.b16 %v2872
      %v3123 = vunpack.c.h.b16 %v2872
      %v3124 = vunpack.c.l.b16 %v2873
      %v3125 = vunpack.c.h.b16 %v2873
      %v3126 = vpack.c.b16 %v2968, %v2966
      %v3127 = vpack.c.b16 %v2969, %v2967
      %v3128 = vpack.c.b16 %v2972, %v2970
      %v3129 = vpack.c.b16 %v2973, %v2971
      %v3130 = vpack.c.b16 %v2976, %v2974
      %v3131 = vpack.c.b16 %v2977, %v2975
      %v3132 = vpack.c.b16 %v2980, %v2978
      %v3133 = vpack.c.b16 %v2981, %v2979
      %v3134 = vpack.c.b16 %v2984, %v2982
      %v3135 = vpack.c.b16 %v2985, %v2983
      %v3136 = vpack.c.b16 %v2988, %v2986
      %v3137 = vpack.c.b16 %v2989, %v2987
      %v3138 = vpack.c.b16 %v2992, %v2990
      %v3139 = vpack.c.b16 %v2993, %v2991
      %v3140 = vpack.c.b16 %v2996, %v2994
      %v3141 = vpack.c.b16 %v2997, %v2995
      %v3142 = vpack.c.b16 %v3000, %v2998
      %v3143 = vpack.c.b16 %v3001, %v2999
      %v3144 = vpack.c.b16 %v3004, %v3002
      %v3145 = vpack.c.b16 %v3005, %v3003
      %v3146 = vpack.c.b16 %v3008, %v3006
      %v3147 = vpack.c.b16 %v3009, %v3007
      %v3148 = vpack.c.b16 %v3012, %v3010
      %v3149 = vpack.c.b16 %v3013, %v3011
      %v3150 = vpack.c.b16 %v3016, %v3014
      %v3151 = vpack.c.b16 %v3017, %v3015
      %v3152 = vpack.c.b16 %v3020, %v3018
      %v3153 = vpack.c.b16 %v3021, %v3019
      %v3154 = vpack.c.b16 %v3024, %v3022
      %v3155 = vpack.c.b16 %v3025, %v3023
      %v3156 = vpack.c.b16 %v3028, %v3026
      %v3157 = vpack.c.b16 %v3029, %v3027
      %v3158 = vpack.c.b16 %v3032, %v3030
      %v3159 = vpack.c.b16 %v3033, %v3031
      %v3160 = vpack.c.b16 %v3036, %v3034
      %v3161 = vpack.c.b16 %v3037, %v3035
      %v3162 = vpack.c.b16 %v3040, %v3038
      %v3163 = vpack.c.b16 %v3041, %v3039
      %v3164 = vpack.c.b16 %v3044, %v3042
      %v3165 = vpack.c.b16 %v3045, %v3043
      %v3166 = vpack.c.b16 %v3048, %v3046
      %v3167 = vpack.c.b16 %v3049, %v3047
      %v3168 = vpack.c.b16 %v3052, %v3050
      %v3169 = vpack.c.b16 %v3053, %v3051
      %v3170 = vpack.c.b16 %v3056, %v3054
      %v3171 = vpack.c.b16 %v3057, %v3055
      %v3172 = vpack.c.b16 %v3060, %v3058
      %v3173 = vpack.c.b16 %v3061, %v3059
      %v3174 = vpack.c.b16 %v3064, %v3062
      %v3175 = vpack.c.b16 %v3065, %v3063
      %v3176 = vpack.c.b16 %v3068, %v3066
      %v3177 = vpack.c.b16 %v3069, %v3067
      %v3178 = vpack.c.b16 %v3072, %v3070
      %v3179 = vpack.c.b16 %v3073, %v3071
      %v3180 = vpack.c.b16 %v3076, %v3074
      %v3181 = vpack.c.b16 %v3077, %v3075
      %v3182 = vpack.c.b16 %v3080, %v3078
      %v3183 = vpack.c.b16 %v3081, %v3079
      %v3184 = vpack.c.b16 %v3084, %v3082
      %v3185 = vpack.c.b16 %v3085, %v3083
      %v3186 = vpack.c.b16 %v3088, %v3086
      %v3187 = vpack.c.b16 %v3089, %v3087
      %v3188 = vpack.c.b16 %v3092, %v3090
      %v3189 = vpack.c.b16 %v3093, %v3091
      %v3190 = vpack.c.b16 %v3096, %v3094
      %v3191 = vpack.c.b16 %v3097, %v3095
      %v3192 = vpack.c.b16 %v3100, %v3098
      %v3193 = vpack.c.b16 %v3101, %v3099
      %v3194 = vpack.c.b16 %v3104, %v3102
      %v3195 = vpack.c.b16 %v3105, %v3103
      %v3196 = vpack.c.b16 %v3108, %v3106
      %v3197 = vpack.c.b16 %v3109, %v3107
      %v3198 = vpack.c.b16 %v3112, %v3110
      %v3199 = vpack.c.b16 %v3113, %v3111
      %v3200 = vpack.c.b16 %v3116, %v3114
      %v3201 = vpack.c.b16 %v3117, %v3115
      %v3202 = vpack.c.b16 %v3120, %v3118
      %v3203 = vpack.c.b16 %v3121, %v3119
      %v3204 = vpack.c.b16 %v3124, %v3122
      %v3205 = vpack.c.b16 %v3125, %v3123
      %3286 = vmatprep.subr.bf16.mxu0 %v3127
      %3287 = vmatpush1.bf16.msra.mxu0 %v3126
      %3288 = vmatprep.subr.bf16.mxu0 %v3129
      %3289 = vmatpush1.bf16.msra.mxu0 %v3128
      %3290 = vmatprep.subr.bf16.mxu0 %v3131
      %3291 = vmatpush1.bf16.msra.mxu0 %v3130
      %3292 = vmatprep.subr.bf16.mxu0 %v3133
      %3293 = vmatpush1.bf16.msra.mxu0 %v3132
      %3294 = vmatprep.subr.bf16.mxu0 %v3135
      %3295 = vmatpush1.bf16.msra.mxu0 %v3134
      %3296 = vmatprep.subr.bf16.mxu0 %v3137
      %3297 = vmatpush1.bf16.msra.mxu0 %v3136
      %3298 = vmatprep.subr.bf16.mxu0 %v3139
      %3299 = vmatpush1.bf16.msra.mxu0 %v3138
      %3300 = vmatprep.subr.bf16.mxu0 %v3141
      %3301 = vmatpush1.bf16.msra.mxu0 %v3140
      %3302 = vmatprep.subr.bf16.mxu0 %v3143
      %3303 = vmatpush1.bf16.msra.mxu0 %v3142
      %3304 = vmatprep.subr.bf16.mxu0 %v3145
      %3305 = vmatpush1.bf16.msra.mxu0 %v3144
      %3306 = vmatprep.subr.bf16.mxu0 %v3147
      %3307 = vmatpush1.bf16.msra.mxu0 %v3146
      %3308 = vmatprep.subr.bf16.mxu0 %v3149
      %3309 = vmatpush1.bf16.msra.mxu0 %v3148
      %3310 = vmatprep.subr.bf16.mxu0 %v3151
      %3311 = vmatpush1.bf16.msra.mxu0 %v3150
      %3312 = vmatprep.subr.bf16.mxu0 %v3153
      %3313 = vmatpush1.bf16.msra.mxu0 %v3152
      %3314 = vmatprep.subr.bf16.mxu0 %v3155
      %3315 = vmatpush1.bf16.msra.mxu0 %v3154
      %3316 = vmatprep.subr.bf16.mxu0 %v3157
      %3317 = vmatpush1.bf16.msra.mxu0 %v3156
      %3318 = vmatprep.mubr.bf16.mxu0 %v2755
      %3319 = vmatmul.mubr.bf16.gmra.mrb[0].mxu0 %v2754
      %v3320 = vpop.f32.mrb[0].mxu0
      %v3321 = vadd.f32 %v2879, %v3320
      %v3322 = vpop.f32.mrb[0].mxu0
      %v3323 = vadd.f32 %v2883, %v3322
      %v3324 = vpop.f32.mrb[0].mxu0
      %v3325 = vadd.f32 %v2879, %v3324
      %v3326 = vpop.f32.mrb[0].mxu0
      %v3327 = vadd.f32 %v2883, %v3326
      %3328 = vmatprep.mubr.bf16.mxu0 %v2760
      %3329 = vmatmul.mubr.bf16.gmra.mrb[0].mxu0 %v2759
      %v3330 = vpop.f32.mrb[0].mxu0
      %v3331 = vadd.f32 %v2879, %v3330
      %v3332 = vpop.f32.mrb[0].mxu0
      %v3333 = vadd.f32 %v2883, %v3332
      %v3334 = vpop.f32.mrb[0].mxu0
      %v3335 = vadd.f32 %v2879, %v3334
      %v3336 = vpop.f32.mrb[0].mxu0
      %v3337 = vadd.f32 %v2883, %v3336
      %3338 = vmatprep.mubr.bf16.mxu0 %v2765
      %3339 = vmatmul.mubr.bf16.gmra.mrb[0].mxu0 %v2764
      %v3340 = vpop.f32.mrb[0].mxu0
      %v3341 = vadd.f32 %v2879, %v3340
      %v3342 = vpop.f32.mrb[0].mxu0
      %v3343 = vadd.f32 %v2883, %v3342
      %v3344 = vpop.f32.mrb[0].mxu0
      %v3345 = vadd.f32 %v2879, %v3344
      %v3346 = vpop.f32.mrb[0].mxu0
      %v3347 = vadd.f32 %v2883, %v3346
      %3348 = vmatprep.mubr.bf16.mxu0 %v2770
      %3349 = vmatmul.mubr.bf16.gmra.mrb[0].mxu0 %v2769
      %v3350 = vpop.f32.mrb[0].mxu0
      %v3351 = vadd.f32 %v2879, %v3350
      %v3352 = vpop.f32.mrb[0].mxu0
      %v3353 = vadd.f32 %v2883, %v3352
      %v3354 = vpop.f32.mrb[0].mxu0
      %v3355 = vadd.f32 %v2879, %v3354
      %v3356 = vpop.f32.mrb[0].mxu0
      %v3357 = vadd.f32 %v2883, %v3356
      %3358 = vmatprep.mubr.bf16.mxu0 %v2775
      %3359 = vmatmul.mubr.bf16.gmra.mrb[0].mxu0 %v2774
      %v3360 = vpop.f32.mrb[0].mxu0
      %v3361 = vadd.f32 %v2879, %v3360
      %v3362 = vpop.f32.mrb[0].mxu0
      %v3363 = vadd.f32 %v2883, %v3362
      %v3364 = vpop.f32.mrb[0].mxu0
      %v3365 = vadd.f32 %v2879, %v3364
      %v3366 = vpop.f32.mrb[0].mxu0
      %v3367 = vadd.f32 %v2883, %v3366
      %3368 = vmatprep.mubr.bf16.mxu0 %v2780
      %3369 = vmatmul.mubr.bf16.gmra.mrb[0].mxu0 %v2779
      %v3370 = vpop.f32.mrb[0].mxu0
      %v3371 = vadd.f32 %v2879, %v3370
      %v3372 = vpop.f32.mrb[0].mxu0
      %v3373 = vadd.f32 %v2883, %v3372
      %v3374 = vpop.f32.mrb[0].mxu0
      %v3375 = vadd.f32 %v2879, %v3374
      %v3376 = vpop.f32.mrb[0].mxu0
      %v3377 = vadd.f32 %v2883, %v3376
      %3378 = vmatprep.mubr.bf16.mxu0 %v2785
      %3379 = vmatmul.mubr.bf16.gmra.mrb[0].mxu0 %v2784
      %v3380 = vpop.f32.mrb[0].mxu0
      %v3381 = vadd.f32 %v2879, %v3380
      %v3382 = vpop.f32.mrb[0].mxu0
      %v3383 = vadd.f32 %v2883, %v3382
      %v3384 = vpop.f32.mrb[0].mxu0
      %v3385 = vadd.f32 %v2879, %v3384
      %v3386 = vpop.f32.mrb[0].mxu0
      %v3387 = vadd.f32 %v2883, %v3386
      %3388 = vmatprep.mubr.bf16.mxu0 %v2790
      %3389 = vmatmul.mubr.bf16.gmra.mrb[0].mxu0 %v2789
      %v3390 = vpop.f32.mrb[0].mxu0
      %v3391 = vadd.f32 %v2879, %v3390
      %v3392 = vpop.f32.mrb[0].mxu0
      %v3393 = vadd.f32 %v2883, %v3392
      %v3394 = vpop.f32.mrb[0].mxu0
      %v3395 = vadd.f32 %v2879, %v3394
      %v3396 = vpop.f32.mrb[0].mxu0
      %v3397 = vadd.f32 %v2883, %v3396
      %3398 = vdwg.mxu0
      %3399 = vmatprep.subr.bf16.mxu0 %v3159
      %3400 = vmatpush1.bf16.msra.mxu0 %v3158
      %3401 = vmatprep.subr.bf16.mxu0 %v3161
      %3402 = vmatpush1.bf16.msra.mxu0 %v3160
      %3403 = vmatprep.subr.bf16.mxu0 %v3163
      %3404 = vmatpush1.bf16.msra.mxu0 %v3162
      %3405 = vmatprep.subr.bf16.mxu0 %v3165
      %3406 = vmatpush1.bf16.msra.mxu0 %v3164
      %3407 = vmatprep.subr.bf16.mxu0 %v3167
      %3408 = vmatpush1.bf16.msra.mxu0 %v3166
      %3409 = vmatprep.subr.bf16.mxu0 %v3169
      %3410 = vmatpush1.bf16.msra.mxu0 %v3168
      %3411 = vmatprep.subr.bf16.mxu0 %v3171
      %3412 = vmatpush1.bf16.msra.mxu0 %v3170
      %3413 = vmatprep.subr.bf16.mxu0 %v3173
      %3414 = vmatpush1.bf16.msra.mxu0 %v3172
      %3415 = vmatprep.subr.bf16.mxu0 %v3175
      %3416 = vmatpush1.bf16.msra.mxu0 %v3174
      %3417 = vmatprep.subr.bf16.mxu0 %v3177
      %3418 = vmatpush1.bf16.msra.mxu0 %v3176
      %3419 = vmatprep.subr.bf16.mxu0 %v3179
      %3420 = vmatpush1.bf16.msra.mxu0 %v3178
      %3421 = vmatprep.subr.bf16.mxu0 %v3181
      %3422 = vmatpush1.bf16.msra.mxu0 %v3180
      %3423 = vmatprep.subr.bf16.mxu0 %v3183
      %3424 = vmatpush1.bf16.msra.mxu0 %v3182
      %3425 = vmatprep.subr.bf16.mxu0 %v3185
      %3426 = vmatpush1.bf16.msra.mxu0 %v3184
      %3427 = vmatprep.subr.bf16.mxu0 %v3187
      %3428 = vmatpush1.bf16.msra.mxu0 %v3186
      %3429 = vmatprep.subr.bf16.mxu0 %v3189
      %3430 = vmatpush1.bf16.msra.mxu0 %v3188
      %3431 = vmatprep.mubr.bf16.mxu0 %v2757
      %3432 = vmatmul.mubr.bf16.gmra.mrb[0].mxu0 %v2756
      %v3433 = vpop.f32.mrb[0].mxu0
      %v3434 = vadd.f32 %v3321, %v3433
      %v3435 = vpop.f32.mrb[0].mxu0
      %v3436 = vadd.f32 %v3323, %v3435
      %v3437 = vpop.f32.mrb[0].mxu0
      %v3438 = vadd.f32 %v3325, %v3437
      %v3439 = vpop.f32.mrb[0].mxu0
      %v3440 = vadd.f32 %v3327, %v3439
      %3441 = vmatprep.mubr.bf16.mxu0 %v2762
      %3442 = vmatmul.mubr.bf16.gmra.mrb[0].mxu0 %v2761
      %v3443 = vpop.f32.mrb[0].mxu0
      %v3444 = vadd.f32 %v3331, %v3443
      %v3445 = vpop.f32.mrb[0].mxu0
      %v3446 = vadd.f32 %v3333, %v3445
      %v3447 = vpop.f32.mrb[0].mxu0
      %v3448 = vadd.f32 %v3335, %v3447
      %v3449 = vpop.f32.mrb[0].mxu0
      %v3450 = vadd.f32 %v3337, %v3449
      %3451 = vmatprep.mubr.bf16.mxu0 %v2767
      %3452 = vmatmul.mubr.bf16.gmra.mrb[0].mxu0 %v2766
      %v3453 = vpop.f32.mrb[0].mxu0
      %v3454 = vadd.f32 %v3341, %v3453
      %v3455 = vpop.f32.mrb[0].mxu0
      %v3456 = vadd.f32 %v3343, %v3455
      %v3457 = vpop.f32.mrb[0].mxu0
      %v3458 = vadd.f32 %v3345, %v3457
      %v3459 = vpop.f32.mrb[0].mxu0
      %v3460 = vadd.f32 %v3347, %v3459
      %3461 = vmatprep.mubr.bf16.mxu0 %v2772
      %3462 = vmatmul.mubr.bf16.gmra.mrb[0].mxu0 %v2771
      %v3463 = vpop.f32.mrb[0].mxu0
      %v3464 = vadd.f32 %v3351, %v3463
      %v3465 = vpop.f32.mrb[0].mxu0
      %v3466 = vadd.f32 %v3353, %v3465
      %v3467 = vpop.f32.mrb[0].mxu0
      %v3468 = vadd.f32 %v3355, %v3467
      %v3469 = vpop.f32.mrb[0].mxu0
      %v3470 = vadd.f32 %v3357, %v3469
      %3471 = vmatprep.mubr.bf16.mxu0 %v2777
      %3472 = vmatmul.mubr.bf16.gmra.mrb[0].mxu0 %v2776
      %v3473 = vpop.f32.mrb[0].mxu0
      %v3474 = vadd.f32 %v3361, %v3473
      %v3475 = vpop.f32.mrb[0].mxu0
      %v3476 = vadd.f32 %v3363, %v3475
      %v3477 = vpop.f32.mrb[0].mxu0
      %v3478 = vadd.f32 %v3365, %v3477
      %v3479 = vpop.f32.mrb[0].mxu0
      %v3480 = vadd.f32 %v3367, %v3479
      %3481 = vmatprep.mubr.bf16.mxu0 %v2782
      %3482 = vmatmul.mubr.bf16.gmra.mrb[0].mxu0 %v2781
      %v3483 = vpop.f32.mrb[0].mxu0
      %v3484 = vadd.f32 %v3371, %v3483
      %v3485 = vpop.f32.mrb[0].mxu0
      %v3486 = vadd.f32 %v3373, %v3485
      %v3487 = vpop.f32.mrb[0].mxu0
      %v3488 = vadd.f32 %v3375, %v3487
      %v3489 = vpop.f32.mrb[0].mxu0
      %v3490 = vadd.f32 %v3377, %v3489
      %3491 = vmatprep.mubr.bf16.mxu0 %v2787
      %3492 = vmatmul.mubr.bf16.gmra.mrb[0].mxu0 %v2786
      %v3493 = vpop.f32.mrb[0].mxu0
      %v3494 = vadd.f32 %v3381, %v3493
      %v3495 = vpop.f32.mrb[0].mxu0
      %v3496 = vadd.f32 %v3383, %v3495
      %v3497 = vpop.f32.mrb[0].mxu0
      %v3498 = vadd.f32 %v3385, %v3497
      %v3499 = vpop.f32.mrb[0].mxu0
      %v3500 = vadd.f32 %v3387, %v3499
      %3501 = vmatprep.mubr.bf16.mxu0 %v2792
      %3502 = vmatmul.mubr.bf16.gmra.mrb[0].mxu0 %v2791
      %v3503 = vpop.f32.mrb[0].mxu0
      %v3504 = vadd.f32 %v3391, %v3503
      %v3505 = vpop.f32.mrb[0].mxu0
      %v3506 = vadd.f32 %v3393, %v3505
      %v3507 = vpop.f32.mrb[0].mxu0
      %v3508 = vadd.f32 %v3395, %v3507
      %v3509 = vpop.f32.mrb[0].mxu0
      %v3510 = vadd.f32 %v3397, %v3509
      %3511 = vdwg.mxu0
      %3512 = vmatprep.subr.bf16.mxu0 %v3191
      %3513 = vmatpush1.bf16.msra.mxu0 %v3190
      %3514 = vmatprep.subr.bf16.mxu0 %v3193
      %3515 = vmatpush1.bf16.msra.mxu0 %v3192
      %3516 = vmatprep.subr.bf16.mxu0 %v3195
      %3517 = vmatpush1.bf16.msra.mxu0 %v3194
      %3518 = vmatprep.subr.bf16.mxu0 %v3197
      %3519 = vmatpush1.bf16.msra.mxu0 %v3196
      %3520 = vmatprep.subr.bf16.mxu0 %v3199
      %3521 = vmatpush1.bf16.msra.mxu0 %v3198
      %3522 = vmatprep.subr.bf16.mxu0 %v3201
      %3523 = vmatpush1.bf16.msra.mxu0 %v3200
      %3524 = vmatprep.subr.bf16.mxu0 %v3203
      %3525 = vmatpush1.bf16.msra.mxu0 %v3202
      %3526 = vmatprep.subr.bf16.mxu0 %v3205
      %3527 = vmatpush1.bf16.msra.mxu0 %v3204
      %3528 = vmatprep.subr.bf16.mxu0 0
      %3529 = vmatpush1.bf16.msra.mxu0 0
      %3530 = vmatprep.subr.bf16.mxu0 0
      %3531 = vmatpush1.bf16.msra.mxu0 0
      %3532 = vmatprep.subr.bf16.mxu0 0
      %3533 = vmatpush1.bf16.msra.mxu0 0
      %3534 = vmatprep.subr.bf16.mxu0 0
      %3535 = vmatpush1.bf16.msra.mxu0 0
      %3536 = vmatprep.subr.bf16.mxu0 0
      %3537 = vmatpush1.bf16.msra.mxu0 0
      %3538 = vmatprep.subr.bf16.mxu0 0
      %3539 = vmatpush1.bf16.msra.mxu0 0
      %3540 = vmatprep.subr.bf16.mxu0 0
      %3541 = vmatpush1.bf16.msra.mxu0 0
      %3542 = vmatprep.subr.bf16.mxu0 0
      %3543 = vmatpush1.bf16.msra.mxu0 0
      %3544 = vmatprep.mubr.bf16.mxu0 0
      %3545 = vmatmul.mubr.bf16.gmra.mrb[0].mxu0 %v2758
      %v3546 = vpop.f32.mrb[0].mxu0
      %v3547 = vadd.f32 %v3434, %v3546
      %v3548 = vpop.f32.mrb[0].mxu0
      %v3549 = vadd.f32 %v3436, %v3548
      %v3550 = vpop.f32.mrb[0].mxu0
      %v3551 = vadd.f32 %v3438, %v3550
      %v3552 = vpop.f32.mrb[0].mxu0
      %v3553 = vadd.f32 %v3440, %v3552
      %3554 = vmatprep.mubr.bf16.mxu0 0
      %3555 = vmatmul.mubr.bf16.gmra.mrb[0].mxu0 %v2763
      %v3556 = vpop.f32.mrb[0].mxu0
      %v3557 = vadd.f32 %v3444, %v3556
      %v3558 = vpop.f32.mrb[0].mxu0
      %v3559 = vadd.f32 %v3446, %v3558
      %v3560 = vpop.f32.mrb[0].mxu0
      %v3561 = vadd.f32 %v3448, %v3560
      %v3562 = vpop.f32.mrb[0].mxu0
      %v3563 = vadd.f32 %v3450, %v3562
      %3564 = vmatprep.mubr.bf16.mxu0 0
      %3565 = vmatmul.mubr.bf16.gmra.mrb[0].mxu0 %v2768
      %v3566 = vpop.f32.mrb[0].mxu0
      %v3567 = vadd.f32 %v3454, %v3566
      %v3568 = vpop.f32.mrb[0].mxu0
      %v3569 = vadd.f32 %v3456, %v3568
      %v3570 = vpop.f32.mrb[0].mxu0
      %v3571 = vadd.f32 %v3458, %v3570
      %v3572 = vpop.f32.mrb[0].mxu0
      %v3573 = vadd.f32 %v3460, %v3572
      %3574 = vmatprep.mubr.bf16.mxu0 0
      %3575 = vmatmul.mubr.bf16.gmra.mrb[0].mxu0 %v2773
      %v3576 = vpop.f32.mrb[0].mxu0
      %v3577 = vadd.f32 %v3464, %v3576
      %v3578 = vpop.f32.mrb[0].mxu0
      %v3579 = vadd.f32 %v3466, %v3578
      %v3580 = vpop.f32.mrb[0].mxu0
      %v3581 = vadd.f32 %v3468, %v3580
      %v3582 = vpop.f32.mrb[0].mxu0
      %v3583 = vadd.f32 %v3470, %v3582
      %3584 = vmatprep.mubr.bf16.mxu0 0
      %3585 = vmatmul.mubr.bf16.gmra.mrb[0].mxu0 %v2778
      %v3586 = vpop.f32.mrb[0].mxu0
      %v3587 = vadd.f32 %v3474, %v3586
      %v3588 = vpop.f32.mrb[0].mxu0
      %v3589 = vadd.f32 %v3476, %v3588
      %v3590 = vpop.f32.mrb[0].mxu0
      %v3591 = vadd.f32 %v3478, %v3590
      %v3592 = vpop.f32.mrb[0].mxu0
      %v3593 = vadd.f32 %v3480, %v3592
      %3594 = vmatprep.mubr.bf16.mxu0 0
      %3595 = vmatmul.mubr.bf16.gmra.mrb[0].mxu0 %v2783
      %v3596 = vpop.f32.mrb[0].mxu0
      %v3597 = vadd.f32 %v3484, %v3596
      %v3598 = vpop.f32.mrb[0].mxu0
      %v3599 = vadd.f32 %v3486, %v3598
      %v3600 = vpop.f32.mrb[0].mxu0
      %v3601 = vadd.f32 %v3488, %v3600
      %v3602 = vpop.f32.mrb[0].mxu0
      %v3603 = vadd.f32 %v3490, %v3602
      %3604 = vmatprep.mubr.bf16.mxu0 0
      %3605 = vmatmul.mubr.bf16.gmra.mrb[0].mxu0 %v2788
      %v3606 = vpop.f32.mrb[0].mxu0
      %v3607 = vadd.f32 %v3494, %v3606
      %v3608 = vpop.f32.mrb[0].mxu0
      %v3609 = vadd.f32 %v3496, %v3608
      %v3610 = vpop.f32.mrb[0].mxu0
      %v3611 = vadd.f32 %v3498, %v3610
      %v3612 = vpop.f32.mrb[0].mxu0
      %v3613 = vadd.f32 %v3500, %v3612
      %3614 = vmatprep.mubr.bf16.mxu0 0
      %3615 = vmatmul.mubr.bf16.gmra.mrb[0].mxu0 %v2793
      %v3616 = vpop.f32.mrb[0].mxu0
      %v3617 = vadd.f32 %v3504, %v3616
      %v3618 = vpop.f32.mrb[0].mxu0
      %v3619 = vadd.f32 %v3506, %v3618
      %v3620 = vpop.f32.mrb[0].mxu0
      %v3621 = vadd.f32 %v3508, %v3620
      %v3622 = vpop.f32.mrb[0].mxu0
      %v3623 = vadd.f32 %v3510, %v3622
      %3624 = vdwg.mxu0
      %v3625 = vmax.f32 %v3547, 0.0
      %v3626 = vmax.f32 %v3549, 0.0
      %v3627 = vmax.f32 %v3551, 0.0
      %v3628 = vmax.f32 %v3553, 0.0
      %v3629 = vmax.f32 %v3557, 0.0
      %v3630 = vmax.f32 %v3559, 0.0
      %v3631 = vmax.f32 %v3561, 0.0
      %v3632 = vmax.f32 %v3563, 0.0
      %v3633 = vmax.f32 %v3567, 0.0
      %v3634 = vmax.f32 %v3569, 0.0
      %v3635 = vmax.f32 %v3571, 0.0
      %v3636 = vmax.f32 %v3573, 0.0
      %v3637 = vmax.f32 %v3577, 0.0
      %v3638 = vmax.f32 %v3579, 0.0
      %v3639 = vmax.f32 %v3581, 0.0
      %v3640 = vmax.f32 %v3583, 0.0
      %v3641 = vmax.f32 %v3587, 0.0
      %v3642 = vmax.f32 %v3589, 0.0
      %v3643 = vmax.f32 %v3591, 0.0
      %v3644 = vmax.f32 %v3593, 0.0
      %v3645 = vmax.f32 %v3597, 0.0
      %v3646 = vmax.f32 %v3599, 0.0
      %v3647 = vmax.f32 %v3601, 0.0
      %v3648 = vmax.f32 %v3603, 0.0
      %v3649 = vmax.f32 %v3607, 0.0
      %v3650 = vmax.f32 %v3609, 0.0
      %v3651 = vmax.f32 %v3611, 0.0
      %v3652 = vmax.f32 %v3613, 0.0
      %v3653 = vmax.f32 %v3617, 0.0
      %v3654 = vmax.f32 %v3619, 0.0
      %v3655 = vmax.f32 %v3621, 0.0
      %v3656 = vmax.f32 %v3623, 0.0
      %v3657 = vpack.c.bf16 %v3627, %v3625
      %v3658 = vpack.c.bf16 %v3628, %v3626
      %v3659 = vpack.c.bf16 %v3631, %v3629
      %v3660 = vpack.c.bf16 %v3632, %v3630
      %v3661 = vpack.c.bf16 %v3635, %v3633
      %v3662 = vpack.c.bf16 %v3636, %v3634
      %v3663 = vpack.c.bf16 %v3639, %v3637
      %v3664 = vpack.c.bf16 %v3640, %v3638
      %v3665 = vpack.c.bf16 %v3643, %v3641
      %v3666 = vpack.c.bf16 %v3644, %v3642
      %v3667 = vpack.c.bf16 %v3647, %v3645
      %v3668 = vpack.c.bf16 %v3648, %v3646
      %v3669 = vpack.c.bf16 %v3651, %v3649
      %v3670 = vpack.c.bf16 %v3652, %v3650
      %v3671 = vpack.c.bf16 %v3655, %v3653
      %v3672 = vpack.c.bf16 %v3656, %v3654
      %v3673 = vld [vmem:[%s7] sm:$0xf]
      %v3674 = vld [vmem:[%s7 + $0x4] sm:$0xf]
      %v3675 = vld [vmem:[%s7 + $0x8] sm:$0xf]
      %v3676 = vld [vmem:[%s7 + $0xc] sm:$0xf]
      %v3677 = vld [vmem:[%s7 + $0x10] sm:$0xf]
      %v3678 = vld [vmem:[%s7 + $0x14] sm:$0xf]
      %v3679 = vld [vmem:[%s7 + $0x18] sm:$0xf]
      %v3680 = vld [vmem:[%s7 + $0x1c] sm:$0xf]
      %v3681 = vld [vmem:[%s7 + $0x20] sm:$0xf]
      %v3682 = vld [vmem:[%s7 + $0x24] sm:$0xf]
      %v3683 = vld [vmem:[%s7 + $0x28] sm:$0xf]
      %v3684 = vld [vmem:[%s7 + $0x2c] sm:$0xf]
      %v3685 = vld [vmem:[%s7 + $0x30] sm:$0xf]
      %v3686 = vld [vmem:[%s7 + $0x34] sm:$0xf]
      %v3687 = vld [vmem:[%s7 + $0x38] sm:$0xf]
      %v3688 = vld [vmem:[%s7 + $0x3c] sm:$0xf]
      %v3689 = vld [vmem:[%s7 + $0x40] sm:$0xf]
      %v3690 = vld [vmem:[%s7 + $0x44] sm:$0xf]
      %v3691 = vld [vmem:[%s7 + $0x48] sm:$0xf]
      %v3692 = vld [vmem:[%s7 + $0x4c] sm:$0xf]
      %v3713 = vunpack.c.l.b16 %v3673
      %v3714 = vunpack.c.l.b16 %v3674
      %v3715 = vunpack.c.l.b16 %v3675
      %v3716 = vunpack.c.l.b16 %v3676
      %v3717 = vunpack.c.l.b16 %v3677
      %v3718 = vunpack.c.l.b16 %v3678
      %v3719 = vunpack.c.l.b16 %v3679
      %v3720 = vunpack.c.l.b16 %v3680
      %v3721 = vunpack.c.l.b16 %v3681
      %v3722 = vunpack.c.l.b16 %v3682
      %v3723 = vunpack.c.l.b16 %v3683
      %v3724 = vunpack.c.l.b16 %v3684
      %v3725 = vunpack.c.l.b16 %v3685
      %v3726 = vunpack.c.l.b16 %v3686
      %v3727 = vunpack.c.l.b16 %v3687
      %v3728 = vunpack.c.l.b16 %v3688
      %v3729 = vunpack.c.l.b16 %v3689
      %v3730 = vunpack.c.l.b16 %v3690
      %v3731 = vunpack.c.l.b16 %v3691
      %v3732 = vunpack.c.l.b16 %v3692
      %v3733 = vpack.c.b16 %v3714, %v3713
      %v3734 = vpack.c.b16 %v3716, %v3715
      %v3735 = vpack.c.b16 %v3718, %v3717
      %v3736 = vpack.c.b16 %v3720, %v3719
      %v3737 = vpack.c.b16 %v3722, %v3721
      %v3738 = vpack.c.b16 %v3724, %v3723
      %v3739 = vpack.c.b16 %v3726, %v3725
      %v3740 = vpack.c.b16 %v3728, %v3727
      %v3741 = vpack.c.b16 %v3730, %v3729
      %v3742 = vpack.c.b16 %v3732, %v3731
      %vm3753 = vcmask 261120
      %v3755 = vsel %vm3753, %v3658, 0
      %v3758 = vsel %vm3753, %v3660, 0
      %v3761 = vsel %vm3753, %v3662, 0
      %v3764 = vsel %vm3753, %v3664, 0
      %v3767 = vsel %vm3753, %v3666, 0
      %v3770 = vsel %vm3753, %v3668, 0
      %v3773 = vsel %vm3753, %v3670, 0
      %v3776 = vsel %vm3753, %v3672, 0
      %3778 = vmatprep.subr.bf16.mxu0 0
      %3779 = vmatpush1.bf16.msra.mxu0 %v3733
      %3780 = vmatprep.subr.bf16.mxu0 0
      %3781 = vmatpush1.bf16.msra.mxu0 %v3734
      %3782 = vmatprep.subr.bf16.mxu0 0
      %3783 = vmatpush1.bf16.msra.mxu0 %v3735
      %3784 = vmatprep.subr.bf16.mxu0 0
      %3785 = vmatpush1.bf16.msra.mxu0 %v3736
      %3786 = vmatprep.subr.bf16.mxu0 0
      %3787 = vmatpush1.bf16.msra.mxu0 %v3737
      %3788 = vmatprep.subr.bf16.mxu0 0
      %3789 = vmatpush1.bf16.msra.mxu0 %v3738
      %3790 = vmatprep.subr.bf16.mxu0 0
      %3791 = vmatpush1.bf16.msra.mxu0 %v3739
      %3792 = vmatprep.subr.bf16.mxu0 0
      %3793 = vmatpush1.bf16.msra.mxu0 %v3740
      %3794 = vmatprep.subr.bf16.mxu0 0
      %3795 = vmatpush1.bf16.msra.mxu0 %v3741
      %3796 = vmatprep.subr.bf16.mxu0 0
      %3797 = vmatpush1.bf16.msra.mxu0 %v3742
      %3798 = vmatprep.subr.bf16.mxu0 0
      %3799 = vmatpush1.bf16.msra.mxu0 0
      %3800 = vmatprep.subr.bf16.mxu0 0
      %3801 = vmatpush1.bf16.msra.mxu0 0
      %3802 = vmatprep.subr.bf16.mxu0 0
      %3803 = vmatpush1.bf16.msra.mxu0 0
      %3804 = vmatprep.subr.bf16.mxu0 0
      %3805 = vmatpush1.bf16.msra.mxu0 0
      %3806 = vmatprep.subr.bf16.mxu0 0
      %3807 = vmatpush1.bf16.msra.mxu0 0
      %3808 = vmatprep.subr.bf16.mxu0 0
      %3809 = vmatpush1.bf16.msra.mxu0 0
      %3810 = vmatprep.mubr.bf16.mxu0 %v3755
      %3811 = vmatmul.mubr.bf16.gmra.mrb[0].mxu0 %v3657
      %v3812 = vpop.f32.mrb[0].mxu0
      %v3813 = vadd.f32 0.0, %v3812
      %v3814 = vpop.f32.mrb[0].mxu0
      %v3815 = vpop.f32.mrb[0].mxu0
      %v3816 = vadd.f32 0.0, %v3815
      %v3817 = vpop.f32.mrb[0].mxu0
      %3818 = vmatprep.mubr.bf16.mxu0 %v3758
      %3819 = vmatmul.mubr.bf16.gmra.mrb[0].mxu0 %v3659
      %v3820 = vpop.f32.mrb[0].mxu0
      %v3821 = vadd.f32 0.0, %v3820
      %v3822 = vpop.f32.mrb[0].mxu0
      %v3823 = vpop.f32.mrb[0].mxu0
      %v3824 = vadd.f32 0.0, %v3823
      %v3825 = vpop.f32.mrb[0].mxu0
      %3826 = vmatprep.mubr.bf16.mxu0 %v3761
      %3827 = vmatmul.mubr.bf16.gmra.mrb[0].mxu0 %v3661
      %v3828 = vpop.f32.mrb[0].mxu0
      %v3829 = vadd.f32 0.0, %v3828
      %v3830 = vpop.f32.mrb[0].mxu0
      %v3831 = vpop.f32.mrb[0].mxu0
      %v3832 = vadd.f32 0.0, %v3831
      %v3833 = vpop.f32.mrb[0].mxu0
      %3834 = vmatprep.mubr.bf16.mxu0 %v3764
      %3835 = vmatmul.mubr.bf16.gmra.mrb[0].mxu0 %v3663
      %v3836 = vpop.f32.mrb[0].mxu0
      %v3837 = vadd.f32 0.0, %v3836
      %v3838 = vpop.f32.mrb[0].mxu0
      %v3839 = vpop.f32.mrb[0].mxu0
      %v3840 = vadd.f32 0.0, %v3839
      %v3841 = vpop.f32.mrb[0].mxu0
      %3842 = vmatprep.mubr.bf16.mxu0 %v3767
      %3843 = vmatmul.mubr.bf16.gmra.mrb[0].mxu0 %v3665
      %v3844 = vpop.f32.mrb[0].mxu0
      %v3845 = vadd.f32 0.0, %v3844
      %v3846 = vpop.f32.mrb[0].mxu0
      %v3847 = vpop.f32.mrb[0].mxu0
      %v3848 = vadd.f32 0.0, %v3847
      %v3849 = vpop.f32.mrb[0].mxu0
      %3850 = vmatprep.mubr.bf16.mxu0 %v3770
      %3851 = vmatmul.mubr.bf16.gmra.mrb[0].mxu0 %v3667
      %v3852 = vpop.f32.mrb[0].mxu0
      %v3853 = vadd.f32 0.0, %v3852
      %v3854 = vpop.f32.mrb[0].mxu0
      %v3855 = vpop.f32.mrb[0].mxu0
      %v3856 = vadd.f32 0.0, %v3855
      %v3857 = vpop.f32.mrb[0].mxu0
      %3858 = vmatprep.mubr.bf16.mxu0 %v3773
      %3859 = vmatmul.mubr.bf16.gmra.mrb[0].mxu0 %v3669
      %v3860 = vpop.f32.mrb[0].mxu0
      %v3861 = vadd.f32 0.0, %v3860
      %v3862 = vpop.f32.mrb[0].mxu0
      %v3863 = vpop.f32.mrb[0].mxu0
      %v3864 = vadd.f32 0.0, %v3863
      %v3865 = vpop.f32.mrb[0].mxu0
      %3866 = vmatprep.mubr.bf16.mxu0 %v3776
      %3867 = vmatmul.mubr.bf16.gmra.mrb[0].mxu0 %v3671
      %v3868 = vpop.f32.mrb[0].mxu0
      %v3869 = vadd.f32 0.0, %v3868
      %v3870 = vpop.f32.mrb[0].mxu0
      %v3871 = vpop.f32.mrb[0].mxu0
      %v3872 = vadd.f32 0.0, %v3871
      %v3873 = vpop.f32.mrb[0].mxu0
      %3874 = vdwg.mxu0
      %v3875 = vld [vmem:[%s8] sm:$0xf]
      %v3876 = vld [vmem:[%s8 + $0x4] sm:$0xf]
      %v3877 = vld [vmem:[%s8 + $0x8] sm:$0xf]
      %v3878 = vld [vmem:[%s8 + $0xc] sm:$0xf]
      %v3879 = vld [vmem:[%s8 + $0x10] sm:$0xf]
      %v3880 = vld [vmem:[%s8 + $0x14] sm:$0xf]
      %v3881 = vld [vmem:[%s8 + $0x18] sm:$0xf]
      %v3882 = vld [vmem:[%s8 + $0x1c] sm:$0xf]
      %v3883 = vld [vmem:[%s8 + $0x20] sm:$0xf]
      %v3884 = vld [vmem:[%s8 + $0x24] sm:$0xf]
      %v3885 = vld [vmem:[%s8 + $0x28] sm:$0xf]
      %v3886 = vld [vmem:[%s8 + $0x2c] sm:$0xf]
      %v3887 = vld [vmem:[%s8 + $0x30] sm:$0xf]
      %v3888 = vld [vmem:[%s8 + $0x34] sm:$0xf]
      %v3889 = vld [vmem:[%s8 + $0x38] sm:$0xf]
      %v3890 = vld [vmem:[%s8 + $0x3c] sm:$0xf]
      %v3891 = vld [vmem:[%s8 + $0x40] sm:$0xf]
      %v3892 = vld [vmem:[%s8 + $0x44] sm:$0xf]
      %v3893 = vld [vmem:[%s8 + $0x48] sm:$0xf]
      %v3894 = vld [vmem:[%s8 + $0x4c] sm:$0xf]
      %v3915 = vunpack.c.l.b16 %v3875
      %v3916 = vunpack.c.l.b16 %v3876
      %v3917 = vunpack.c.l.b16 %v3877
      %v3918 = vunpack.c.l.b16 %v3878
      %v3919 = vunpack.c.l.b16 %v3879
      %v3920 = vunpack.c.l.b16 %v3880
      %v3921 = vunpack.c.l.b16 %v3881
      %v3922 = vunpack.c.l.b16 %v3882
      %v3923 = vunpack.c.l.b16 %v3883
      %v3924 = vunpack.c.l.b16 %v3884
      %v3925 = vunpack.c.l.b16 %v3885
      %v3926 = vunpack.c.l.b16 %v3886
      %v3927 = vunpack.c.l.b16 %v3887
      %v3928 = vunpack.c.l.b16 %v3888
      %v3929 = vunpack.c.l.b16 %v3889
      %v3930 = vunpack.c.l.b16 %v3890
      %v3931 = vunpack.c.l.b16 %v3891
      %v3932 = vunpack.c.l.b16 %v3892
      %v3933 = vunpack.c.l.b16 %v3893
      %v3934 = vunpack.c.l.b16 %v3894
      %v3935 = vpack.c.b16 %v3916, %v3915
      %v3936 = vpack.c.b16 %v3918, %v3917
      %v3937 = vpack.c.b16 %v3920, %v3919
      %v3938 = vpack.c.b16 %v3922, %v3921
      %v3939 = vpack.c.b16 %v3924, %v3923
      %v3940 = vpack.c.b16 %v3926, %v3925
      %v3941 = vpack.c.b16 %v3928, %v3927
      %v3942 = vpack.c.b16 %v3930, %v3929
      %v3943 = vpack.c.b16 %v3932, %v3931
      %v3944 = vpack.c.b16 %v3934, %v3933
      %3955 = vmatprep.subr.bf16.mxu0 0
      %3956 = vmatpush1.bf16.msra.mxu0 %v3935
      %3957 = vmatprep.subr.bf16.mxu0 0
      %3958 = vmatpush1.bf16.msra.mxu0 %v3936
      %3959 = vmatprep.subr.bf16.mxu0 0
      %3960 = vmatpush1.bf16.msra.mxu0 %v3937
      %3961 = vmatprep.subr.bf16.mxu0 0
      %3962 = vmatpush1.bf16.msra.mxu0 %v3938
      %3963 = vmatprep.subr.bf16.mxu0 0
      %3964 = vmatpush1.bf16.msra.mxu0 %v3939
      %3965 = vmatprep.subr.bf16.mxu0 0
      %3966 = vmatpush1.bf16.msra.mxu0 %v3940
      %3967 = vmatprep.subr.bf16.mxu0 0
      %3968 = vmatpush1.bf16.msra.mxu0 %v3941
      %3969 = vmatprep.subr.bf16.mxu0 0
      %3970 = vmatpush1.bf16.msra.mxu0 %v3942
      %3971 = vmatprep.subr.bf16.mxu0 0
      %3972 = vmatpush1.bf16.msra.mxu0 %v3943
      %3973 = vmatprep.subr.bf16.mxu0 0
      %3974 = vmatpush1.bf16.msra.mxu0 %v3944
      %3975 = vmatprep.subr.bf16.mxu0 0
      %3976 = vmatpush1.bf16.msra.mxu0 0
      %3977 = vmatprep.subr.bf16.mxu0 0
      %3978 = vmatpush1.bf16.msra.mxu0 0
      %3979 = vmatprep.subr.bf16.mxu0 0
      %3980 = vmatpush1.bf16.msra.mxu0 0
      %3981 = vmatprep.subr.bf16.mxu0 0
      %3982 = vmatpush1.bf16.msra.mxu0 0
      %3983 = vmatprep.subr.bf16.mxu0 0
      %3984 = vmatpush1.bf16.msra.mxu0 0
      %3985 = vmatprep.subr.bf16.mxu0 0
      %3986 = vmatpush1.bf16.msra.mxu0 0
      %3987 = vmatprep.mubr.bf16.mxu0 %v3755
      %3988 = vmatmul.mubr.bf16.gmra.mrb[0].mxu0 %v3657
      %v3989 = vpop.f32.mrb[0].mxu0
      %v3990 = vadd.f32 0.0, %v3989
      %v3991 = vpop.f32.mrb[0].mxu0
      %v3992 = vpop.f32.mrb[0].mxu0
      %v3993 = vadd.f32 0.0, %v3992
      %v3994 = vpop.f32.mrb[0].mxu0
      %3995 = vmatprep.mubr.bf16.mxu0 %v3758
      %3996 = vmatmul.mubr.bf16.gmra.mrb[0].mxu0 %v3659
      %v3997 = vpop.f32.mrb[0].mxu0
      %v3998 = vadd.f32 0.0, %v3997
      %v3999 = vpop.f32.mrb[0].mxu0
      %v4000 = vpop.f32.mrb[0].mxu0
      %v4001 = vadd.f32 0.0, %v4000
      %v4002 = vpop.f32.mrb[0].mxu0
      %4003 = vmatprep.mubr.bf16.mxu0 %v3761
      %4004 = vmatmul.mubr.bf16.gmra.mrb[0].mxu0 %v3661
      %v4005 = vpop.f32.mrb[0].mxu0
      %v4006 = vadd.f32 0.0, %v4005
      %v4007 = vpop.f32.mrb[0].mxu0
      %v4008 = vpop.f32.mrb[0].mxu0
      %v4009 = vadd.f32 0.0, %v4008
      %v4010 = vpop.f32.mrb[0].mxu0
      %4011 = vmatprep.mubr.bf16.mxu0 %v3764
      %4012 = vmatmul.mubr.bf16.gmra.mrb[0].mxu0 %v3663
      %v4013 = vpop.f32.mrb[0].mxu0
      %v4014 = vadd.f32 0.0, %v4013
      %v4015 = vpop.f32.mrb[0].mxu0
      %v4016 = vpop.f32.mrb[0].mxu0
      %v4017 = vadd.f32 0.0, %v4016
      %v4018 = vpop.f32.mrb[0].mxu0
      %4019 = vmatprep.mubr.bf16.mxu0 %v3767
      %4020 = vmatmul.mubr.bf16.gmra.mrb[0].mxu0 %v3665
      %v4021 = vpop.f32.mrb[0].mxu0
      %v4022 = vadd.f32 0.0, %v4021
      %v4023 = vpop.f32.mrb[0].mxu0
      %v4024 = vpop.f32.mrb[0].mxu0
      %v4025 = vadd.f32 0.0, %v4024
      %v4026 = vpop.f32.mrb[0].mxu0
      %4027 = vmatprep.mubr.bf16.mxu0 %v3770
      %4028 = vmatmul.mubr.bf16.gmra.mrb[0].mxu0 %v3667
      %v4029 = vpop.f32.mrb[0].mxu0
      %v4030 = vadd.f32 0.0, %v4029
      %v4031 = vpop.f32.mrb[0].mxu0
      %v4032 = vpop.f32.mrb[0].mxu0
      %v4033 = vadd.f32 0.0, %v4032
      %v4034 = vpop.f32.mrb[0].mxu0
      %4035 = vmatprep.mubr.bf16.mxu0 %v3773
      %4036 = vmatmul.mubr.bf16.gmra.mrb[0].mxu0 %v3669
      %v4037 = vpop.f32.mrb[0].mxu0
      %v4038 = vadd.f32 0.0, %v4037
      %v4039 = vpop.f32.mrb[0].mxu0
      %v4040 = vpop.f32.mrb[0].mxu0
      %v4041 = vadd.f32 0.0, %v4040
      %v4042 = vpop.f32.mrb[0].mxu0
      %4043 = vmatprep.mubr.bf16.mxu0 %v3776
      %4044 = vmatmul.mubr.bf16.gmra.mrb[0].mxu0 %v3671
      %v4045 = vpop.f32.mrb[0].mxu0
      %v4046 = vadd.f32 0.0, %v4045
      %v4047 = vpop.f32.mrb[0].mxu0
      %v4048 = vpop.f32.mrb[0].mxu0
      %v4049 = vadd.f32 0.0, %v4048
      %v4050 = vpop.f32.mrb[0].mxu0
      %4051 = vdwg.mxu0
      %v4052 = vmax.f32 %v3813, %v3990
      %v4053 = vmax.f32 %v3816, %v3993
      %v4054 = vmax.f32 %v3821, %v3998
      %v4055 = vmax.f32 %v3824, %v4001
      %v4056 = vmax.f32 %v3829, %v4006
      %v4057 = vmax.f32 %v3832, %v4009
      %v4058 = vmax.f32 %v3837, %v4014
      %v4059 = vmax.f32 %v3840, %v4017
      %v4060 = vmax.f32 %v3845, %v4022
      %v4061 = vmax.f32 %v3848, %v4025
      %v4062 = vmax.f32 %v3853, %v4030
      %v4063 = vmax.f32 %v3856, %v4033
      %v4064 = vmax.f32 %v3861, %v4038
      %v4065 = vmax.f32 %v3864, %v4041
      %v4066 = vmax.f32 %v3869, %v4046
      %v4067 = vmax.f32 %v3872, %v4049
      %4068 = vst [vmem:[#allocation5] sm:$0xff] %v4052
      %4069 = vst [vmem:[#allocation5 + $0x8] sm:$0xff] %v4053
      %4070 = vst [vmem:[#allocation5 + $0x10] sm:$0xff] %v4054
      %4071 = vst [vmem:[#allocation5 + $0x18] sm:$0xff] %v4055
      %4072 = vst [vmem:[#allocation5 + $0x20] sm:$0xff] %v4056
      %4073 = vst [vmem:[#allocation5 + $0x28] sm:$0xff] %v4057
      %4074 = vst [vmem:[#allocation5 + $0x30] sm:$0xff] %v4058
      %4075 = vst [vmem:[#allocation5 + $0x38] sm:$0xff] %v4059
      %4076 = vst [vmem:[#allocation5 + $0x40] sm:$0xff] %v4060
      %4077 = vst [vmem:[#allocation5 + $0x48] sm:$0xff] %v4061
      %4078 = vst [vmem:[#allocation5 + $0x50] sm:$0xff] %v4062
      %4079 = vst [vmem:[#allocation5 + $0x58] sm:$0xff] %v4063
      %4080 = vst [vmem:[#allocation5 + $0x60] sm:$0xff] %v4064
      %4081 = vst [vmem:[#allocation5 + $0x68] sm:$0xff] %v4065
      %4082 = vst [vmem:[#allocation5 + $0x70] sm:$0xff] %v4066
      %4083 = vst [vmem:[#allocation5 + $0x78] sm:$0xff] %v4067
      %v4084 = vld [vmem:[#allocation5] ss:$2 sm:$0xff]
      %s4085 = scalar_lea.vmem [#allocation5], 16
      %v4086 = vld [vmem:[%s4085] ss:$2 sm:$0xff]
      %s4087 = scalar_lea.vmem [#allocation5], 32
      %v4088 = vld [vmem:[%s4087] ss:$2 sm:$0xff]
      %s4089 = scalar_lea.vmem [#allocation5], 48
      %v4090 = vld [vmem:[%s4089] ss:$2 sm:$0xff]
      %s4091 = scalar_lea.vmem [#allocation5], 64
      %v4092 = vld [vmem:[%s4091] ss:$2 sm:$0xff]
      %s4093 = scalar_lea.vmem [#allocation5], 80
      %v4094 = vld [vmem:[%s4093] ss:$2 sm:$0xff]
      %s4095 = scalar_lea.vmem [#allocation5], 96
      %v4096 = vld [vmem:[%s4095] ss:$2 sm:$0xff]
      %s4097 = scalar_lea.vmem [#allocation5], 112
      %v4098 = vld [vmem:[%s4097] ss:$2 sm:$0xff]
      %s4099 = scalar_lea.vmem [#allocation5], 1
      %v4100 = vld [vmem:[%s4099] ss:$2 sm:$0xff]
      %s4101 = scalar_lea.vmem [#allocation5], 17
      %v4102 = vld [vmem:[%s4101] ss:$2 sm:$0xff]
      %s4103 = scalar_lea.vmem [#allocation5], 33
      %v4104 = vld [vmem:[%s4103] ss:$2 sm:$0xff]
      %s4105 = scalar_lea.vmem [#allocation5], 49
      %v4106 = vld [vmem:[%s4105] ss:$2 sm:$0xff]
      %s4107 = scalar_lea.vmem [#allocation5], 65
      %v4108 = vld [vmem:[%s4107] ss:$2 sm:$0xff]
      %s4109 = scalar_lea.vmem [#allocation5], 81
      %v4110 = vld [vmem:[%s4109] ss:$2 sm:$0xff]
      %s4111 = scalar_lea.vmem [#allocation5], 97
      %v4112 = vld [vmem:[%s4111] ss:$2 sm:$0xff]
      %s4113 = scalar_lea.vmem [#allocation5], 113
      %v4114 = vld [vmem:[%s4113] ss:$2 sm:$0xff]
      %v4115 = vmax.f32 %v4084, %v4100
      %v4116 = vmax.f32 %v4086, %v4102
      %v4117 = vmax.f32 %v4088, %v4104
      %v4118 = vmax.f32 %v4090, %v4106
      %v4119 = vmax.f32 %v4092, %v4108
      %v4120 = vmax.f32 %v4094, %v4110
      %v4121 = vmax.f32 %v4096, %v4112
      %v4122 = vmax.f32 %v4098, %v4114
      %4123 = vst [vmem:[#allocation6] sm:$0xff] %v4115
      %4124 = vst [vmem:[#allocation6 + $0x8] sm:$0xff] %v4116
      %4125 = vst [vmem:[#allocation6 + $0x10] sm:$0xff] %v4117
      %4126 = vst [vmem:[#allocation6 + $0x18] sm:$0xff] %v4118
      %4127 = vst [vmem:[#allocation6 + $0x20] sm:$0xff] %v4119
      %4128 = vst [vmem:[#allocation6 + $0x28] sm:$0xff] %v4120
      %4129 = vst [vmem:[#allocation6 + $0x30] sm:$0xff] %v4121
      %4130 = vst [vmem:[#allocation6 + $0x38] sm:$0xff] %v4122
      %v4131 = vld [vmem:[#allocation6] ss:$8 sm:$0xf]
      %v4132 = vld [vmem:[#allocation6] ss:$8 sm:$0xf0]
      %v4133 = vor.u32 %v4131, %v4132
      %s4134 = scalar_lea.vmem [#allocation6], 1
      %v4135 = vld [vmem:[%s4134] ss:$8 sm:$0xf]
      %v4136 = vld [vmem:[%s4134] ss:$8 sm:$0xf0]
      %v4137 = vor.u32 %v4135, %v4136
      %s4138 = scalar_lea.vmem [#allocation6], 2
      %v4139 = vld [vmem:[%s4138] ss:$8 sm:$0xf]
      %v4140 = vld [vmem:[%s4138] ss:$8 sm:$0xf0]
      %v4141 = vor.u32 %v4139, %v4140
      %s4142 = scalar_lea.vmem [#allocation6], 3
      %v4143 = vld [vmem:[%s4142] ss:$8 sm:$0xf]
      %v4144 = vld [vmem:[%s4142] ss:$8 sm:$0xf0]
      %v4145 = vor.u32 %v4143, %v4144
      %s4146 = scalar_lea.vmem [#allocation6], 4
      %v4147 = vld [vmem:[%s4146] ss:$8 sm:$0xf]
      %v4148 = vld [vmem:[%s4146] ss:$8 sm:$0xf0]
      %v4149 = vor.u32 %v4147, %v4148
      %v4150 = vpack.c.bf16 %v4133, %v4133
      %v4151 = vpack.c.bf16 %v4137, %v4137
      %v4152 = vpack.c.bf16 %v4141, %v4141
      %v4153 = vpack.c.bf16 %v4145, %v4145
      %v4154 = vpack.c.bf16 %v4149, %v4149
      %v4155 = vld [vmem:[%s9] sm:$0xf]
      %v4156 = vld [vmem:[%s9 + $0x4] sm:$0xf]
      %v4157 = vld [vmem:[%s9 + $0x8] sm:$0xf]
      %v4158 = vld [vmem:[%s9 + $0xc] sm:$0xf]
      %v4159 = vld [vmem:[%s9 + $0x10] sm:$0xf]
      %v4160 = vld [vmem:[%s9 + $0x14] sm:$0xf]
      %v4161 = vld [vmem:[%s9 + $0x18] sm:$0xf]
      %v4162 = vld [vmem:[%s9 + $0x1c] sm:$0xf]
      %v4163 = vld [vmem:[%s9 + $0x20] sm:$0xf]
      %v4164 = vld [vmem:[%s9 + $0x24] sm:$0xf]
      %v4165 = vld [vmem:[%s9 + $0x28] sm:$0xf]
      %v4166 = vld [vmem:[%s9 + $0x2c] sm:$0xf]
      %v4167 = vld [vmem:[%s9 + $0x30] sm:$0xf]
      %v4168 = vld [vmem:[%s9 + $0x34] sm:$0xf]
      %v4169 = vld [vmem:[%s9 + $0x38] sm:$0xf]
      %v4170 = vld [vmem:[%s9 + $0x3c] sm:$0xf]
      %v4171 = vld [vmem:[%s9 + $0x40] sm:$0xf]
      %v4172 = vld [vmem:[%s9 + $0x44] sm:$0xf]
      %v4173 = vld [vmem:[%s9 + $0x48] sm:$0xf]
      %v4174 = vld [vmem:[%s9 + $0x4c] sm:$0xf]
      %v4175 = vld [vmem:[%s9 + $0x50] sm:$0xf]
      %v4176 = vld [vmem:[%s9 + $0x54] sm:$0xf]
      %v4177 = vld [vmem:[%s9 + $0x58] sm:$0xf]
      %v4178 = vld [vmem:[%s9 + $0x5c] sm:$0xf]
      %v4179 = vld [vmem:[%s9 + $0x60] sm:$0xf]
      %v4180 = vld [vmem:[%s9 + $0x64] sm:$0xf]
      %v4181 = vld [vmem:[%s9 + $0x68] sm:$0xf]
      %v4182 = vld [vmem:[%s9 + $0x6c] sm:$0xf]
      %v4183 = vld [vmem:[%s9 + $0x70] sm:$0xf]
      %v4184 = vld [vmem:[%s9 + $0x74] sm:$0xf]
      %v4185 = vld [vmem:[%s9 + $0x78] sm:$0xf]
      %v4186 = vld [vmem:[%s9 + $0x7c] sm:$0xf]
      %v4187 = vld [vmem:[%s9 + $0x80] sm:$0xf]
      %v4188 = vld [vmem:[%s9 + $0x84] sm:$0xf]
      %v4189 = vld [vmem:[%s9 + $0x88] sm:$0xf]
      %v4190 = vld [vmem:[%s9 + $0x8c] sm:$0xf]
      %v4191 = vld [vmem:[%s9 + $0x90] sm:$0xf]
      %v4192 = vld [vmem:[%s9 + $0x94] sm:$0xf]
      %v4193 = vld [vmem:[%s9 + $0x98] sm:$0xf]
      %v4194 = vld [vmem:[%s9 + $0x9c] sm:$0xf]
      %v4195 = vld [vmem:[%s9 + $0xa0] sm:$0xf]
      %v4196 = vld [vmem:[%s9 + $0xa4] sm:$0xf]
      %v4197 = vld [vmem:[%s9 + $0xa8] sm:$0xf]
      %v4198 = vld [vmem:[%s9 + $0xac] sm:$0xf]
      %v4199 = vld [vmem:[%s9 + $0xb0] sm:$0xf]
      %v4200 = vld [vmem:[%s9 + $0xb4] sm:$0xf]
      %v4201 = vld [vmem:[%s9 + $0xb8] sm:$0xf]
      %v4202 = vld [vmem:[%s9 + $0xbc] sm:$0xf]
      %v4203 = vld [vmem:[%s9 + $0xc0] sm:$0xf]
      %v4204 = vld [vmem:[%s9 + $0xc4] sm:$0xf]
      %v4205 = vld [vmem:[%s9 + $0xc8] sm:$0xf]
      %v4206 = vld [vmem:[%s9 + $0xcc] sm:$0xf]
      %v4207 = vld [vmem:[%s9 + $0xd0] sm:$0xf]
      %v4208 = vld [vmem:[%s9 + $0xd4] sm:$0xf]
      %v4209 = vld [vmem:[%s9 + $0xd8] sm:$0xf]
      %v4210 = vld [vmem:[%s9 + $0xdc] sm:$0xf]
      %v4211 = vld [vmem:[%s9 + $0xe0] sm:$0xf]
      %v4212 = vld [vmem:[%s9 + $0xe4] sm:$0xf]
      %v4213 = vld [vmem:[%s9 + $0xe8] sm:$0xf]
      %v4214 = vld [vmem:[%s9 + $0xec] sm:$0xf]
      %v4215 = vld [vmem:[%s9 + $0xf0] sm:$0xf]
      %v4216 = vld [vmem:[%s9 + $0xf4] sm:$0xf]
      %v4217 = vld [vmem:[%s9 + $0xf8] sm:$0xf]
      %v4218 = vld [vmem:[%s9 + $0xfc] sm:$0xf]
      %v4219 = vld [vmem:[%s9 + $0x100] sm:$0xf]
      %v4220 = vld [vmem:[%s9 + $0x104] sm:$0xf]
      %v4221 = vld [vmem:[%s9 + $0x108] sm:$0xf]
      %v4222 = vld [vmem:[%s9 + $0x10c] sm:$0xf]
      %v4223 = vld [vmem:[%s9 + $0x110] sm:$0xf]
      %v4224 = vld [vmem:[%s9 + $0x114] sm:$0xf]
      %v4225 = vld [vmem:[%s9 + $0x118] sm:$0xf]
      %v4226 = vld [vmem:[%s9 + $0x11c] sm:$0xf]
      %v4227 = vld [vmem:[%s9 + $0x120] sm:$0xf]
      %v4228 = vld [vmem:[%s9 + $0x124] sm:$0xf]
      %v4229 = vld [vmem:[%s9 + $0x128] sm:$0xf]
      %v4230 = vld [vmem:[%s9 + $0x12c] sm:$0xf]
      %v4231 = vld [vmem:[%s9 + $0x130] sm:$0xf]
      %v4232 = vld [vmem:[%s9 + $0x134] sm:$0xf]
      %v4233 = vld [vmem:[%s9 + $0x138] sm:$0xf]
      %v4234 = vld [vmem:[%s9 + $0x13c] sm:$0xf]
      %v4235 = vld [vmem:[%s10] sm:$0x1]
      %v4237 = vlaneseq
      %v4238 = vshrl.u32 %v4237, 7
      %v4239 = vsub.s32 0, %v4238
      %v4240 = vrot.slane %v4235, %v4239
      %v4322 = vunpack.c.l.b16 %v4155
      %v4323 = vunpack.c.l.b16 %v4156
      %v4324 = vunpack.c.l.b16 %v4157
      %v4325 = vunpack.c.l.b16 %v4158
      %v4326 = vunpack.c.l.b16 %v4159
      %v4327 = vunpack.c.l.b16 %v4160
      %v4328 = vunpack.c.l.b16 %v4161
      %v4329 = vunpack.c.l.b16 %v4162
      %v4330 = vunpack.c.l.b16 %v4163
      %v4331 = vunpack.c.l.b16 %v4164
      %v4332 = vunpack.c.l.b16 %v4165
      %v4333 = vunpack.c.l.b16 %v4166
      %v4334 = vunpack.c.l.b16 %v4167
      %v4335 = vunpack.c.l.b16 %v4168
      %v4336 = vunpack.c.l.b16 %v4169
      %v4337 = vunpack.c.l.b16 %v4170
      %v4338 = vunpack.c.l.b16 %v4171
      %v4339 = vunpack.c.l.b16 %v4172
      %v4340 = vunpack.c.l.b16 %v4173
      %v4341 = vunpack.c.l.b16 %v4174
      %v4342 = vunpack.c.l.b16 %v4175
      %v4343 = vunpack.c.l.b16 %v4176
      %v4344 = vunpack.c.l.b16 %v4177
      %v4345 = vunpack.c.l.b16 %v4178
      %v4346 = vunpack.c.l.b16 %v4179
      %v4347 = vunpack.c.l.b16 %v4180
      %v4348 = vunpack.c.l.b16 %v4181
      %v4349 = vunpack.c.l.b16 %v4182
      %v4350 = vunpack.c.l.b16 %v4183
      %v4351 = vunpack.c.l.b16 %v4184
      %v4352 = vunpack.c.l.b16 %v4185
      %v4353 = vunpack.c.l.b16 %v4186
      %v4354 = vunpack.c.l.b16 %v4187
      %v4355 = vunpack.c.l.b16 %v4188
      %v4356 = vunpack.c.l.b16 %v4189
      %v4357 = vunpack.c.l.b16 %v4190
      %v4358 = vunpack.c.l.b16 %v4191
      %v4359 = vunpack.c.l.b16 %v4192
      %v4360 = vunpack.c.l.b16 %v4193
      %v4361 = vunpack.c.l.b16 %v4194
      %v4362 = vunpack.c.l.b16 %v4195
      %v4363 = vunpack.c.l.b16 %v4196
      %v4364 = vunpack.c.l.b16 %v4197
      %v4365 = vunpack.c.l.b16 %v4198
      %v4366 = vunpack.c.l.b16 %v4199
      %v4367 = vunpack.c.l.b16 %v4200
      %v4368 = vunpack.c.l.b16 %v4201
      %v4369 = vunpack.c.l.b16 %v4202
      %v4370 = vunpack.c.l.b16 %v4203
      %v4371 = vunpack.c.l.b16 %v4204
      %v4372 = vunpack.c.l.b16 %v4205
      %v4373 = vunpack.c.l.b16 %v4206
      %v4374 = vunpack.c.l.b16 %v4207
      %v4375 = vunpack.c.l.b16 %v4208
      %v4376 = vunpack.c.l.b16 %v4209
      %v4377 = vunpack.c.l.b16 %v4210
      %v4378 = vunpack.c.l.b16 %v4211
      %v4379 = vunpack.c.l.b16 %v4212
      %v4380 = vunpack.c.l.b16 %v4213
      %v4381 = vunpack.c.l.b16 %v4214
      %v4382 = vunpack.c.l.b16 %v4215
      %v4383 = vunpack.c.l.b16 %v4216
      %v4384 = vunpack.c.l.b16 %v4217
      %v4385 = vunpack.c.l.b16 %v4218
      %v4386 = vunpack.c.l.b16 %v4219
      %v4387 = vunpack.c.l.b16 %v4220
      %v4388 = vunpack.c.l.b16 %v4221
      %v4389 = vunpack.c.l.b16 %v4222
      %v4390 = vunpack.c.l.b16 %v4223
      %v4391 = vunpack.c.l.b16 %v4224
      %v4392 = vunpack.c.l.b16 %v4225
      %v4393 = vunpack.c.l.b16 %v4226
      %v4394 = vunpack.c.l.b16 %v4227
      %v4395 = vunpack.c.l.b16 %v4228
      %v4396 = vunpack.c.l.b16 %v4229
      %v4397 = vunpack.c.l.b16 %v4230
      %v4398 = vunpack.c.l.b16 %v4231
      %v4399 = vunpack.c.l.b16 %v4232
      %v4400 = vunpack.c.l.b16 %v4233
      %v4401 = vunpack.c.l.b16 %v4234
      %v4402 = vpack.c.b16 %v4323, %v4322
      %v4403 = vpack.c.b16 %v4325, %v4324
      %v4404 = vpack.c.b16 %v4327, %v4326
      %v4405 = vpack.c.b16 %v4329, %v4328
      %v4406 = vpack.c.b16 %v4331, %v4330
      %v4407 = vpack.c.b16 %v4333, %v4332
      %v4408 = vpack.c.b16 %v4335, %v4334
      %v4409 = vpack.c.b16 %v4337, %v4336
      %v4410 = vpack.c.b16 %v4339, %v4338
      %v4411 = vpack.c.b16 %v4341, %v4340
      %v4412 = vpack.c.b16 %v4343, %v4342
      %v4413 = vpack.c.b16 %v4345, %v4344
      %v4414 = vpack.c.b16 %v4347, %v4346
      %v4415 = vpack.c.b16 %v4349, %v4348
      %v4416 = vpack.c.b16 %v4351, %v4350
      %v4417 = vpack.c.b16 %v4353, %v4352
      %v4418 = vpack.c.b16 %v4355, %v4354
      %v4419 = vpack.c.b16 %v4357, %v4356
      %v4420 = vpack.c.b16 %v4359, %v4358
      %v4421 = vpack.c.b16 %v4361, %v4360
      %v4422 = vpack.c.b16 %v4363, %v4362
      %v4423 = vpack.c.b16 %v4365, %v4364
      %v4424 = vpack.c.b16 %v4367, %v4366
      %v4425 = vpack.c.b16 %v4369, %v4368
      %v4426 = vpack.c.b16 %v4371, %v4370
      %v4427 = vpack.c.b16 %v4373, %v4372
      %v4428 = vpack.c.b16 %v4375, %v4374
      %v4429 = vpack.c.b16 %v4377, %v4376
      %v4430 = vpack.c.b16 %v4379, %v4378
      %v4431 = vpack.c.b16 %v4381, %v4380
      %v4432 = vpack.c.b16 %v4383, %v4382
      %v4433 = vpack.c.b16 %v4385, %v4384
      %v4434 = vpack.c.b16 %v4387, %v4386
      %v4435 = vpack.c.b16 %v4389, %v4388
      %v4436 = vpack.c.b16 %v4391, %v4390
      %v4437 = vpack.c.b16 %v4393, %v4392
      %v4438 = vpack.c.b16 %v4395, %v4394
      %v4439 = vpack.c.b16 %v4397, %v4396
      %v4440 = vpack.c.b16 %v4399, %v4398
      %v4441 = vpack.c.b16 %v4401, %v4400
      %4482 = vmatprep.subr.bf16.mxu0 0
      %4483 = vmatpush1.bf16.msra.mxu0 %v4402
      %4484 = vmatprep.subr.bf16.mxu0 0
      %4485 = vmatpush1.bf16.msra.mxu0 %v4403
      %4486 = vmatprep.subr.bf16.mxu0 0
      %4487 = vmatpush1.bf16.msra.mxu0 %v4404
      %4488 = vmatprep.subr.bf16.mxu0 0
      %4489 = vmatpush1.bf16.msra.mxu0 %v4405
      %4490 = vmatprep.subr.bf16.mxu0 0
      %4491 = vmatpush1.bf16.msra.mxu0 %v4406
      %4492 = vmatprep.subr.bf16.mxu0 0
      %4493 = vmatpush1.bf16.msra.mxu0 %v4407
      %4494 = vmatprep.subr.bf16.mxu0 0
      %4495 = vmatpush1.bf16.msra.mxu0 %v4408
      %4496 = vmatprep.subr.bf16.mxu0 0
      %4497 = vmatpush1.bf16.msra.mxu0 %v4409
      %4498 = vmatprep.subr.bf16.mxu0 0
      %4499 = vmatpush1.bf16.msra.mxu0 %v4410
      %4500 = vmatprep.subr.bf16.mxu0 0
      %4501 = vmatpush1.bf16.msra.mxu0 %v4411
      %4502 = vmatprep.subr.bf16.mxu0 0
      %4503 = vmatpush1.bf16.msra.mxu0 %v4412
      %4504 = vmatprep.subr.bf16.mxu0 0
      %4505 = vmatpush1.bf16.msra.mxu0 %v4413
      %4506 = vmatprep.subr.bf16.mxu0 0
      %4507 = vmatpush1.bf16.msra.mxu0 %v4414
      %4508 = vmatprep.subr.bf16.mxu0 0
      %4509 = vmatpush1.bf16.msra.mxu0 %v4415
      %4510 = vmatprep.subr.bf16.mxu0 0
      %4511 = vmatpush1.bf16.msra.mxu0 %v4416
      %4512 = vmatprep.subr.bf16.mxu0 0
      %4513 = vmatpush1.bf16.msra.mxu0 %v4417
      %4514 = vmatprep.mubr.bf16.mxu0 %v4151
      %4515 = vmatmul.mubr.bf16.gmra.mrb[0].mxu0 %v4150
      %v4516 = vpop.f32.mrb[0].mxu0
      %v4517 = vadd.f32 %v4240, %v4516
      %v4518 = vpop.f32.mrb[0].mxu0
      %v4519 = vpop.f32.mrb[0].mxu0
      %v4520 = vpop.f32.mrb[0].mxu0
      %4521 = vdwg.mxu0
      %4522 = vmatprep.subr.bf16.mxu0 0
      %4523 = vmatpush1.bf16.msra.mxu0 %v4418
      %4524 = vmatprep.subr.bf16.mxu0 0
      %4525 = vmatpush1.bf16.msra.mxu0 %v4419
      %4526 = vmatprep.subr.bf16.mxu0 0
      %4527 = vmatpush1.bf16.msra.mxu0 %v4420
      %4528 = vmatprep.subr.bf16.mxu0 0
      %4529 = vmatpush1.bf16.msra.mxu0 %v4421
      %4530 = vmatprep.subr.bf16.mxu0 0
      %4531 = vmatpush1.bf16.msra.mxu0 %v4422
      %4532 = vmatprep.subr.bf16.mxu0 0
      %4533 = vmatpush1.bf16.msra.mxu0 %v4423
      %4534 = vmatprep.subr.bf16.mxu0 0
      %4535 = vmatpush1.bf16.msra.mxu0 %v4424
      %4536 = vmatprep.subr.bf16.mxu0 0
      %4537 = vmatpush1.bf16.msra.mxu0 %v4425
      %4538 = vmatprep.subr.bf16.mxu0 0
      %4539 = vmatpush1.bf16.msra.mxu0 %v4426
      %4540 = vmatprep.subr.bf16.mxu0 0
      %4541 = vmatpush1.bf16.msra.mxu0 %v4427
      %4542 = vmatprep.subr.bf16.mxu0 0
      %4543 = vmatpush1.bf16.msra.mxu0 %v4428
      %4544 = vmatprep.subr.bf16.mxu0 0
      %4545 = vmatpush1.bf16.msra.mxu0 %v4429
      %4546 = vmatprep.subr.bf16.mxu0 0
      %4547 = vmatpush1.bf16.msra.mxu0 %v4430
      %4548 = vmatprep.subr.bf16.mxu0 0
      %4549 = vmatpush1.bf16.msra.mxu0 %v4431
      %4550 = vmatprep.subr.bf16.mxu0 0
      %4551 = vmatpush1.bf16.msra.mxu0 %v4432
      %4552 = vmatprep.subr.bf16.mxu0 0
      %4553 = vmatpush1.bf16.msra.mxu0 %v4433
      %4554 = vmatprep.mubr.bf16.mxu0 %v4153
      %4555 = vmatmul.mubr.bf16.gmra.mrb[0].mxu0 %v4152
      %v4556 = vpop.f32.mrb[0].mxu0
      %v4557 = vadd.f32 %v4517, %v4556
      %v4558 = vpop.f32.mrb[0].mxu0
      %v4559 = vpop.f32.mrb[0].mxu0
      %v4560 = vpop.f32.mrb[0].mxu0
      %4561 = vdwg.mxu0
      %4562 = vmatprep.subr.bf16.mxu0 0
      %4563 = vmatpush1.bf16.msra.mxu0 %v4434
      %4564 = vmatprep.subr.bf16.mxu0 0
      %4565 = vmatpush1.bf16.msra.mxu0 %v4435
      %4566 = vmatprep.subr.bf16.mxu0 0
      %4567 = vmatpush1.bf16.msra.mxu0 %v4436
      %4568 = vmatprep.subr.bf16.mxu0 0
      %4569 = vmatpush1.bf16.msra.mxu0 %v4437
      %4570 = vmatprep.subr.bf16.mxu0 0
      %4571 = vmatpush1.bf16.msra.mxu0 %v4438
      %4572 = vmatprep.subr.bf16.mxu0 0
      %4573 = vmatpush1.bf16.msra.mxu0 %v4439
      %4574 = vmatprep.subr.bf16.mxu0 0
      %4575 = vmatpush1.bf16.msra.mxu0 %v4440
      %4576 = vmatprep.subr.bf16.mxu0 0
      %4577 = vmatpush1.bf16.msra.mxu0 %v4441
      %4578 = vmatprep.subr.bf16.mxu0 0
      %4579 = vmatpush1.bf16.msra.mxu0 0
      %4580 = vmatprep.subr.bf16.mxu0 0
      %4581 = vmatpush1.bf16.msra.mxu0 0
      %4582 = vmatprep.subr.bf16.mxu0 0
      %4583 = vmatpush1.bf16.msra.mxu0 0
      %4584 = vmatprep.subr.bf16.mxu0 0
      %4585 = vmatpush1.bf16.msra.mxu0 0
      %4586 = vmatprep.subr.bf16.mxu0 0
      %4587 = vmatpush1.bf16.msra.mxu0 0
      %4588 = vmatprep.subr.bf16.mxu0 0
      %4589 = vmatpush1.bf16.msra.mxu0 0
      %4590 = vmatprep.subr.bf16.mxu0 0
      %4591 = vmatpush1.bf16.msra.mxu0 0
      %4592 = vmatprep.subr.bf16.mxu0 0
      %4593 = vmatpush1.bf16.msra.mxu0 0
      %4594 = vmatprep.mubr.bf16.mxu0 0
      %4595 = vmatmul.mubr.bf16.gmra.mrb[0].mxu0 %v4154
      %v4596 = vpop.f32.mrb[0].mxu0
      %v4597 = vadd.f32 %v4557, %v4596
      %v4598 = vpop.f32.mrb[0].mxu0
      %v4599 = vpop.f32.mrb[0].mxu0
      %v4600 = vpop.f32.mrb[0].mxu0
      %4601 = vdwg.mxu0
      %v4602 = vmax.f32 %v4597, 0.0
      %v4603 = vpack.c.bf16 %v4602, %v4602
      %v4604 = vld [vmem:[%s11] sm:$0xf]
      %v4605 = vld [vmem:[%s11 + $0x4] sm:$0xf]
      %v4606 = vld [vmem:[%s11 + $0x8] sm:$0xf]
      %v4607 = vld [vmem:[%s11 + $0xc] sm:$0xf]
      %v4608 = vld [vmem:[%s11 + $0x10] sm:$0xf]
      %v4609 = vld [vmem:[%s11 + $0x14] sm:$0xf]
      %v4610 = vld [vmem:[%s11 + $0x18] sm:$0xf]
      %v4611 = vld [vmem:[%s11 + $0x1c] sm:$0xf]
      %v4612 = vld [vmem:[%s11 + $0x20] sm:$0xf]
      %v4613 = vld [vmem:[%s11 + $0x24] sm:$0xf]
      %v4614 = vld [vmem:[%s11 + $0x28] sm:$0xf]
      %v4615 = vld [vmem:[%s11 + $0x2c] sm:$0xf]
      %v4616 = vld [vmem:[%s11 + $0x30] sm:$0xf]
      %v4617 = vld [vmem:[%s11 + $0x34] sm:$0xf]
      %v4618 = vld [vmem:[%s11 + $0x38] sm:$0xf]
      %v4619 = vld [vmem:[%s11 + $0x3c] sm:$0xf]
      %v4620 = vld [vmem:[%s12] sm:$0x1]
      %v4622 = vlaneseq
      %v4623 = vshrl.u32 %v4622, 7
      %v4624 = vsub.s32 0, %v4623
      %v4625 = vrot.slane %v4620, %v4624
      %v4643 = vunpack.c.l.b16 %v4604
      %v4644 = vunpack.c.l.b16 %v4605
      %v4645 = vunpack.c.l.b16 %v4606
      %v4646 = vunpack.c.l.b16 %v4607
      %v4647 = vunpack.c.l.b16 %v4608
      %v4648 = vunpack.c.l.b16 %v4609
      %v4649 = vunpack.c.l.b16 %v4610
      %v4650 = vunpack.c.l.b16 %v4611
      %v4651 = vunpack.c.l.b16 %v4612
      %v4652 = vunpack.c.l.b16 %v4613
      %v4653 = vunpack.c.l.b16 %v4614
      %v4654 = vunpack.c.l.b16 %v4615
      %v4655 = vunpack.c.l.b16 %v4616
      %v4656 = vunpack.c.l.b16 %v4617
      %v4657 = vunpack.c.l.b16 %v4618
      %v4658 = vunpack.c.l.b16 %v4619
      %v4659 = vpack.c.b16 %v4644, %v4643
      %v4660 = vpack.c.b16 %v4646, %v4645
      %v4661 = vpack.c.b16 %v4648, %v4647
      %v4662 = vpack.c.b16 %v4650, %v4649
      %v4663 = vpack.c.b16 %v4652, %v4651
      %v4664 = vpack.c.b16 %v4654, %v4653
      %v4665 = vpack.c.b16 %v4656, %v4655
      %v4666 = vpack.c.b16 %v4658, %v4657
      %4675 = vmatprep.subr.bf16.mxu0 0
      %4676 = vmatpush1.bf16.msra.mxu0 %v4659
      %4677 = vmatprep.subr.bf16.mxu0 0
      %4678 = vmatpush1.bf16.msra.mxu0 %v4660
      %4679 = vmatprep.subr.bf16.mxu0 0
      %4680 = vmatpush1.bf16.msra.mxu0 %v4661
      %4681 = vmatprep.subr.bf16.mxu0 0
      %4682 = vmatpush1.bf16.msra.mxu0 %v4662
      %4683 = vmatprep.subr.bf16.mxu0 0
      %4684 = vmatpush1.bf16.msra.mxu0 %v4663
      %4685 = vmatprep.subr.bf16.mxu0 0
      %4686 = vmatpush1.bf16.msra.mxu0 %v4664
      %4687 = vmatprep.subr.bf16.mxu0 0
      %4688 = vmatpush1.bf16.msra.mxu0 %v4665
      %4689 = vmatprep.subr.bf16.mxu0 0
      %4690 = vmatpush1.bf16.msra.mxu0 %v4666
      %4691 = vmatprep.subr.bf16.mxu0 0
      %4692 = vmatpush1.bf16.msra.mxu0 0
      %4693 = vmatprep.subr.bf16.mxu0 0
      %4694 = vmatpush1.bf16.msra.mxu0 0
      %4695 = vmatprep.subr.bf16.mxu0 0
      %4696 = vmatpush1.bf16.msra.mxu0 0
      %4697 = vmatprep.subr.bf16.mxu0 0
      %4698 = vmatpush1.bf16.msra.mxu0 0
      %4699 = vmatprep.subr.bf16.mxu0 0
      %4700 = vmatpush1.bf16.msra.mxu0 0
      %4701 = vmatprep.subr.bf16.mxu0 0
      %4702 = vmatpush1.bf16.msra.mxu0 0
      %4703 = vmatprep.subr.bf16.mxu0 0
      %4704 = vmatpush1.bf16.msra.mxu0 0
      %4705 = vmatprep.subr.bf16.mxu0 0
      %4706 = vmatpush1.bf16.msra.mxu0 0
      %4707 = vmatprep.mubr.bf16.mxu0 0
      %4708 = vmatmul.mubr.bf16.gmra.mrb[0].mxu0 %v4603
      %v4709 = vpop.f32.mrb[0].mxu0
      %v4710 = vadd.f32 %v4625, %v4709
      %v4711 = vpop.f32.mrb[0].mxu0
      %v4712 = vpop.f32.mrb[0].mxu0
      %v4713 = vpop.f32.mrb[0].mxu0
      %4714 = vdwg.mxu0
      %v4715 = vmax.f32 %v4710, 0.0
      %v4716 = vpack.c.bf16 %v4715, %v4715
      %v4717 = vld [vmem:[%s13] sm:$0xf]
      %v4718 = vld [vmem:[%s13 + $0x4] sm:$0xf]
      %v4719 = vld [vmem:[%s13 + $0x8] sm:$0xf]
      %v4720 = vld [vmem:[%s13 + $0xc] sm:$0xf]
      %v4721 = vld [vmem:[%s13 + $0x10] sm:$0xf]
      %v4722 = vld [vmem:[%s13 + $0x14] sm:$0xf]
      %v4723 = vld [vmem:[%s13 + $0x18] sm:$0xf]
      %v4724 = vld [vmem:[%s13 + $0x1c] sm:$0xf]
      %v4725 = vld [vmem:[%s13 + $0x20] sm:$0xf]
      %v4726 = vld [vmem:[%s13 + $0x24] sm:$0xf]
      %v4727 = vld [vmem:[%s13 + $0x28] sm:$0xf]
      %v4728 = vld [vmem:[%s13 + $0x2c] sm:$0xf]
      %v4729 = vld [vmem:[%s13 + $0x30] sm:$0xf]
      %v4730 = vld [vmem:[%s13 + $0x34] sm:$0xf]
      %v4731 = vld [vmem:[%s13 + $0x38] sm:$0xf]
      %v4732 = vld [vmem:[%s13 + $0x3c] sm:$0xf]
      %v4733 = vld [vmem:[%s14] sm:$0x1]
      %v4735 = vlaneseq
      %v4736 = vshrl.u32 %v4735, 7
      %v4737 = vsub.s32 0, %v4736
      %v4738 = vrot.slane %v4733, %v4737
      %v4756 = vunpack.c.l.b16 %v4717
      %v4757 = vunpack.c.l.b16 %v4718
      %v4758 = vunpack.c.l.b16 %v4719
      %v4759 = vunpack.c.l.b16 %v4720
      %v4760 = vunpack.c.l.b16 %v4721
      %v4761 = vunpack.c.l.b16 %v4722
      %v4762 = vunpack.c.l.b16 %v4723
      %v4763 = vunpack.c.l.b16 %v4724
      %v4764 = vunpack.c.l.b16 %v4725
      %v4765 = vunpack.c.l.b16 %v4726
      %v4766 = vunpack.c.l.b16 %v4727
      %v4767 = vunpack.c.l.b16 %v4728
      %v4768 = vunpack.c.l.b16 %v4729
      %v4769 = vunpack.c.l.b16 %v4730
      %v4770 = vunpack.c.l.b16 %v4731
      %v4771 = vunpack.c.l.b16 %v4732
      %v4772 = vpack.c.b16 %v4757, %v4756
      %v4773 = vpack.c.b16 %v4759, %v4758
      %v4774 = vpack.c.b16 %v4761, %v4760
      %v4775 = vpack.c.b16 %v4763, %v4762
      %v4776 = vpack.c.b16 %v4765, %v4764
      %v4777 = vpack.c.b16 %v4767, %v4766
      %v4778 = vpack.c.b16 %v4769, %v4768
      %v4779 = vpack.c.b16 %v4771, %v4770
      %4788 = vmatprep.subr.bf16.mxu0 0
      %4789 = vmatpush1.bf16.msra.mxu0 %v4772
      %4790 = vmatprep.subr.bf16.mxu0 0
      %4791 = vmatpush1.bf16.msra.mxu0 %v4773
      %4792 = vmatprep.subr.bf16.mxu0 0
      %4793 = vmatpush1.bf16.msra.mxu0 %v4774
      %4794 = vmatprep.subr.bf16.mxu0 0
      %4795 = vmatpush1.bf16.msra.mxu0 %v4775
      %4796 = vmatprep.subr.bf16.mxu0 0
      %4797 = vmatpush1.bf16.msra.mxu0 %v4776
      %4798 = vmatprep.subr.bf16.mxu0 0
      %4799 = vmatpush1.bf16.msra.mxu0 %v4777
      %4800 = vmatprep.subr.bf16.mxu0 0
      %4801 = vmatpush1.bf16.msra.mxu0 %v4778
      %4802 = vmatprep.subr.bf16.mxu0 0
      %4803 = vmatpush1.bf16.msra.mxu0 %v4779
      %4804 = vmatprep.subr.bf16.mxu0 0
      %4805 = vmatpush1.bf16.msra.mxu0 0
      %4806 = vmatprep.subr.bf16.mxu0 0
      %4807 = vmatpush1.bf16.msra.mxu0 0
      %4808 = vmatprep.subr.bf16.mxu0 0
      %4809 = vmatpush1.bf16.msra.mxu0 0
      %4810 = vmatprep.subr.bf16.mxu0 0
      %4811 = vmatpush1.bf16.msra.mxu0 0
      %4812 = vmatprep.subr.bf16.mxu0 0
      %4813 = vmatpush1.bf16.msra.mxu0 0
      %4814 = vmatprep.subr.bf16.mxu0 0
      %4815 = vmatpush1.bf16.msra.mxu0 0
      %4816 = vmatprep.subr.bf16.mxu0 0
      %4817 = vmatpush1.bf16.msra.mxu0 0
      %4818 = vmatprep.subr.bf16.mxu0 0
      %4819 = vmatpush1.bf16.msra.mxu0 0
      %4820 = vmatprep.mubr.bf16.mxu0 0
      %4821 = vmatmul.mubr.bf16.gmra.mrb[0].mxu0 %v4716
      %v4822 = vpop.f32.mrb[0].mxu0
      %v4823 = vadd.f32 %v4738, %v4822
      %v4824 = vpop.f32.mrb[0].mxu0
      %v4825 = vpop.f32.mrb[0].mxu0
      %v4826 = vpop.f32.mrb[0].mxu0
      %4827 = vdwg.mxu0
      %4828 = vst [vmem:[%s494] sm:$0xff] %v4823
      %p4829 = scmp.lt.s32.totalorder %s26, 1
      %s4830 = scalar_select %p4829, %s26, 1
      %s4831 = smul.addr %s4830, 8
      %s4832 = scalar_lea.vmem %s15, %s4831
      // Predicated region
      $region81: #{net_forward.1} parent=79 // pred_check
        %p4833 = pneg %p364
      $region82: #{net_forward.1} parent=79 // pred_check_branch
        %4835 = sbr.rel (%p4833) target = $region84
      $region83: #{net_forward.1} parent=79 // pred_region
        _
      $region84: #{net_forward.1} parent=79 // pred_fallthru
        _
    $region80: #{net_forward.1} parent=5 // pred_fallthru
      _
    %p4836 = scmp.le.s32.totalorder 2, %s21
    // Predicated region
    $region85: #{net_forward.1} parent=5 // pred_check
      %p4837 = pneg %p4836
    $region86: #{net_forward.1} parent=5 // pred_check_branch
      %4839 = sbr.rel (%p4837) target = $region88
    $region87: #{net_forward.1} parent=5 // pred_region
      %s4840 = ssub.s32 %s21, 2
      // Predicated region
      $region89: #{net_forward.1} parent=87 // pred_check
        %p4841 = pneg %p370
      $region90: #{net_forward.1} parent=87 // pred_check_branch
        %4843 = sbr.rel (%p4841) target = $region92
      $region91: #{net_forward.1} parent=87 // pred_region
        %p4844 = scmp.lt.s32.totalorder %s27, 1
        %s4845 = scalar_select %p4844, %s27, 1
        %s4846 = smul.addr %s4845, 8
        %s4847 = scalar_lea.vmem %s15, %s4846
      $region92: #{net_forward.1} parent=87 // pred_fallthru
        _
    $region88: #{net_forward.1} parent=5 // pred_fallthru
      _
  $region6: #{net_forward.1} parent=0 // loop_footer
    %s25 = sadd.s32 1, %s21
  $region7: #{net_forward.1} parent=0 // loop_footer_branch
    %20 = sbr.rel target = $region3
  $region8: #{net_forward.1} parent=0 // loop_exit
    _

</llo_original>
